<compile_context>
chip_gen: v7x
topology: tpu7x:2x2x1
jax: 0.10.0
libtpu: 0.0.40
codegen_flags: <defaults>
</compile_context>

<pallas_src>
import functools

import jax
import jax.numpy as jnp
from jax.experimental import pallas as pl
from jax.experimental.pallas import tpu as pltpu


# ---------------------------------------------------------------------------
# Relative position index (pure JAX glue; mirrors torch get_slide_indices)
# ---------------------------------------------------------------------------
def get_slide_indices(window_size):
    coords_h = jnp.arange(window_size[0])
    coords_w = jnp.arange(window_size[1])
    coords = jnp.stack(jnp.meshgrid(coords_h, coords_w, indexing="ij"))  # (2, Wh, Ww)
    coords = coords.reshape(2, -1)                                       # (2, S)
    rel = coords[:, :, None] - coords[:, None, :]                        # (2, S, S)
    rel = rel.transpose(1, 2, 0)                                         # (S, S, 2)
    rel = rel.at[:, :, 0].add(window_size[0] - 1)
    rel = rel.at[:, :, 1].add(window_size[1] - 1)
    rel = rel.at[:, :, 0].multiply(2 * window_size[1] - 1)
    return rel.sum(-1)                                                   # (S, S)


# ---------------------------------------------------------------------------
# One-time parameter preparation (NOT per forward call)
# ---------------------------------------------------------------------------
def prepare_window_attention_params(params, window_size, num_heads,
                                    matmul_dtype=jnp.bfloat16, qk_scale=None):
    """Fold the attention scale into the Q projection, pre-gather the relative
    position bias (kept f32 — it is tiny), cast matmul weights to
    `matmul_dtype`."""
    w_qkv = jnp.asarray(params["w_qkv"], jnp.float32)        # (E, 3E)
    b_qkv = jnp.asarray(params["b_qkv"], jnp.float32).reshape(1, -1)
    w_proj = jnp.asarray(params["w_proj"], jnp.float32)      # (E, E)
    b_proj = jnp.asarray(params["b_proj"], jnp.float32).reshape(1, -1)

    E = w_proj.shape[0]
    D = E // num_heads
    scale = qk_scale or D ** (-0.5)

    # Fold scale into the Q slice (columns [0:E] hold Q for all heads).
    w_qkv = w_qkv.at[:, :E].multiply(scale)
    b_qkv = b_qkv.at[:, :E].multiply(scale)

    # Gather relative position bias once -> (H, S, S), f32.
    S = window_size[0] * window_size[1]
    rel_idx = get_slide_indices(window_size).reshape(-1)
    bias = jnp.asarray(params["rel_pos_table"], jnp.float32)[rel_idx]
    bias = bias.reshape(S, S, num_heads)
    bias = jnp.transpose(bias, (2, 0, 1))

    return {
        "w_qkv": w_qkv.astype(matmul_dtype),
        "b_qkv": b_qkv,                              # f32 (post-accumulation add)
        "w_proj": w_proj.astype(matmul_dtype),
        "b_proj": b_proj,                            # f32
        "bias": bias,                                # f32 (tiny; no per-step unpack)
    }


# ---------------------------------------------------------------------------
# Generation-aware VMEM budget / limit / target rows
# ---------------------------------------------------------------------------
def _vmem_config():
    phys = 64 * 1024 * 1024
    try:
        phys = int(getattr(pltpu.get_tpu_info(), "vmem_capacity_bytes", phys))
    except Exception:
        pass
    if phys >= 100 * 1024 * 1024:
        # v5e / v6e: 128 MiB physical VMEM -> big blocks amortize step overhead
        return 64 * 1024 * 1024, 96 * 1024 * 1024, 1024
    # v7x: 64 MiB physical -> leave internal-scratch headroom
    return 24 * 1024 * 1024, 44 * 1024 * 1024, 512


# ---------------------------------------------------------------------------
# Block-batch selection (windows per grid step) under a VMEM budget
# ---------------------------------------------------------------------------
def _choose_block_batch(B, S, E, H, mm_itemsize, vmem_budget, target_rows):
    """Pick TB (windows per grid step).  Prefers a grid length >= 2 so v7x's
    second TensorCore gets work; counts all concurrently-live VMEM buffers."""
    const_bytes = (4 * E * E) * mm_itemsize + 4 * E * 4 + H * S * S * 4

    def fits(tb):
        rows = tb * S
        step = (2 * rows * E * mm_itemsize      # x block (double-buffered)
                + 2 * rows * E * 4              # out block (double-buffered, f32)
                + rows * 3 * E * 4              # qkv accumulator (f32)
                + 3 * rows * E * mm_itemsize    # q/k/v working copies
                + rows * E * 4                  # ctx scratch slab (f32)
                + 4 * tb * S * S * 4)           # per-head scores/exp/probs temps
        return const_bytes + step <= vmem_budget

    row_align = 8 if mm_itemsize >= 4 else 16   # (8,128) block legality (bf16 packs x2)
    divisors = [d for d in range(1, B + 1) if B % d == 0]
    legal = [d for d in divisors if (d * S) % row_align == 0 or d == B]
    ok = [d for d in legal if d * S <= max(target_rows, S) and fits(d)]
    if not ok:
        return legal[0] if legal else B
    multi = [d for d in ok if B // d >= 2]      # keep both v7x TensorCores busy
    return max(multi) if multi else max(ok)


# ---------------------------------------------------------------------------
# Pallas kernel: window attention for TB windows per grid step
# ---------------------------------------------------------------------------
def window_attn_kernel(x_ref, wqkv_ref, bqkv_ref, bias_ref, wproj_ref, bproj_ref,
                       o_ref, ctx_ref, *, block_b, seq, num_heads, head_dim,
                       approx_recip=True):
    TB, S, H, D = block_b, seq, num_heads, head_dim
    E = H * D
    mm = wqkv_ref.dtype                         # MXU operand dtype (bf16 or f32)

    # --- QKV projection: one MXU matmul over the whole (TB*S, E) slab.
    x = x_ref[...]                                              # (TB*S, E), mm dtype
    qkv = jnp.dot(x, wqkv_ref[...], preferred_element_type=jnp.float32)
    qkv = qkv + bqkv_ref[...]                                   # (TB*S, 3E), f32

    bias = bias_ref[...]                                        # (H, S, S), f32

    # --- Split Q/K/V once; (TB*S -> TB, S) leading split is sublane-clean for
    #     S % 8 == 0.  TODO(synk): pad S to a multiple of 8 (mask padded keys
    #     with -inf) upstream for 7x7 windows (S=49).
    q_all = qkv[:, 0 * E:1 * E].reshape(TB, S, E).astype(mm)    # scale folded into Wq
    k_all = qkv[:, 1 * E:2 * E].reshape(TB, S, E).astype(mm)
    v_all = qkv[:, 2 * E:3 * E].reshape(TB, S, E).astype(mm)

    # --- Attention core: fully batched over the TB windows (single-batch-dim
    #     dot_general), unrolled over heads (H is a small, fixed constant).
    #     Each head's context goes straight into the (TB*S, E) scratch slab.
    for h in range(H):
        qh = q_all[:, :, h * D:(h + 1) * D]                     # (TB, S, D)
        kh = k_all[:, :, h * D:(h + 1) * D]
        vh = v_all[:, :, h * D:(h + 1) * D]

        s = jnp.einsum("bqd,bkd->bqk", qh, kh,
                       preferred_element_type=jnp.float32)      # (TB, S, S), f32
        s = s + bias[h][None]
        # TODO(synk): shifted-window attention `mask` add path (mask=None only).

        # Softmax stays f32 (v5e has no bf16 VPU/EUP).
        p = jnp.exp(s - jnp.max(s, axis=-1, keepdims=True))
        denom = jnp.sum(p, axis=-1, keepdims=True)
        if approx_recip:
            p = p * pl.reciprocal(denom, approx=True)           # EUP slot
        else:
            p = p / denom

        ctx_h = jnp.einsum("bqk,bkd->bqd", p.astype(mm), vh,
                           preferred_element_type=jnp.float32)  # (TB, S, D), f32
        ctx_ref[:, h * D:(h + 1) * D] = ctx_h.reshape(TB * S, D)

    # --- Output projection over the assembled (TB*S, E) slab.
    out = jnp.dot(ctx_ref[...].astype(mm), wproj_ref[...],
                  preferred_element_type=jnp.float32)
    out = out + bproj_ref[...]
    o_ref[...] = out.astype(o_ref.dtype)


# ---------------------------------------------------------------------------
# Wrapper
# ---------------------------------------------------------------------------
def window_attention(x, params, num_heads, mask=None, approx_recip=True):
    """params must come from prepare_window_attention_params()."""
    if mask is not None:
        # TODO(synk): shifted-window attention mask path not implemented.
        raise NotImplementedError("mask path not implemented")

    B, S, E = x.shape
    H = num_heads
    D = E // H
    mm = params["w_qkv"].dtype
    mm_itemsize = jnp.dtype(mm).itemsize

    vmem_budget, vmem_limit, target_rows = _vmem_config()
    TB = _choose_block_batch(B, S, E, H, mm_itemsize, vmem_budget, target_rows)
    rows = TB * S

    # Matmul-shaped 2-D slab: no lane-crossing reshapes inside the kernel.
    # bf16 path: cast here (halves x HBM DMA; in a real model x is already bf16).
    x_in = x.reshape(B * S, E)
    if x_in.dtype != mm:
        x_in = x_in.astype(mm)
    out_dtype = x.dtype

    kernel = functools.partial(window_attn_kernel, block_b=TB, seq=S,
                               num_heads=H, head_dim=D, approx_recip=approx_recip)

    single = pl.Buffered(1)   # grid-invariant operands: no double-buffering
    in_specs = [
        pl.BlockSpec((rows, E), lambda b: (b, 0)),                             # x
        pl.BlockSpec((E, 3 * E), lambda b: (0, 0), pipeline_mode=single),      # w_qkv
        pl.BlockSpec((1, 3 * E), lambda b: (0, 0), pipeline_mode=single),      # b_qkv
        pl.BlockSpec((H, S, S), lambda b: (0, 0, 0), pipeline_mode=single),    # bias
        pl.BlockSpec((E, E), lambda b: (0, 0), pipeline_mode=single),          # w_proj
        pl.BlockSpec((1, E), lambda b: (0, 0), pipeline_mode=single),          # b_proj
    ]
    out_spec = pl.BlockSpec((rows, E), lambda b: (b, 0))

    # Advisory cost estimate for the XLA scheduler.
    flops = int(2 * B * S * E * (3 * E) + 2 * B * S * E * E + 4 * B * H * S * S * D)
    transcendentals = int(B * H * S * S)
    bytes_accessed = int(x_in.size * mm_itemsize
                         + B * S * E * jnp.dtype(out_dtype).itemsize
                         + params["w_qkv"].size * mm_itemsize
                         + params["w_proj"].size * mm_itemsize
                         + params["b_qkv"].size * 4 + params["b_proj"].size * 4
                         + params["bias"].size * 4)
    cost = pl.CostEstimate(flops=flops, transcendentals=transcendentals,
                           bytes_accessed=bytes_accessed)

    out = pl.pallas_call(
        kernel,
        out_shape=jax.ShapeDtypeStruct((B * S, E), out_dtype),
        grid_spec=pltpu.PrefetchScalarGridSpec(
            num_scalar_prefetch=0,
            grid=(B // TB,),
            in_specs=in_specs,
            out_specs=out_spec,
            scratch_shapes=[pltpu.VMEM((rows, E), jnp.float32)],   # ctx slab
        ),
        compiler_params=pltpu.CompilerParams(
            dimension_semantics=("parallel",),       # shard window-blocks across TCs
            vmem_limit_bytes=vmem_limit,             # generation-aware
        ),
        cost_estimate=cost,
    )(x_in, params["w_qkv"], params["b_qkv"], params["bias"],
      params["w_proj"], params["b_proj"])

    return out.reshape(B, S, E)


# ---------------------------------------------------------------------------
# Pure-JAX reference (mirrors the torch module) for correctness checking
# ---------------------------------------------------------------------------
def window_attention_ref(x, params, window_size, num_heads):
    B, S, E = x.shape
    H = num_heads
    D = E // H
    scale = D ** (-0.5)

    qkv = x @ params["w_qkv"] + params["b_qkv"]                        # (B, S, 3E)
    qkv = qkv.reshape(B, S, 3, H, D).transpose(2, 0, 3, 1, 4)          # (3, B, H, S, D)
    q, k, v = qkv[0] * scale, qkv[1], qkv[2]

    attn = jnp.einsum("bhqd,bhkd->bhqk", q, k)                         # (B, H, S, S)
    rel_idx = get_slide_indices(window_size).reshape(-1)
    bias = params["rel_pos_table"][rel_idx].reshape(S, S, H).transpose(2, 0, 1)
    attn = jax.nn.softmax(attn + bias[None], axis=-1)

    out = jnp.einsum("bhqk,bhkd->bhqd", attn, v)                       # (B, H, S, D)
    out = out.transpose(0, 2, 1, 3).reshape(B, S, E)
    return out @ params["w_proj"] + params["b_proj"]


# ---------------------------------------------------------------------------
if __name__ == "__main__":
    embed_dim = 32
    num_heads = 4
    window_size = (4, 4)
    S = window_size[0] * window_size[1]
    B = 8  # num_windows * batch

    key = jax.random.PRNGKey(0)
    k_x, k_w1, k_b1, k_w2, k_b2, k_t = jax.random.split(key, 6)

    x = jax.random.normal(k_x, (B, S, embed_dim), dtype=jnp.float32)
    raw_params = {
        "w_qkv": jax.random.normal(k_w1, (embed_dim, 3 * embed_dim), jnp.float32) * 0.05,
        "b_qkv": jax.random.normal(k_b1, (1, 3 * embed_dim), jnp.float32) * 0.02,
        "w_proj": jax.random.normal(k_w2, (embed_dim, embed_dim), jnp.float32) * 0.05,
        "b_proj": jax.random.normal(k_b2, (1, embed_dim), jnp.float32) * 0.02,
        "rel_pos_table": jax.random.normal(
            k_t, ((2 * window_size[0] - 1) * (2 * window_size[1] - 1), num_heads),
            jnp.float32) * 0.02,
    }

    ref = window_attention_ref(x, raw_params, window_size, num_heads)

    # f32 MXU-operand path (tight check)
    p32 = prepare_window_attention_params(raw_params, window_size, num_heads,
                                          matmul_dtype=jnp.float32)
    out32 = jax.block_until_ready(window_attention(x, p32, num_heads))
    assert out32.shape == (B, S, embed_dim)
    assert jnp.allclose(out32, ref, atol=5e-3, rtol=5e-3), "f32 mismatch vs reference"

    # bf16 MXU-operand path (fast path on all generations; f32 accum, f32 softmax)
    p16 = prepare_window_attention_params(raw_params, window_size, num_heads,
                                          matmul_dtype=jnp.bfloat16)
    out16 = jax.block_until_ready(window_attention(x, p16, num_heads))
    assert jnp.allclose(out16, ref, atol=2.5e-2, rtol=2.5e-2), "bf16 mismatch vs reference"

    print("KERNEL_OK")
</pallas_src>

<mosaic_0001>
module attributes {stable_mosaic.version = 11 : i64} {
  func.func @window_attn_kernel(%arg0: i32, %arg1: memref<64x32xf32, #tpu.memory_space<vmem>>, %arg2: memref<32x96xf32, #tpu.memory_space<vmem>>, %arg3: memref<1x96xf32, #tpu.memory_space<vmem>>, %arg4: memref<4x16x16xf32, #tpu.memory_space<vmem>>, %arg5: memref<32x32xf32, #tpu.memory_space<vmem>>, %arg6: memref<1x32xf32, #tpu.memory_space<vmem>>, %arg7: memref<64x32xf32, #tpu.memory_space<vmem>>, %arg8: memref<64x32xf32, #tpu.memory_space<vmem>>) attributes {dimension_semantics = [#tpu.dimension_semantics<parallel>], iteration_bounds = array<i64: 2>, scalar_prefetch = 0 : i64, scratch_operands = 1 : i64, tpu.core_type = #tpu.core_type<tc>, window_params = [{transform_indices = @transform_0, window_bounds = array<i64: 64, 32>}, {pipeline_mode = #tpu.pipeline_mode<synchronous>, transform_indices = @transform_1, window_bounds = array<i64: 32, 96>}, {pipeline_mode = #tpu.pipeline_mode<synchronous>, transform_indices = @transform_2, window_bounds = array<i64: 1, 96>}, {pipeline_mode = #tpu.pipeline_mode<synchronous>, transform_indices = @transform_3, window_bounds = array<i64: 4, 16, 16>}, {pipeline_mode = #tpu.pipeline_mode<synchronous>, transform_indices = @transform_4, window_bounds = array<i64: 32, 32>}, {pipeline_mode = #tpu.pipeline_mode<synchronous>, transform_indices = @transform_5, window_bounds = array<i64: 1, 32>}, {transform_indices = @transform_6, window_bounds = array<i64: 64, 32>}]} {
    %c0 = arith.constant 0 : index
    %c0_0 = arith.constant 0 : index
    %0 = vector.load %arg1[%c0, %c0_0] : memref<64x32xf32, #tpu.memory_space<vmem>>, vector<64x32xf32>
    %c0_1 = arith.constant 0 : index
    %c0_2 = arith.constant 0 : index
    %1 = vector.load %arg2[%c0_1, %c0_2] : memref<32x96xf32, #tpu.memory_space<vmem>>, vector<32x96xf32>
    %cst = arith.constant dense<0.000000e+00> : vector<64x96xf32>
    %2 = tpu.matmul %0, %1, %cst {dimension_numbers = #tpu.dot_dimension_numbers<[1], [0], [0], [1], [0, 0, 1, 1], [], []>} : vector<64x32xf32>, vector<32x96xf32>, vector<64x96xf32> -> vector<64x96xf32>
    %c0_3 = arith.constant 0 : index
    %c0_4 = arith.constant 0 : index
    %3 = vector.load %arg3[%c0_3, %c0_4] : memref<1x96xf32, #tpu.memory_space<vmem>>, vector<1x96xf32>
    %4 = vector.broadcast %3 : vector<1x96xf32> to vector<64x96xf32>
    %5 = arith.addf %2, %4 : vector<64x96xf32>
    %c0_5 = arith.constant 0 : index
    %c0_6 = arith.constant 0 : index
    %c0_7 = arith.constant 0 : index
    %6 = vector.load %arg4[%c0_5, %c0_6, %c0_7] : memref<4x16x16xf32, #tpu.memory_space<vmem>>, vector<4x16x16xf32>
    %7 = vector.extract_strided_slice %5 {offsets = [0, 0], sizes = [64, 32], strides = [1, 1]} : vector<64x96xf32> to vector<64x32xf32>
    %8 = vector.shape_cast %7 : vector<64x32xf32> to vector<4x16x32xf32>
    %9 = vector.extract_strided_slice %5 {offsets = [0, 32], sizes = [64, 32], strides = [1, 1]} : vector<64x96xf32> to vector<64x32xf32>
    %10 = vector.shape_cast %9 : vector<64x32xf32> to vector<4x16x32xf32>
    %11 = vector.extract_strided_slice %5 {offsets = [0, 64], sizes = [64, 32], strides = [1, 1]} : vector<64x96xf32> to vector<64x32xf32>
    %12 = vector.shape_cast %11 : vector<64x32xf32> to vector<4x16x32xf32>
    %13 = vector.extract_strided_slice %8 {offsets = [0, 0, 0], sizes = [4, 16, 8], strides = [1, 1, 1]} : vector<4x16x32xf32> to vector<4x16x8xf32>
    %14 = vector.extract_strided_slice %10 {offsets = [0, 0, 0], sizes = [4, 16, 8], strides = [1, 1, 1]} : vector<4x16x32xf32> to vector<4x16x8xf32>
    %15 = vector.extract_strided_slice %12 {offsets = [0, 0, 0], sizes = [4, 16, 8], strides = [1, 1, 1]} : vector<4x16x32xf32> to vector<4x16x8xf32>
    "tpu.trace_start"() <{level = 10 : i32, message = "bqd,bkd->bqk"}> : () -> ()
    %cst_8 = arith.constant dense<0.000000e+00> : vector<4x16x16xf32>
    %16 = tpu.matmul %13, %14, %cst_8 {dimension_numbers = #tpu.dot_dimension_numbers<[2], [2], [1], [1], [0, 0, 0, 1, 1, 1], [0], [0]>} : vector<4x16x8xf32>, vector<4x16x8xf32>, vector<4x16x16xf32> -> vector<4x16x16xf32>
    "tpu.trace_stop"() : () -> ()
    %17 = vector.extract_strided_slice %6 {offsets = [0, 0, 0], sizes = [1, 16, 16], strides = [1, 1, 1]} : vector<4x16x16xf32> to vector<1x16x16xf32>
    %18 = vector.shape_cast %17 : vector<1x16x16xf32> to vector<16x16xf32>
    %19 = vector.shape_cast %18 : vector<16x16xf32> to vector<1x16x16xf32>
    %20 = vector.broadcast %19 : vector<1x16x16xf32> to vector<4x16x16xf32>
    %21 = arith.addf %16, %20 : vector<4x16x16xf32>
    %cst_9 = arith.constant dense<0xFF800000> : vector<4x16xf32>
    %22 = vector.multi_reduction <maximumf>, %21, %cst_9 [2] : vector<4x16x16xf32> to vector<4x16xf32>
    %23 = vector.shape_cast %22 : vector<4x16xf32> to vector<4x16x1xf32>
    %24 = vector.broadcast %23 : vector<4x16x1xf32> to vector<4x16x16xf32>
    %25 = arith.subf %21, %24 : vector<4x16x16xf32>
    %26 = math.exp %25 : vector<4x16x16xf32>
    %cst_10 = arith.constant dense<0.000000e+00> : vector<4x16xf32>
    %27 = vector.multi_reduction <add>, %26, %cst_10 [2] : vector<4x16x16xf32> to vector<4x16xf32>
    %28 = vector.shape_cast %27 : vector<4x16xf32> to vector<4x16x1xf32>
    %29 = tpu.reciprocal %28 {approx = true} : vector<4x16x1xf32> -> vector<4x16x1xf32>
    %30 = vector.broadcast %29 : vector<4x16x1xf32> to vector<4x16x16xf32>
    %31 = arith.mulf %26, %30 : vector<4x16x16xf32>
    "tpu.trace_start"() <{level = 10 : i32, message = "bqk,bkd->bqd"}> : () -> ()
    %cst_11 = arith.constant dense<0.000000e+00> : vector<4x16x8xf32>
    %32 = tpu.matmul %31, %15, %cst_11 {dimension_numbers = #tpu.dot_dimension_numbers<[2], [1], [1], [2], [0, 0, 0, 1, 1, 2], [0], [0]>} : vector<4x16x16xf32>, vector<4x16x8xf32>, vector<4x16x8xf32> -> vector<4x16x8xf32>
    "tpu.trace_stop"() : () -> ()
    %33 = vector.shape_cast %32 : vector<4x16x8xf32> to vector<64x8xf32>
    %c0_12 = arith.constant 0 : index
    %c0_13 = arith.constant 0 : index
    %34 = vector.load %arg8[%c0_12, %c0_13] : memref<64x32xf32, #tpu.memory_space<vmem>>, vector<64x8xf32>
    tpu.vector_store %arg8[%c0_12, %c0_13], %33 {strides = array<i32>} : memref<64x32xf32, #tpu.memory_space<vmem>>, vector<64x8xf32>,
    %35 = vector.extract_strided_slice %8 {offsets = [0, 0, 8], sizes = [4, 16, 8], strides = [1, 1, 1]} : vector<4x16x32xf32> to vector<4x16x8xf32>
    %36 = vector.extract_strided_slice %10 {offsets = [0, 0, 8], sizes = [4, 16, 8], strides = [1, 1, 1]} : vector<4x16x32xf32> to vector<4x16x8xf32>
    %37 = vector.extract_strided_slice %12 {offsets = [0, 0, 8], sizes = [4, 16, 8], strides = [1, 1, 1]} : vector<4x16x32xf32> to vector<4x16x8xf32>
    "tpu.trace_start"() <{level = 10 : i32, message = "bqd,bkd->bqk"}> : () -> ()
    %cst_14 = arith.constant dense<0.000000e+00> : vector<4x16x16xf32>
    %38 = tpu.matmul %35, %36, %cst_14 {dimension_numbers = #tpu.dot_dimension_numbers<[2], [2], [1], [1], [0, 0, 0, 1, 1, 1], [0], [0]>} : vector<4x16x8xf32>, vector<4x16x8xf32>, vector<4x16x16xf32> -> vector<4x16x16xf32>
    "tpu.trace_stop"() : () -> ()
    %39 = vector.extract_strided_slice %6 {offsets = [1, 0, 0], sizes = [1, 16, 16], strides = [1, 1, 1]} : vector<4x16x16xf32> to vector<1x16x16xf32>
    %40 = vector.shape_cast %39 : vector<1x16x16xf32> to vector<16x16xf32>
    %41 = vector.shape_cast %40 : vector<16x16xf32> to vector<1x16x16xf32>
    %42 = vector.broadcast %41 : vector<1x16x16xf32> to vector<4x16x16xf32>
    %43 = arith.addf %38, %42 : vector<4x16x16xf32>
    %cst_15 = arith.constant dense<0xFF800000> : vector<4x16xf32>
    %44 = vector.multi_reduction <maximumf>, %43, %cst_15 [2] : vector<4x16x16xf32> to vector<4x16xf32>
    %45 = vector.shape_cast %44 : vector<4x16xf32> to vector<4x16x1xf32>
    %46 = vector.broadcast %45 : vector<4x16x1xf32> to vector<4x16x16xf32>
    %47 = arith.subf %43, %46 : vector<4x16x16xf32>
    %48 = math.exp %47 : vector<4x16x16xf32>
    %cst_16 = arith.constant dense<0.000000e+00> : vector<4x16xf32>
    %49 = vector.multi_reduction <add>, %48, %cst_16 [2] : vector<4x16x16xf32> to vector<4x16xf32>
    %50 = vector.shape_cast %49 : vector<4x16xf32> to vector<4x16x1xf32>
    %51 = tpu.reciprocal %50 {approx = true} : vector<4x16x1xf32> -> vector<4x16x1xf32>
    %52 = vector.broadcast %51 : vector<4x16x1xf32> to vector<4x16x16xf32>
    %53 = arith.mulf %48, %52 : vector<4x16x16xf32>
    "tpu.trace_start"() <{level = 10 : i32, message = "bqk,bkd->bqd"}> : () -> ()
    %cst_17 = arith.constant dense<0.000000e+00> : vector<4x16x8xf32>
    %54 = tpu.matmul %53, %37, %cst_17 {dimension_numbers = #tpu.dot_dimension_numbers<[2], [1], [1], [2], [0, 0, 0, 1, 1, 2], [0], [0]>} : vector<4x16x16xf32>, vector<4x16x8xf32>, vector<4x16x8xf32> -> vector<4x16x8xf32>
    "tpu.trace_stop"() : () -> ()
    %55 = vector.shape_cast %54 : vector<4x16x8xf32> to vector<64x8xf32>
    %c0_18 = arith.constant 0 : index
    %c8 = arith.constant 8 : index
    %56 = vector.load %arg8[%c0_18, %c8] : memref<64x32xf32, #tpu.memory_space<vmem>>, vector<64x8xf32>
    tpu.vector_store %arg8[%c0_18, %c8], %55 {strides = array<i32>} : memref<64x32xf32, #tpu.memory_space<vmem>>, vector<64x8xf32>,
    %57 = vector.extract_strided_slice %8 {offsets = [0, 0, 16], sizes = [4, 16, 8], strides = [1, 1, 1]} : vector<4x16x32xf32> to vector<4x16x8xf32>
    %58 = vector.extract_strided_slice %10 {offsets = [0, 0, 16], sizes = [4, 16, 8], strides = [1, 1, 1]} : vector<4x16x32xf32> to vector<4x16x8xf32>
    %59 = vector.extract_strided_slice %12 {offsets = [0, 0, 16], sizes = [4, 16, 8], strides = [1, 1, 1]} : vector<4x16x32xf32> to vector<4x16x8xf32>
    "tpu.trace_start"() <{level = 10 : i32, message = "bqd,bkd->bqk"}> : () -> ()
    %cst_19 = arith.constant dense<0.000000e+00> : vector<4x16x16xf32>
    %60 = tpu.matmul %57, %58, %cst_19 {dimension_numbers = #tpu.dot_dimension_numbers<[2], [2], [1], [1], [0, 0, 0, 1, 1, 1], [0], [0]>} : vector<4x16x8xf32>, vector<4x16x8xf32>, vector<4x16x16xf32> -> vector<4x16x16xf32>
    "tpu.trace_stop"() : () -> ()
    %61 = vector.extract_strided_slice %6 {offsets = [2, 0, 0], sizes = [1, 16, 16], strides = [1, 1, 1]} : vector<4x16x16xf32> to vector<1x16x16xf32>
    %62 = vector.shape_cast %61 : vector<1x16x16xf32> to vector<16x16xf32>
    %63 = vector.shape_cast %62 : vector<16x16xf32> to vector<1x16x16xf32>
    %64 = vector.broadcast %63 : vector<1x16x16xf32> to vector<4x16x16xf32>
    %65 = arith.addf %60, %64 : vector<4x16x16xf32>
    %cst_20 = arith.constant dense<0xFF800000> : vector<4x16xf32>
    %66 = vector.multi_reduction <maximumf>, %65, %cst_20 [2] : vector<4x16x16xf32> to vector<4x16xf32>
    %67 = vector.shape_cast %66 : vector<4x16xf32> to vector<4x16x1xf32>
    %68 = vector.broadcast %67 : vector<4x16x1xf32> to vector<4x16x16xf32>
    %69 = arith.subf %65, %68 : vector<4x16x16xf32>
    %70 = math.exp %69 : vector<4x16x16xf32>
    %cst_21 = arith.constant dense<0.000000e+00> : vector<4x16xf32>
    %71 = vector.multi_reduction <add>, %70, %cst_21 [2] : vector<4x16x16xf32> to vector<4x16xf32>
    %72 = vector.shape_cast %71 : vector<4x16xf32> to vector<4x16x1xf32>
    %73 = tpu.reciprocal %72 {approx = true} : vector<4x16x1xf32> -> vector<4x16x1xf32>
    %74 = vector.broadcast %73 : vector<4x16x1xf32> to vector<4x16x16xf32>
    %75 = arith.mulf %70, %74 : vector<4x16x16xf32>
    "tpu.trace_start"() <{level = 10 : i32, message = "bqk,bkd->bqd"}> : () -> ()
    %cst_22 = arith.constant dense<0.000000e+00> : vector<4x16x8xf32>
    %76 = tpu.matmul %75, %59, %cst_22 {dimension_numbers = #tpu.dot_dimension_numbers<[2], [1], [1], [2], [0, 0, 0, 1, 1, 2], [0], [0]>} : vector<4x16x16xf32>, vector<4x16x8xf32>, vector<4x16x8xf32> -> vector<4x16x8xf32>
    "tpu.trace_stop"() : () -> ()
    %77 = vector.shape_cast %76 : vector<4x16x8xf32> to vector<64x8xf32>
    %c0_23 = arith.constant 0 : index
    %c16 = arith.constant 16 : index
    %78 = vector.load %arg8[%c0_23, %c16] : memref<64x32xf32, #tpu.memory_space<vmem>>, vector<64x8xf32>
    tpu.vector_store %arg8[%c0_23, %c16], %77 {strides = array<i32>} : memref<64x32xf32, #tpu.memory_space<vmem>>, vector<64x8xf32>,
    %79 = vector.extract_strided_slice %8 {offsets = [0, 0, 24], sizes = [4, 16, 8], strides = [1, 1, 1]} : vector<4x16x32xf32> to vector<4x16x8xf32>
    %80 = vector.extract_strided_slice %10 {offsets = [0, 0, 24], sizes = [4, 16, 8], strides = [1, 1, 1]} : vector<4x16x32xf32> to vector<4x16x8xf32>
    %81 = vector.extract_strided_slice %12 {offsets = [0, 0, 24], sizes = [4, 16, 8], strides = [1, 1, 1]} : vector<4x16x32xf32> to vector<4x16x8xf32>
    "tpu.trace_start"() <{level = 10 : i32, message = "bqd,bkd->bqk"}> : () -> ()
    %cst_24 = arith.constant dense<0.000000e+00> : vector<4x16x16xf32>
    %82 = tpu.matmul %79, %80, %cst_24 {dimension_numbers = #tpu.dot_dimension_numbers<[2], [2], [1], [1], [0, 0, 0, 1, 1, 1], [0], [0]>} : vector<4x16x8xf32>, vector<4x16x8xf32>, vector<4x16x16xf32> -> vector<4x16x16xf32>
    "tpu.trace_stop"() : () -> ()
    %83 = vector.extract_strided_slice %6 {offsets = [3, 0, 0], sizes = [1, 16, 16], strides = [1, 1, 1]} : vector<4x16x16xf32> to vector<1x16x16xf32>
    %84 = vector.shape_cast %83 : vector<1x16x16xf32> to vector<16x16xf32>
    %85 = vector.shape_cast %84 : vector<16x16xf32> to vector<1x16x16xf32>
    %86 = vector.broadcast %85 : vector<1x16x16xf32> to vector<4x16x16xf32>
    %87 = arith.addf %82, %86 : vector<4x16x16xf32>
    %cst_25 = arith.constant dense<0xFF800000> : vector<4x16xf32>
    %88 = vector.multi_reduction <maximumf>, %87, %cst_25 [2] : vector<4x16x16xf32> to vector<4x16xf32>
    %89 = vector.shape_cast %88 : vector<4x16xf32> to vector<4x16x1xf32>
    %90 = vector.broadcast %89 : vector<4x16x1xf32> to vector<4x16x16xf32>
    %91 = arith.subf %87, %90 : vector<4x16x16xf32>
    %92 = math.exp %91 : vector<4x16x16xf32>
    %cst_26 = arith.constant dense<0.000000e+00> : vector<4x16xf32>
    %93 = vector.multi_reduction <add>, %92, %cst_26 [2] : vector<4x16x16xf32> to vector<4x16xf32>
    %94 = vector.shape_cast %93 : vector<4x16xf32> to vector<4x16x1xf32>
    %95 = tpu.reciprocal %94 {approx = true} : vector<4x16x1xf32> -> vector<4x16x1xf32>
    %96 = vector.broadcast %95 : vector<4x16x1xf32> to vector<4x16x16xf32>
    %97 = arith.mulf %92, %96 : vector<4x16x16xf32>
    "tpu.trace_start"() <{level = 10 : i32, message = "bqk,bkd->bqd"}> : () -> ()
    %cst_27 = arith.constant dense<0.000000e+00> : vector<4x16x8xf32>
    %98 = tpu.matmul %97, %81, %cst_27 {dimension_numbers = #tpu.dot_dimension_numbers<[2], [1], [1], [2], [0, 0, 0, 1, 1, 2], [0], [0]>} : vector<4x16x16xf32>, vector<4x16x8xf32>, vector<4x16x8xf32> -> vector<4x16x8xf32>
    "tpu.trace_stop"() : () -> ()
    %99 = vector.shape_cast %98 : vector<4x16x8xf32> to vector<64x8xf32>
    %c0_28 = arith.constant 0 : index
    %c24 = arith.constant 24 : index
    %100 = vector.load %arg8[%c0_28, %c24] : memref<64x32xf32, #tpu.memory_space<vmem>>, vector<64x8xf32>
    tpu.vector_store %arg8[%c0_28, %c24], %99 {strides = array<i32>} : memref<64x32xf32, #tpu.memory_space<vmem>>, vector<64x8xf32>,
    %c0_29 = arith.constant 0 : index
    %c0_30 = arith.constant 0 : index
    %101 = vector.load %arg8[%c0_29, %c0_30] : memref<64x32xf32, #tpu.memory_space<vmem>>, vector<64x32xf32>
    %c0_31 = arith.constant 0 : index
    %c0_32 = arith.constant 0 : index
    %102 = vector.load %arg5[%c0_31, %c0_32] : memref<32x32xf32, #tpu.memory_space<vmem>>, vector<32x32xf32>
    %cst_33 = arith.constant dense<0.000000e+00> : vector<64x32xf32>
    %103 = tpu.matmul %101, %102, %cst_33 {dimension_numbers = #tpu.dot_dimension_numbers<[1], [0], [0], [1], [0, 0, 1, 1], [], []>} : vector<64x32xf32>, vector<32x32xf32>, vector<64x32xf32> -> vector<64x32xf32>
    %c0_34 = arith.constant 0 : index
    %c0_35 = arith.constant 0 : index
    %104 = vector.load %arg6[%c0_34, %c0_35] : memref<1x32xf32, #tpu.memory_space<vmem>>, vector<1x32xf32>
    %105 = vector.broadcast %104 : vector<1x32xf32> to vector<64x32xf32>
    %106 = arith.addf %103, %105 : vector<64x32xf32>
    %c0_36 = arith.constant 0 : index
    %c0_37 = arith.constant 0 : index
    %107 = vector.load %arg7[%c0_36, %c0_37] : memref<64x32xf32, #tpu.memory_space<vmem>>, vector<64x32xf32>
    tpu.vector_store %arg7[%c0_36, %c0_37], %106 {strides = array<i32>} : memref<64x32xf32, #tpu.memory_space<vmem>>, vector<64x32xf32>,
    return
  }
  func.func @transform_0(%arg0: i32) -> (i32, i32) {
    %c0_i32 = arith.constant 0 : i32
    %c0_i32_0 = arith.constant 0 : i32
    return %arg0, %c0_i32 : i32, i32
  }
  func.func @transform_1(%arg0: i32) -> (i32, i32) {
    %c0_i32 = arith.constant 0 : i32
    %c0_i32_0 = arith.constant 0 : i32
    %c0_i32_1 = arith.constant 0 : i32
    return %c0_i32, %c0_i32_0 : i32, i32
  }
  func.func @transform_2(%arg0: i32) -> (i32, i32) {
    %c0_i32 = arith.constant 0 : i32
    %c0_i32_0 = arith.constant 0 : i32
    %c0_i32_1 = arith.constant 0 : i32
    return %c0_i32, %c0_i32_0 : i32, i32
  }
  func.func @transform_3(%arg0: i32) -> (i32, i32, i32) {
    %c0_i32 = arith.constant 0 : i32
    %c0_i32_0 = arith.constant 0 : i32
    %c0_i32_1 = arith.constant 0 : i32
    %c0_i32_2 = arith.constant 0 : i32
    return %c0_i32, %c0_i32_0, %c0_i32_1 : i32, i32, i32
  }
  func.func @transform_4(%arg0: i32) -> (i32, i32) {
    %c0_i32 = arith.constant 0 : i32
    %c0_i32_0 = arith.constant 0 : i32
    %c0_i32_1 = arith.constant 0 : i32
    return %c0_i32, %c0_i32_0 : i32, i32
  }
  func.func @transform_5(%arg0: i32) -> (i32, i32) {
    %c0_i32 = arith.constant 0 : i32
    %c0_i32_0 = arith.constant 0 : i32
    %c0_i32_1 = arith.constant 0 : i32
    return %c0_i32, %c0_i32_0 : i32, i32
  }
  func.func @transform_6(%arg0: i32) -> (i32, i32) {
    %c0_i32 = arith.constant 0 : i32
    %c0_i32_0 = arith.constant 0 : i32
    return %arg0, %c0_i32 : i32, i32
  }
}

</mosaic_0001>

<llo_original>
// kernel: tpu_custom_call.1
$region0: #{tpu_custom_call.1}
  #allocation0 [shape = 'u32[]', space=smem, size = 0x4, offset = 0x4, fixed_abs, tag = 'smem constant byte address 0x4 - core index']
  #allocation1 [shape = 'u32[144,128]{1,0:T(1,128)}', space=vmem, size = 0x12000, scoped, tag = 'internal scratch']
  #allocation2 [shape = 'f32[64,32]{1,0:T(8,128)}', space=vmem, size = 0x8000, scoped, tag = 'scratch operand']
  %s0 = inlined_call_operand.vmem [shape: f32[128,32], index: 0, kind: input, shape index: {}]
  %s1 = inlined_call_operand.vmem [shape: f32[32,96], index: 1, kind: input, shape index: {}]
  %s2 = inlined_call_operand.vmem [shape: f32[1,96], index: 2, kind: input, shape index: {}]
  %s3 = inlined_call_operand.vmem [shape: f32[4,16,16], index: 3, kind: input, shape index: {}]
  %s4 = inlined_call_operand.vmem [shape: f32[32,32], index: 4, kind: input, shape index: {}]
  %s5 = inlined_call_operand.vmem [shape: f32[1,32], index: 5, kind: input, shape index: {}]
  %s6 = inlined_call_operand.vmem [shape: f32[128,32], index: 6, kind: output, shape index: {}]
  %s7 = sld [smem:[#allocation0]]
  $region57: #{tpu_custom_call.1} parent=0
    _
  %s9 = ssub.s32 1, %s7
  %s10 = scalar_select 0, %s9, %s7
  loop: start=0, step=1, limit=4
  $region2: #{tpu_custom_call.1} parent=0 // loop_pre_header
    _
  $region3: #{tpu_custom_call.1} parent=0 // loop_header
    %s12 = sphi 0, %s16
    %p13 = scmp.ge.s32.totalorder %s12, 4
    %s22 = sphi 0, %s24
    %s25 = sphi 0, %s22
    %s26 = sphi 0, %s25
    %s42 = sphi 0, %s26
    %s46 = sphi 0, %s46
    %s48 = sphi 0, %s46
    %s49 = sphi 0, %s48
    %s63 = sphi 0, %s49
    %s67 = sphi 0, %s67
    %s69 = sphi 0, %s67
    %s70 = sphi 0, %s69
    %s84 = sphi 0, %s70
    %s88 = sphi 0, %s88
    %s90 = sphi 0, %s88
    %s91 = sphi 0, %s90
    %s105 = sphi 0, %s91
    %s109 = sphi 0, %s109
    %s111 = sphi 0, %s109
    %s112 = sphi 0, %s111
    %s126 = sphi 0, %s112
    %s130 = sphi 0, %s130
    %s132 = sphi 0, %s130
    %s133 = sphi 0, %s132
    %s147 = sphi 0, %s133
    %s153 = sphi 0, %s155
    %s156 = sphi 0, %s153
    %s157 = sphi 0, %s156
    %s173 = sphi 0, %s157
  $region4: #{tpu_custom_call.1} parent=0 // loop_header_branch
    %15 = sbr.rel (%p13) target = $region8
  $region5: #{tpu_custom_call.1} parent=0 // loop_body
    %s17 = ssub.s32 %s12, 1
    %s18 = ssub.s32 %s12, 2
    %s19 = sadd.s32 %s12, 1
    %s20 = ssub.s32 %s12, %s19
    %p21 = scmp.eq.s32.totalorder %s20, 0
    %s23 = sadd.s32 %s22, 1
    %s24 = scalar_select %p21, %s22, %s23
    %p27 = pneg %p21
    %p28 = scmp.eq.s32.totalorder %s12, 1
    %p29 = por %p27, %p28
    %p30 = scmp.ne.s32.totalorder %s22, %s25
    %p31 = scmp.eq.s32.totalorder %s12, 0
    %p32 = por %p30, %p31
    %p33 = scmp.ne.s32.totalorder %s22, %s25
    %p34 = scmp.eq.s32.totalorder %s17, 1
    %p35 = por %p33, %p34
    %p36 = scmp.ne.s32.totalorder %s25, %s26
    %p37 = scmp.eq.s32.totalorder %s17, 0
    %p38 = por %p36, %p37
    %p39 = scmp.ne.s32.totalorder %s25, %s26
    %p40 = scmp.eq.s32.totalorder %s18, 1
    %p41 = por %p39, %p40
    %p43 = scmp.ne.s32.totalorder %s26, %s42
    %p44 = scmp.eq.s32.totalorder %s18, 0
    %p45 = por %p43, %p44
    %s47 = sadd.s32 %s46, 1
    %p50 = scmp.eq.s32.totalorder %s12, 1
    %p51 = scmp.ne.s32.totalorder %s46, %s48
    %p52 = scmp.eq.s32.totalorder %s12, 0
    %p53 = por %p51, %p52
    %p54 = scmp.ne.s32.totalorder %s46, %s48
    %p55 = scmp.eq.s32.totalorder %s17, 1
    %p56 = por %p54, %p55
    %p57 = scmp.ne.s32.totalorder %s48, %s49
    %p58 = scmp.eq.s32.totalorder %s17, 0
    %p59 = por %p57, %p58
    %p60 = scmp.ne.s32.totalorder %s48, %s49
    %p61 = scmp.eq.s32.totalorder %s18, 1
    %p62 = por %p60, %p61
    %p64 = scmp.ne.s32.totalorder %s49, %s63
    %p65 = scmp.eq.s32.totalorder %s18, 0
    %p66 = por %p64, %p65
    %s68 = sadd.s32 %s67, 1
    %p71 = scmp.eq.s32.totalorder %s12, 1
    %p72 = scmp.ne.s32.totalorder %s67, %s69
    %p73 = scmp.eq.s32.totalorder %s12, 0
    %p74 = por %p72, %p73
    %p75 = scmp.ne.s32.totalorder %s67, %s69
    %p76 = scmp.eq.s32.totalorder %s17, 1
    %p77 = por %p75, %p76
    %p78 = scmp.ne.s32.totalorder %s69, %s70
    %p79 = scmp.eq.s32.totalorder %s17, 0
    %p80 = por %p78, %p79
    %p81 = scmp.ne.s32.totalorder %s69, %s70
    %p82 = scmp.eq.s32.totalorder %s18, 1
    %p83 = por %p81, %p82
    %p85 = scmp.ne.s32.totalorder %s70, %s84
    %p86 = scmp.eq.s32.totalorder %s18, 0
    %p87 = por %p85, %p86
    %s89 = sadd.s32 %s88, 1
    %p92 = scmp.eq.s32.totalorder %s12, 1
    %p93 = scmp.ne.s32.totalorder %s88, %s90
    %p94 = scmp.eq.s32.totalorder %s12, 0
    %p95 = por %p93, %p94
    %p96 = scmp.ne.s32.totalorder %s88, %s90
    %p97 = scmp.eq.s32.totalorder %s17, 1
    %p98 = por %p96, %p97
    %p99 = scmp.ne.s32.totalorder %s90, %s91
    %p100 = scmp.eq.s32.totalorder %s17, 0
    %p101 = por %p99, %p100
    %p102 = scmp.ne.s32.totalorder %s90, %s91
    %p103 = scmp.eq.s32.totalorder %s18, 1
    %p104 = por %p102, %p103
    %p106 = scmp.ne.s32.totalorder %s91, %s105
    %p107 = scmp.eq.s32.totalorder %s18, 0
    %p108 = por %p106, %p107
    %s110 = sadd.s32 %s109, 1
    %p113 = scmp.eq.s32.totalorder %s12, 1
    %p114 = scmp.ne.s32.totalorder %s109, %s111
    %p115 = scmp.eq.s32.totalorder %s12, 0
    %p116 = por %p114, %p115
    %p117 = scmp.ne.s32.totalorder %s109, %s111
    %p118 = scmp.eq.s32.totalorder %s17, 1
    %p119 = por %p117, %p118
    %p120 = scmp.ne.s32.totalorder %s111, %s112
    %p121 = scmp.eq.s32.totalorder %s17, 0
    %p122 = por %p120, %p121
    %p123 = scmp.ne.s32.totalorder %s111, %s112
    %p124 = scmp.eq.s32.totalorder %s18, 1
    %p125 = por %p123, %p124
    %p127 = scmp.ne.s32.totalorder %s112, %s126
    %p128 = scmp.eq.s32.totalorder %s18, 0
    %p129 = por %p127, %p128
    %s131 = sadd.s32 %s130, 1
    %p134 = scmp.eq.s32.totalorder %s12, 1
    %p135 = scmp.ne.s32.totalorder %s130, %s132
    %p136 = scmp.eq.s32.totalorder %s12, 0
    %p137 = por %p135, %p136
    %p138 = scmp.ne.s32.totalorder %s130, %s132
    %p139 = scmp.eq.s32.totalorder %s17, 1
    %p140 = por %p138, %p139
    %p141 = scmp.ne.s32.totalorder %s132, %s133
    %p142 = scmp.eq.s32.totalorder %s17, 0
    %p143 = por %p141, %p142
    %p144 = scmp.ne.s32.totalorder %s132, %s133
    %p145 = scmp.eq.s32.totalorder %s18, 1
    %p146 = por %p144, %p145
    %p148 = scmp.ne.s32.totalorder %s133, %s147
    %p149 = scmp.eq.s32.totalorder %s18, 0
    %p150 = por %p148, %p149
    %s151 = ssub.s32 %s12, %s19
    %p152 = scmp.eq.s32.totalorder %s151, 0
    %s154 = sadd.s32 %s153, 1
    %s155 = scalar_select %p152, %s153, %s154
    %p158 = pneg %p152
    %p159 = scmp.eq.s32.totalorder %s12, 1
    %p160 = por %p158, %p159
    %p161 = scmp.ne.s32.totalorder %s153, %s156
    %p162 = scmp.eq.s32.totalorder %s12, 0
    %p163 = por %p161, %p162
    %p164 = scmp.ne.s32.totalorder %s153, %s156
    %p165 = scmp.eq.s32.totalorder %s17, 1
    %p166 = por %p164, %p165
    %p167 = scmp.ne.s32.totalorder %s156, %s157
    %p168 = scmp.eq.s32.totalorder %s17, 0
    %p169 = por %p167, %p168
    %p170 = scmp.ne.s32.totalorder %s156, %s157
    %p171 = scmp.eq.s32.totalorder %s18, 1
    %p172 = por %p170, %p171
    %p174 = scmp.ne.s32.totalorder %s157, %s173
    %p175 = scmp.eq.s32.totalorder %s18, 0
    %p176 = por %p174, %p175
    %p177 = scmp.le.s32.totalorder 1, %s12
    %p178 = scmp.lt.s32.totalorder %s12, 3
    %p179 = pnand %p177, %p178
    %p180 = pneg %p179
    // Predicated region
    $region9: #{tpu_custom_call.1} parent=5 // pred_check
      _
    $region10: #{tpu_custom_call.1} parent=5 // pred_check_branch
      %182 = sbr.rel (%p179) target = $region12
    $region11: #{tpu_custom_call.1} parent=5 // pred_region
      %s183 = ssub.s32 %s12, 1
      // Predicated region
      $region13: #{tpu_custom_call.1} parent=11 // pred_check
        %p184 = pneg %p59
      $region14: #{tpu_custom_call.1} parent=11 // pred_check_branch
        %186 = sbr.rel (%p184) target = $region16
      $region15: #{tpu_custom_call.1} parent=11 // pred_region
        _
      $region16: #{tpu_custom_call.1} parent=11 // pred_fallthru
        _
      // Predicated region
      $region17: #{tpu_custom_call.1} parent=11 // pred_check
        %p187 = pneg %p80
      $region18: #{tpu_custom_call.1} parent=11 // pred_check_branch
        %189 = sbr.rel (%p187) target = $region20
      $region19: #{tpu_custom_call.1} parent=11 // pred_region
        _
      $region20: #{tpu_custom_call.1} parent=11 // pred_fallthru
        _
      // Predicated region
      $region21: #{tpu_custom_call.1} parent=11 // pred_check
        %p190 = pneg %p101
      $region22: #{tpu_custom_call.1} parent=11 // pred_check_branch
        %192 = sbr.rel (%p190) target = $region24
      $region23: #{tpu_custom_call.1} parent=11 // pred_region
        _
      $region24: #{tpu_custom_call.1} parent=11 // pred_fallthru
        _
      // Predicated region
      $region25: #{tpu_custom_call.1} parent=11 // pred_check
        %p193 = pneg %p122
      $region26: #{tpu_custom_call.1} parent=11 // pred_check_branch
        %195 = sbr.rel (%p193) target = $region28
      $region27: #{tpu_custom_call.1} parent=11 // pred_region
        _
      $region28: #{tpu_custom_call.1} parent=11 // pred_fallthru
        _
      // Predicated region
      $region29: #{tpu_custom_call.1} parent=11 // pred_check
        %p196 = pneg %p143
      $region30: #{tpu_custom_call.1} parent=11 // pred_check_branch
        %198 = sbr.rel (%p196) target = $region32
      $region31: #{tpu_custom_call.1} parent=11 // pred_region
        _
      $region32: #{tpu_custom_call.1} parent=11 // pred_fallthru
        _
    $region12: #{tpu_custom_call.1} parent=5 // pred_fallthru
      _
    %p199 = scmp.lt.s32.totalorder %s12, 2
    // Predicated region
    $region33: #{tpu_custom_call.1} parent=5 // pred_check
      %p200 = pneg %p199
    $region34: #{tpu_custom_call.1} parent=5 // pred_check_branch
      %202 = sbr.rel (%p200) target = $region36
    $region35: #{tpu_custom_call.1} parent=5 // pred_region
      // Predicated region
      $region37: #{tpu_custom_call.1} parent=35 // pred_check
        %p203 = pneg %p32
      $region38: #{tpu_custom_call.1} parent=35 // pred_check_branch
        %205 = sbr.rel (%p203) target = $region40
      $region39: #{tpu_custom_call.1} parent=35 // pred_region
        %s206 = smul.u32 8, %s12
        %p207 = scmp.lt.s32.totalorder %s206, 15
        %s208 = scalar_select %p207, %s206, 15
        %s209 = smul.addr %s208, 8
        %s210 = scalar_lea.vmem %s0, %s209
        %s211 = smul.u32 8, %s12
      $region40: #{tpu_custom_call.1} parent=35 // pred_fallthru
        _
    $region36: #{tpu_custom_call.1} parent=5 // pred_fallthru
      _
    %p212 = scmp.le.s32.totalorder 1, %s12
    %p213 = scmp.lt.s32.totalorder %s12, 3
    %p214 = pnand %p212, %p213
    %p215 = pneg %p214
    // Predicated region
    $region41: #{tpu_custom_call.1} parent=5 // pred_check
      _
    $region42: #{tpu_custom_call.1} parent=5 // pred_check_branch
      %217 = sbr.rel (%p214) target = $region44
    $region43: #{tpu_custom_call.1} parent=5 // pred_region
      %s218 = ssub.s32 %s12, 1
      %s219 = smul.u32 8, %s17
      %p220 = scmp.lt.s32.totalorder %s219, 15
      %s221 = scalar_select %p220, %s219, 15
      %s222 = smul.addr %s221, 8
      %s223 = scalar_lea.vmem %s0, %s222
      %p224 = pneg %p38
      %p225 = pneg %p35
      %p226 = pneg %p59
      %p227 = pneg %p56
      %p228 = pneg %p80
      %p229 = pneg %p77
      %p230 = pneg %p101
      %p231 = pneg %p98
      %p232 = pneg %p122
      %p233 = pneg %p119
      %p234 = pneg %p143
      %p235 = pneg %p140
      %p236 = pneg %p169
      %p237 = pneg %p166
      %s238 = smul.u32 8, %s17
      %p239 = scmp.lt.s32.totalorder %s238, 15
      %s240 = scalar_select %p239, %s238, 15
      %s241 = smul.addr %s240, 8
      %s242 = scalar_lea.vmem %s6, %s241
      %s243 = smul.u32 8, %s17
      %p244 = scmp.lt.s32.totalorder %s243, 15
      %s245 = scalar_select %p244, %s243, 15
      %s246 = smul.addr %s245, 8
      %s247 = scalar_lea.vmem %s0, %s246
      %s248 = smul.u32 8, %s17
      %s249 = smul.u32 8, %s17
      %p250 = scmp.lt.s32.totalorder %s249, 15
      %s251 = scalar_select %p250, %s249, 15
      %s252 = smul.addr %s251, 8
      %s253 = scalar_lea.vmem %s6, %s252
      %s254 = smul.u32 8, %s17
      %v255 = vld [vmem:[%s247] sm:$0xff]
      %v256 = vld [vmem:[%s247 + $0x8] sm:$0xff]
      %v257 = vld [vmem:[%s247 + $0x10] sm:$0xff]
      %v258 = vld [vmem:[%s247 + $0x18] sm:$0xff]
      %v259 = vld [vmem:[%s247 + $0x20] sm:$0xff]
      %v260 = vld [vmem:[%s247 + $0x28] sm:$0xff]
      %v261 = vld [vmem:[%s247 + $0x30] sm:$0xff]
      %v262 = vld [vmem:[%s247 + $0x38] sm:$0xff]
      %v263 = vld [vmem:[%s1] sm:$0xff]
      %v264 = vld [vmem:[%s1 + $0x8] sm:$0xff]
      %v265 = vld [vmem:[%s1 + $0x10] sm:$0xff]
      %v266 = vld [vmem:[%s1 + $0x18] sm:$0xff]
      %v267 = vld [vmem:[%s2] sm:$0x1]
      %v269 = vlaneseq
      %v270 = vshrl.u32 %v269, 7
      %v271 = vsub.s32 0, %v270
      %v272 = vrot.slane %v267, %v271
      %vm274 = vcmask 261120
      %v276 = vsel %vm274, %v255, 0
      %v279 = vsel %vm274, %v256, 0
      %v282 = vsel %vm274, %v257, 0
      %v285 = vsel %vm274, %v258, 0
      %v288 = vsel %vm274, %v259, 0
      %v291 = vsel %vm274, %v260, 0
      %v294 = vsel %vm274, %v261, 0
      %v297 = vsel %vm274, %v262, 0
      %299 = vmatprep.subr.mxu0 0.0
      %300 = vmatpush1.msra.mxu0 %v263
      %301 = vmatprep.subr.mxu0 0.0
      %302 = vmatpush1.msra.mxu0 %v264
      %303 = vmatprep.subr.mxu0 0.0
      %304 = vmatpush1.msra.mxu0 %v265
      %305 = vmatprep.subr.mxu0 0.0
      %306 = vmatpush1.msra.mxu0 %v266
      %307 = vmatprep.subr.mxu0 0.0
      %308 = vmatpush1.msra.mxu0 0.0
      %309 = vmatprep.subr.mxu0 0.0
      %310 = vmatpush1.msra.mxu0 0.0
      %311 = vmatprep.subr.mxu0 0.0
      %312 = vmatpush1.msra.mxu0 0.0
      %313 = vmatprep.subr.mxu0 0.0
      %314 = vmatpush1.msra.mxu0 0.0
      %315 = vmatprep.subr.mxu0 0.0
      %316 = vmatpush1.msra.mxu0 0.0
      %317 = vmatprep.subr.mxu0 0.0
      %318 = vmatpush1.msra.mxu0 0.0
      %319 = vmatprep.subr.mxu0 0.0
      %320 = vmatpush1.msra.mxu0 0.0
      %321 = vmatprep.subr.mxu0 0.0
      %322 = vmatpush1.msra.mxu0 0.0
      %323 = vmatprep.subr.mxu0 0.0
      %324 = vmatpush1.msra.mxu0 0.0
      %325 = vmatprep.subr.mxu0 0.0
      %326 = vmatpush1.msra.mxu0 0.0
      %327 = vmatprep.subr.mxu0 0.0
      %328 = vmatpush1.msra.mxu0 0.0
      %329 = vmatprep.subr.mxu0 0.0
      %330 = vmatpush1.msra.mxu0 0.0
      %331 = vmatprep.subr.mxu0 0.0
      %332 = vmatpush1.msra.mxu0 0.0
      %333 = vmatprep.subr.mxu0 0.0
      %334 = vmatpush1.msra.mxu0 0.0
      %335 = vmatprep.subr.mxu0 0.0
      %336 = vmatpush1.msra.mxu0 0.0
      %337 = vmatprep.subr.mxu0 0.0
      %338 = vmatpush1.msra.mxu0 0.0
      %339 = vmatprep.subr.mxu0 0.0
      %340 = vmatpush1.msra.mxu0 0.0
      %341 = vmatprep.subr.mxu0 0.0
      %342 = vmatpush1.msra.mxu0 0.0
      %343 = vmatprep.subr.mxu0 0.0
      %344 = vmatpush1.msra.mxu0 0.0
      %345 = vmatprep.subr.mxu0 0.0
      %346 = vmatpush1.msra.mxu0 0.0
      %347 = vmatprep.subr.mxu0 0.0
      %348 = vmatpush1.msra.mxu0 0.0
      %349 = vmatprep.subr.mxu0 0.0
      %350 = vmatpush1.msra.mxu0 0.0
      %351 = vmatprep.subr.mxu0 0.0
      %352 = vmatpush1.msra.mxu0 0.0
      %353 = vmatprep.subr.mxu0 0.0
      %354 = vmatpush1.msra.mxu0 0.0
      %355 = vmatprep.subr.mxu0 0.0
      %356 = vmatpush1.msra.mxu0 0.0
      %357 = vmatprep.subr.mxu0 0.0
      %358 = vmatpush1.msra.mxu0 0.0
      %359 = vmatprep.subr.mxu0 0.0
      %360 = vmatpush1.msra.mxu0 0.0
      %361 = vmatprep.subr.mxu0 0.0
      %362 = vmatpush1.msra.mxu0 0.0
      %363 = vmatprep.mubr.f32.mxu0 0.0
      %364 = vmatmul.mubr.f32.gmra.mrb[0].mxu0 %v276
      %v365 = vpop.f32.mrb[0].mxu0
      %v366 = vadd.f32 %v272, %v365
      %v367 = vpop.f32.mrb[0].mxu0
      %368 = vmatprep.mubr.f32.mxu0 0.0
      %369 = vmatmul.mubr.f32.gmra.mrb[0].mxu0 %v279
      %v370 = vpop.f32.mrb[0].mxu0
      %v371 = vadd.f32 %v272, %v370
      %v372 = vpop.f32.mrb[0].mxu0
      %373 = vmatprep.mubr.f32.mxu0 0.0
      %374 = vmatmul.mubr.f32.gmra.mrb[0].mxu0 %v282
      %v375 = vpop.f32.mrb[0].mxu0
      %v376 = vadd.f32 %v272, %v375
      %v377 = vpop.f32.mrb[0].mxu0
      %378 = vmatprep.mubr.f32.mxu0 0.0
      %379 = vmatmul.mubr.f32.gmra.mrb[0].mxu0 %v285
      %v380 = vpop.f32.mrb[0].mxu0
      %v381 = vadd.f32 %v272, %v380
      %v382 = vpop.f32.mrb[0].mxu0
      %383 = vmatprep.mubr.f32.mxu0 0.0
      %384 = vmatmul.mubr.f32.gmra.mrb[0].mxu0 %v288
      %v385 = vpop.f32.mrb[0].mxu0
      %v386 = vadd.f32 %v272, %v385
      %v387 = vpop.f32.mrb[0].mxu0
      %388 = vmatprep.mubr.f32.mxu0 0.0
      %389 = vmatmul.mubr.f32.gmra.mrb[0].mxu0 %v291
      %v390 = vpop.f32.mrb[0].mxu0
      %v391 = vadd.f32 %v272, %v390
      %v392 = vpop.f32.mrb[0].mxu0
      %393 = vmatprep.mubr.f32.mxu0 0.0
      %394 = vmatmul.mubr.f32.gmra.mrb[0].mxu0 %v294
      %v395 = vpop.f32.mrb[0].mxu0
      %v396 = vadd.f32 %v272, %v395
      %v397 = vpop.f32.mrb[0].mxu0
      %398 = vmatprep.mubr.f32.mxu0 0.0
      %399 = vmatmul.mubr.f32.gmra.mrb[0].mxu0 %v297
      %v400 = vpop.f32.mrb[0].mxu0
      %v401 = vadd.f32 %v272, %v400
      %v402 = vpop.f32.mrb[0].mxu0
      %403 = vdwg.mxu0
      %v404 = vld [vmem:[%s3] sm:$0xff]
      %v405 = vld [vmem:[%s3 + $0x8] sm:$0xff]
      %v406 = vld [vmem:[%s3 + $0x10] sm:$0xff]
      %v407 = vld [vmem:[%s3 + $0x18] sm:$0xff]
      %v408 = vld [vmem:[%s3 + $0x20] sm:$0xff]
      %v409 = vld [vmem:[%s3 + $0x28] sm:$0xff]
      %v410 = vld [vmem:[%s3 + $0x30] sm:$0xff]
      %v411 = vld [vmem:[%s3 + $0x38] sm:$0xff]
      %414 = vrot.lane.b32.xlu0 %v366, 96
      %v415 = vpop.permute.xlu0 %414
      %416 = vrot.lane.b32.xlu0 %v371, 96
      %v417 = vpop.permute.xlu0 %416
      %vm418 = vcmask 64512
      %v419 = vsel %vm418, %v366, 0
      %v421 = vsel %vm418, %v371, 0
      %v423 = vsel %vm418, %v415, 0
      %v425 = vsel %vm418, %v417, 0
      %427 = vmatprep.subr.mxu0 0.0
      %428 = vmatpush1.xpose.msra.mxu0 %v423
      %429 = vmatprep.subr.mxu0 0.0
      %430 = vmatpush1.xpose.msra.mxu0 %v425
      %431 = vmatprep.subr.mxu0 0.0
      %432 = vmatpush1.xpose.msra.mxu0 0.0
      %433 = vmatprep.subr.mxu0 0.0
      %434 = vmatpush1.xpose.msra.mxu0 0.0
      %435 = vmatprep.subr.mxu0 0.0
      %436 = vmatpush1.xpose.msra.mxu0 0.0
      %437 = vmatprep.subr.mxu0 0.0
      %438 = vmatpush1.xpose.msra.mxu0 0.0
      %439 = vmatprep.subr.mxu0 0.0
      %440 = vmatpush1.xpose.msra.mxu0 0.0
      %441 = vmatprep.subr.mxu0 0.0
      %442 = vmatpush1.xpose.msra.mxu0 0.0
      %443 = vmatprep.subr.mxu0 0.0
      %444 = vmatpush1.xpose.msra.mxu0 0.0
      %445 = vmatprep.subr.mxu0 0.0
      %446 = vmatpush1.xpose.msra.mxu0 0.0
      %447 = vmatprep.subr.mxu0 0.0
      %448 = vmatpush1.xpose.msra.mxu0 0.0
      %449 = vmatprep.subr.mxu0 0.0
      %450 = vmatpush1.xpose.msra.mxu0 0.0
      %451 = vmatprep.subr.mxu0 0.0
      %452 = vmatpush1.xpose.msra.mxu0 0.0
      %453 = vmatprep.subr.mxu0 0.0
      %454 = vmatpush1.xpose.msra.mxu0 0.0
      %455 = vmatprep.subr.mxu0 0.0
      %456 = vmatpush1.xpose.msra.mxu0 0.0
      %457 = vmatprep.subr.mxu0 0.0
      %458 = vmatpush1.xpose.msra.mxu0 0.0
      %459 = vmatprep.subr.mxu0 0.0
      %460 = vmatpush1.xpose.msra.mxu0 0.0
      %461 = vmatprep.subr.mxu0 0.0
      %462 = vmatpush1.xpose.msra.mxu0 0.0
      %463 = vmatprep.subr.mxu0 0.0
      %464 = vmatpush1.xpose.msra.mxu0 0.0
      %465 = vmatprep.subr.mxu0 0.0
      %466 = vmatpush1.xpose.msra.mxu0 0.0
      %467 = vmatprep.subr.mxu0 0.0
      %468 = vmatpush1.xpose.msra.mxu0 0.0
      %469 = vmatprep.subr.mxu0 0.0
      %470 = vmatpush1.xpose.msra.mxu0 0.0
      %471 = vmatprep.subr.mxu0 0.0
      %472 = vmatpush1.xpose.msra.mxu0 0.0
      %473 = vmatprep.subr.mxu0 0.0
      %474 = vmatpush1.xpose.msra.mxu0 0.0
      %475 = vmatprep.subr.mxu0 0.0
      %476 = vmatpush1.xpose.msra.mxu0 0.0
      %477 = vmatprep.subr.mxu0 0.0
      %478 = vmatpush1.xpose.msra.mxu0 0.0
      %479 = vmatprep.subr.mxu0 0.0
      %480 = vmatpush1.xpose.msra.mxu0 0.0
      %481 = vmatprep.subr.mxu0 0.0
      %482 = vmatpush1.xpose.msra.mxu0 0.0
      %483 = vmatprep.subr.mxu0 0.0
      %484 = vmatpush1.xpose.msra.mxu0 0.0
      %485 = vmatprep.subr.mxu0 0.0
      %486 = vmatpush1.xpose.msra.mxu0 0.0
      %487 = vmatprep.subr.mxu0 0.0
      %488 = vmatpush1.xpose.msra.mxu0 0.0
      %489 = vmatprep.subr.mxu0 0.0
      %490 = vmatpush1.xpose.msra.mxu0 0.0
      %491 = vmatprep.mubr.f32.mxu0 0.0
      %492 = vmatmul.mubr.f32.gmra.mrb[0].mxu0 %v419
      %v493 = vpop.f32.mrb[0].mxu0
      %v494 = vadd.f32 %v404, %v493
      %v495 = vpop.f32.mrb[0].mxu0
      %496 = vmatprep.mubr.f32.mxu0 0.0
      %497 = vmatmul.mubr.f32.gmra.mrb[0].mxu0 %v421
      %v498 = vpop.f32.mrb[0].mxu0
      %v499 = vadd.f32 %v405, %v498
      %v500 = vpop.f32.mrb[0].mxu0
      %501 = vdwg.mxu0
      %504 = vrot.lane.b32.xlu0 %v376, 96
      %v505 = vpop.permute.xlu0 %504
      %506 = vrot.lane.b32.xlu0 %v381, 96
      %v507 = vpop.permute.xlu0 %506
      %v508 = vsel %vm418, %v376, 0
      %v510 = vsel %vm418, %v381, 0
      %v512 = vsel %vm418, %v505, 0
      %v514 = vsel %vm418, %v507, 0
      %516 = vmatprep.subr.mxu0 0.0
      %517 = vmatpush1.xpose.msra.mxu0 %v512
      %518 = vmatprep.subr.mxu0 0.0
      %519 = vmatpush1.xpose.msra.mxu0 %v514
      %520 = vmatprep.subr.mxu0 0.0
      %521 = vmatpush1.xpose.msra.mxu0 0.0
      %522 = vmatprep.subr.mxu0 0.0
      %523 = vmatpush1.xpose.msra.mxu0 0.0
      %524 = vmatprep.subr.mxu0 0.0
      %525 = vmatpush1.xpose.msra.mxu0 0.0
      %526 = vmatprep.subr.mxu0 0.0
      %527 = vmatpush1.xpose.msra.mxu0 0.0
      %528 = vmatprep.subr.mxu0 0.0
      %529 = vmatpush1.xpose.msra.mxu0 0.0
      %530 = vmatprep.subr.mxu0 0.0
      %531 = vmatpush1.xpose.msra.mxu0 0.0
      %532 = vmatprep.subr.mxu0 0.0
      %533 = vmatpush1.xpose.msra.mxu0 0.0
      %534 = vmatprep.subr.mxu0 0.0
      %535 = vmatpush1.xpose.msra.mxu0 0.0
      %536 = vmatprep.subr.mxu0 0.0
      %537 = vmatpush1.xpose.msra.mxu0 0.0
      %538 = vmatprep.subr.mxu0 0.0
      %539 = vmatpush1.xpose.msra.mxu0 0.0
      %540 = vmatprep.subr.mxu0 0.0
      %541 = vmatpush1.xpose.msra.mxu0 0.0
      %542 = vmatprep.subr.mxu0 0.0
      %543 = vmatpush1.xpose.msra.mxu0 0.0
      %544 = vmatprep.subr.mxu0 0.0
      %545 = vmatpush1.xpose.msra.mxu0 0.0
      %546 = vmatprep.subr.mxu0 0.0
      %547 = vmatpush1.xpose.msra.mxu0 0.0
      %548 = vmatprep.subr.mxu0 0.0
      %549 = vmatpush1.xpose.msra.mxu0 0.0
      %550 = vmatprep.subr.mxu0 0.0
      %551 = vmatpush1.xpose.msra.mxu0 0.0
      %552 = vmatprep.subr.mxu0 0.0
      %553 = vmatpush1.xpose.msra.mxu0 0.0
      %554 = vmatprep.subr.mxu0 0.0
      %555 = vmatpush1.xpose.msra.mxu0 0.0
      %556 = vmatprep.subr.mxu0 0.0
      %557 = vmatpush1.xpose.msra.mxu0 0.0
      %558 = vmatprep.subr.mxu0 0.0
      %559 = vmatpush1.xpose.msra.mxu0 0.0
      %560 = vmatprep.subr.mxu0 0.0
      %561 = vmatpush1.xpose.msra.mxu0 0.0
      %562 = vmatprep.subr.mxu0 0.0
      %563 = vmatpush1.xpose.msra.mxu0 0.0
      %564 = vmatprep.subr.mxu0 0.0
      %565 = vmatpush1.xpose.msra.mxu0 0.0
      %566 = vmatprep.subr.mxu0 0.0
      %567 = vmatpush1.xpose.msra.mxu0 0.0
      %568 = vmatprep.subr.mxu0 0.0
      %569 = vmatpush1.xpose.msra.mxu0 0.0
      %570 = vmatprep.subr.mxu0 0.0
      %571 = vmatpush1.xpose.msra.mxu0 0.0
      %572 = vmatprep.subr.mxu0 0.0
      %573 = vmatpush1.xpose.msra.mxu0 0.0
      %574 = vmatprep.subr.mxu0 0.0
      %575 = vmatpush1.xpose.msra.mxu0 0.0
      %576 = vmatprep.subr.mxu0 0.0
      %577 = vmatpush1.xpose.msra.mxu0 0.0
      %578 = vmatprep.subr.mxu0 0.0
      %579 = vmatpush1.xpose.msra.mxu0 0.0
      %580 = vmatprep.mubr.f32.mxu0 0.0
      %581 = vmatmul.mubr.f32.gmra.mrb[0].mxu0 %v508
      %v582 = vpop.f32.mrb[0].mxu0
      %v583 = vadd.f32 %v404, %v582
      %v584 = vpop.f32.mrb[0].mxu0
      %585 = vmatprep.mubr.f32.mxu0 0.0
      %586 = vmatmul.mubr.f32.gmra.mrb[0].mxu0 %v510
      %v587 = vpop.f32.mrb[0].mxu0
      %v588 = vadd.f32 %v405, %v587
      %v589 = vpop.f32.mrb[0].mxu0
      %590 = vdwg.mxu0
      %593 = vrot.lane.b32.xlu0 %v386, 96
      %v594 = vpop.permute.xlu0 %593
      %595 = vrot.lane.b32.xlu0 %v391, 96
      %v596 = vpop.permute.xlu0 %595
      %v597 = vsel %vm418, %v386, 0
      %v599 = vsel %vm418, %v391, 0
      %v601 = vsel %vm418, %v594, 0
      %v603 = vsel %vm418, %v596, 0
      %605 = vmatprep.subr.mxu0 0.0
      %606 = vmatpush1.xpose.msra.mxu0 %v601
      %607 = vmatprep.subr.mxu0 0.0
      %608 = vmatpush1.xpose.msra.mxu0 %v603
      %609 = vmatprep.subr.mxu0 0.0
      %610 = vmatpush1.xpose.msra.mxu0 0.0
      %611 = vmatprep.subr.mxu0 0.0
      %612 = vmatpush1.xpose.msra.mxu0 0.0
      %613 = vmatprep.subr.mxu0 0.0
      %614 = vmatpush1.xpose.msra.mxu0 0.0
      %615 = vmatprep.subr.mxu0 0.0
      %616 = vmatpush1.xpose.msra.mxu0 0.0
      %617 = vmatprep.subr.mxu0 0.0
      %618 = vmatpush1.xpose.msra.mxu0 0.0
      %619 = vmatprep.subr.mxu0 0.0
      %620 = vmatpush1.xpose.msra.mxu0 0.0
      %621 = vmatprep.subr.mxu0 0.0
      %622 = vmatpush1.xpose.msra.mxu0 0.0
      %623 = vmatprep.subr.mxu0 0.0
      %624 = vmatpush1.xpose.msra.mxu0 0.0
      %625 = vmatprep.subr.mxu0 0.0
      %626 = vmatpush1.xpose.msra.mxu0 0.0
      %627 = vmatprep.subr.mxu0 0.0
      %628 = vmatpush1.xpose.msra.mxu0 0.0
      %629 = vmatprep.subr.mxu0 0.0
      %630 = vmatpush1.xpose.msra.mxu0 0.0
      %631 = vmatprep.subr.mxu0 0.0
      %632 = vmatpush1.xpose.msra.mxu0 0.0
      %633 = vmatprep.subr.mxu0 0.0
      %634 = vmatpush1.xpose.msra.mxu0 0.0
      %635 = vmatprep.subr.mxu0 0.0
      %636 = vmatpush1.xpose.msra.mxu0 0.0
      %637 = vmatprep.subr.mxu0 0.0
      %638 = vmatpush1.xpose.msra.mxu0 0.0
      %639 = vmatprep.subr.mxu0 0.0
      %640 = vmatpush1.xpose.msra.mxu0 0.0
      %641 = vmatprep.subr.mxu0 0.0
      %642 = vmatpush1.xpose.msra.mxu0 0.0
      %643 = vmatprep.subr.mxu0 0.0
      %644 = vmatpush1.xpose.msra.mxu0 0.0
      %645 = vmatprep.subr.mxu0 0.0
      %646 = vmatpush1.xpose.msra.mxu0 0.0
      %647 = vmatprep.subr.mxu0 0.0
      %648 = vmatpush1.xpose.msra.mxu0 0.0
      %649 = vmatprep.subr.mxu0 0.0
      %650 = vmatpush1.xpose.msra.mxu0 0.0
      %651 = vmatprep.subr.mxu0 0.0
      %652 = vmatpush1.xpose.msra.mxu0 0.0
      %653 = vmatprep.subr.mxu0 0.0
      %654 = vmatpush1.xpose.msra.mxu0 0.0
      %655 = vmatprep.subr.mxu0 0.0
      %656 = vmatpush1.xpose.msra.mxu0 0.0
      %657 = vmatprep.subr.mxu0 0.0
      %658 = vmatpush1.xpose.msra.mxu0 0.0
      %659 = vmatprep.subr.mxu0 0.0
      %660 = vmatpush1.xpose.msra.mxu0 0.0
      %661 = vmatprep.subr.mxu0 0.0
      %662 = vmatpush1.xpose.msra.mxu0 0.0
      %663 = vmatprep.subr.mxu0 0.0
      %664 = vmatpush1.xpose.msra.mxu0 0.0
      %665 = vmatprep.subr.mxu0 0.0
      %666 = vmatpush1.xpose.msra.mxu0 0.0
      %667 = vmatprep.subr.mxu0 0.0
      %668 = vmatpush1.xpose.msra.mxu0 0.0
      %669 = vmatprep.mubr.f32.mxu0 0.0
      %670 = vmatmul.mubr.f32.gmra.mrb[0].mxu0 %v597
      %v671 = vpop.f32.mrb[0].mxu0
      %v672 = vadd.f32 %v404, %v671
      %v673 = vpop.f32.mrb[0].mxu0
      %674 = vmatprep.mubr.f32.mxu0 0.0
      %675 = vmatmul.mubr.f32.gmra.mrb[0].mxu0 %v599
      %v676 = vpop.f32.mrb[0].mxu0
      %v677 = vadd.f32 %v405, %v676
      %v678 = vpop.f32.mrb[0].mxu0
      %679 = vdwg.mxu0
      %682 = vrot.lane.b32.xlu0 %v396, 96
      %v683 = vpop.permute.xlu0 %682
      %684 = vrot.lane.b32.xlu0 %v401, 96
      %v685 = vpop.permute.xlu0 %684
      %v686 = vsel %vm418, %v396, 0
      %v688 = vsel %vm418, %v401, 0
      %v690 = vsel %vm418, %v683, 0
      %v692 = vsel %vm418, %v685, 0
      %694 = vmatprep.subr.mxu0 0.0
      %695 = vmatpush1.xpose.msra.mxu0 %v690
      %696 = vmatprep.subr.mxu0 0.0
      %697 = vmatpush1.xpose.msra.mxu0 %v692
      %698 = vmatprep.subr.mxu0 0.0
      %699 = vmatpush1.xpose.msra.mxu0 0.0
      %700 = vmatprep.subr.mxu0 0.0
      %701 = vmatpush1.xpose.msra.mxu0 0.0
      %702 = vmatprep.subr.mxu0 0.0
      %703 = vmatpush1.xpose.msra.mxu0 0.0
      %704 = vmatprep.subr.mxu0 0.0
      %705 = vmatpush1.xpose.msra.mxu0 0.0
      %706 = vmatprep.subr.mxu0 0.0
      %707 = vmatpush1.xpose.msra.mxu0 0.0
      %708 = vmatprep.subr.mxu0 0.0
      %709 = vmatpush1.xpose.msra.mxu0 0.0
      %710 = vmatprep.subr.mxu0 0.0
      %711 = vmatpush1.xpose.msra.mxu0 0.0
      %712 = vmatprep.subr.mxu0 0.0
      %713 = vmatpush1.xpose.msra.mxu0 0.0
      %714 = vmatprep.subr.mxu0 0.0
      %715 = vmatpush1.xpose.msra.mxu0 0.0
      %716 = vmatprep.subr.mxu0 0.0
      %717 = vmatpush1.xpose.msra.mxu0 0.0
      %718 = vmatprep.subr.mxu0 0.0
      %719 = vmatpush1.xpose.msra.mxu0 0.0
      %720 = vmatprep.subr.mxu0 0.0
      %721 = vmatpush1.xpose.msra.mxu0 0.0
      %722 = vmatprep.subr.mxu0 0.0
      %723 = vmatpush1.xpose.msra.mxu0 0.0
      %724 = vmatprep.subr.mxu0 0.0
      %725 = vmatpush1.xpose.msra.mxu0 0.0
      %726 = vmatprep.subr.mxu0 0.0
      %727 = vmatpush1.xpose.msra.mxu0 0.0
      %728 = vmatprep.subr.mxu0 0.0
      %729 = vmatpush1.xpose.msra.mxu0 0.0
      %730 = vmatprep.subr.mxu0 0.0
      %731 = vmatpush1.xpose.msra.mxu0 0.0
      %732 = vmatprep.subr.mxu0 0.0
      %733 = vmatpush1.xpose.msra.mxu0 0.0
      %734 = vmatprep.subr.mxu0 0.0
      %735 = vmatpush1.xpose.msra.mxu0 0.0
      %736 = vmatprep.subr.mxu0 0.0
      %737 = vmatpush1.xpose.msra.mxu0 0.0
      %738 = vmatprep.subr.mxu0 0.0
      %739 = vmatpush1.xpose.msra.mxu0 0.0
      %740 = vmatprep.subr.mxu0 0.0
      %741 = vmatpush1.xpose.msra.mxu0 0.0
      %742 = vmatprep.subr.mxu0 0.0
      %743 = vmatpush1.xpose.msra.mxu0 0.0
      %744 = vmatprep.subr.mxu0 0.0
      %745 = vmatpush1.xpose.msra.mxu0 0.0
      %746 = vmatprep.subr.mxu0 0.0
      %747 = vmatpush1.xpose.msra.mxu0 0.0
      %748 = vmatprep.subr.mxu0 0.0
      %749 = vmatpush1.xpose.msra.mxu0 0.0
      %750 = vmatprep.subr.mxu0 0.0
      %751 = vmatpush1.xpose.msra.mxu0 0.0
      %752 = vmatprep.subr.mxu0 0.0
      %753 = vmatpush1.xpose.msra.mxu0 0.0
      %754 = vmatprep.subr.mxu0 0.0
      %755 = vmatpush1.xpose.msra.mxu0 0.0
      %756 = vmatprep.subr.mxu0 0.0
      %757 = vmatpush1.xpose.msra.mxu0 0.0
      %758 = vmatprep.mubr.f32.mxu0 0.0
      %759 = vmatmul.mubr.f32.gmra.mrb[0].mxu0 %v686
      %v760 = vpop.f32.mrb[0].mxu0
      %v761 = vadd.f32 %v404, %v760
      %v762 = vpop.f32.mrb[0].mxu0
      %763 = vmatprep.mubr.f32.mxu0 0.0
      %764 = vmatmul.mubr.f32.gmra.mrb[0].mxu0 %v688
      %v765 = vpop.f32.mrb[0].mxu0
      %v766 = vadd.f32 %v405, %v765
      %v767 = vpop.f32.mrb[0].mxu0
      %768 = vdwg.mxu0
      %vm769 = vcmask 130048
      %v770 = vsel %vm769, %v494, -inf
      %771 = vmax.xlane.f32.xlu0 %v770
      %v772 = vpop.xlane.xlu0 %771
      %v773 = vsel %vm769, %v499, -inf
      %774 = vmax.xlane.f32.xlu0 %v773
      %v775 = vpop.xlane.xlu0 %774
      %v776 = vsel %vm769, %v583, -inf
      %777 = vmax.xlane.f32.xlu0 %v776
      %v778 = vpop.xlane.xlu0 %777
      %v779 = vsel %vm769, %v588, -inf
      %780 = vmax.xlane.f32.xlu0 %v779
      %v781 = vpop.xlane.xlu0 %780
      %v782 = vsel %vm769, %v672, -inf
      %783 = vmax.xlane.f32.xlu0 %v782
      %v784 = vpop.xlane.xlu0 %783
      %v785 = vsel %vm769, %v677, -inf
      %786 = vmax.xlane.f32.xlu0 %v785
      %v787 = vpop.xlane.xlu0 %786
      %v788 = vsel %vm769, %v761, -inf
      %789 = vmax.xlane.f32.xlu0 %v788
      %v790 = vpop.xlane.xlu0 %789
      %v791 = vsel %vm769, %v766, -inf
      %792 = vmax.xlane.f32.xlu0 %v791
      %v793 = vpop.xlane.xlu0 %792
      %v794 = vsub.f32 %v494, %v772
      %v795 = vsub.f32 %v499, %v775
      %v796 = vsub.f32 %v583, %v778
      %v797 = vsub.f32 %v588, %v781
      %v798 = vsub.f32 %v672, %v784
      %v799 = vsub.f32 %v677, %v787
      %v800 = vsub.f32 %v761, %v790
      %v801 = vsub.f32 %v766, %v793
      %v802 = vmul.f32 %v794, 1.442695
      %v803 = vpow.pop %v802
      %v804 = vmul.f32 %v795, 1.442695
      %v805 = vpow.pop %v804
      %v806 = vmul.f32 %v796, 1.442695
      %v807 = vpow.pop %v806
      %v808 = vmul.f32 %v797, 1.442695
      %v809 = vpow.pop %v808
      %v810 = vmul.f32 %v798, 1.442695
      %v811 = vpow.pop %v810
      %v812 = vmul.f32 %v799, 1.442695
      %v813 = vpow.pop %v812
      %v814 = vmul.f32 %v800, 1.442695
      %v815 = vpow.pop %v814
      %v816 = vmul.f32 %v801, 1.442695
      %v817 = vpow.pop %v816
      %v818 = vsel %vm769, %v803, 0.0
      %819 = vadd.xlane.f32.xlu0 %v818
      %v820 = vpop.xlane.xlu0 %819
      %v821 = vsel %vm769, %v805, 0.0
      %822 = vadd.xlane.f32.xlu0 %v821
      %v823 = vpop.xlane.xlu0 %822
      %v824 = vsel %vm769, %v807, 0.0
      %825 = vadd.xlane.f32.xlu0 %v824
      %v826 = vpop.xlane.xlu0 %825
      %v827 = vsel %vm769, %v809, 0.0
      %828 = vadd.xlane.f32.xlu0 %v827
      %v829 = vpop.xlane.xlu0 %828
      %v830 = vsel %vm769, %v811, 0.0
      %831 = vadd.xlane.f32.xlu0 %v830
      %v832 = vpop.xlane.xlu0 %831
      %v833 = vsel %vm769, %v813, 0.0
      %834 = vadd.xlane.f32.xlu0 %v833
      %v835 = vpop.xlane.xlu0 %834
      %v836 = vsel %vm769, %v815, 0.0
      %837 = vadd.xlane.f32.xlu0 %v836
      %v838 = vpop.xlane.xlu0 %837
      %v839 = vsel %vm769, %v817, 0.0
      %840 = vadd.xlane.f32.xlu0 %v839
      %v841 = vpop.xlane.xlu0 %840
      %v842 = vrcp.pop %v820
      %v843 = vrcp.pop %v823
      %v844 = vrcp.pop %v826
      %v845 = vrcp.pop %v829
      %v846 = vrcp.pop %v832
      %v847 = vrcp.pop %v835
      %v848 = vrcp.pop %v838
      %v849 = vrcp.pop %v841
      %v850 = vmul.f32 %v803, %v842
      %v851 = vmul.f32 %v805, %v843
      %v852 = vmul.f32 %v807, %v844
      %v853 = vmul.f32 %v809, %v845
      %v854 = vmul.f32 %v811, %v846
      %v855 = vmul.f32 %v813, %v847
      %v856 = vmul.f32 %v815, %v848
      %v857 = vmul.f32 %v817, %v849
      %858 = vrot.lane.b32.xlu0 %v366, 64
      %v859 = vpop.permute.xlu0 %858
      %860 = vrot.lane.b32.xlu0 %v371, 64
      %v861 = vpop.permute.xlu0 %860
      %v865 = vsel %vm769, %v850, 0
      %v868 = vsel %vm769, %v851, 0
      %870 = vmatprep.subr.mxu0 0.0
      %871 = vmatpush1.msra.mxu0 %v859
      %872 = vmatprep.subr.mxu0 0.0
      %873 = vmatpush1.msra.mxu0 %v861
      %874 = vmatprep.subr.mxu0 0.0
      %875 = vmatpush1.msra.mxu0 0.0
      %876 = vmatprep.subr.mxu0 0.0
      %877 = vmatpush1.msra.mxu0 0.0
      %878 = vmatprep.subr.mxu0 0.0
      %879 = vmatpush1.msra.mxu0 0.0
      %880 = vmatprep.subr.mxu0 0.0
      %881 = vmatpush1.msra.mxu0 0.0
      %882 = vmatprep.subr.mxu0 0.0
      %883 = vmatpush1.msra.mxu0 0.0
      %884 = vmatprep.subr.mxu0 0.0
      %885 = vmatpush1.msra.mxu0 0.0
      %886 = vmatprep.subr.mxu0 0.0
      %887 = vmatpush1.msra.mxu0 0.0
      %888 = vmatprep.subr.mxu0 0.0
      %889 = vmatpush1.msra.mxu0 0.0
      %890 = vmatprep.subr.mxu0 0.0
      %891 = vmatpush1.msra.mxu0 0.0
      %892 = vmatprep.subr.mxu0 0.0
      %893 = vmatpush1.msra.mxu0 0.0
      %894 = vmatprep.subr.mxu0 0.0
      %895 = vmatpush1.msra.mxu0 0.0
      %896 = vmatprep.subr.mxu0 0.0
      %897 = vmatpush1.msra.mxu0 0.0
      %898 = vmatprep.subr.mxu0 0.0
      %899 = vmatpush1.msra.mxu0 0.0
      %900 = vmatprep.subr.mxu0 0.0
      %901 = vmatpush1.msra.mxu0 0.0
      %902 = vmatprep.subr.mxu0 0.0
      %903 = vmatpush1.msra.mxu0 0.0
      %904 = vmatprep.subr.mxu0 0.0
      %905 = vmatpush1.msra.mxu0 0.0
      %906 = vmatprep.subr.mxu0 0.0
      %907 = vmatpush1.msra.mxu0 0.0
      %908 = vmatprep.subr.mxu0 0.0
      %909 = vmatpush1.msra.mxu0 0.0
      %910 = vmatprep.subr.mxu0 0.0
      %911 = vmatpush1.msra.mxu0 0.0
      %912 = vmatprep.subr.mxu0 0.0
      %913 = vmatpush1.msra.mxu0 0.0
      %914 = vmatprep.subr.mxu0 0.0
      %915 = vmatpush1.msra.mxu0 0.0
      %916 = vmatprep.subr.mxu0 0.0
      %917 = vmatpush1.msra.mxu0 0.0
      %918 = vmatprep.subr.mxu0 0.0
      %919 = vmatpush1.msra.mxu0 0.0
      %920 = vmatprep.subr.mxu0 0.0
      %921 = vmatpush1.msra.mxu0 0.0
      %922 = vmatprep.subr.mxu0 0.0
      %923 = vmatpush1.msra.mxu0 0.0
      %924 = vmatprep.subr.mxu0 0.0
      %925 = vmatpush1.msra.mxu0 0.0
      %926 = vmatprep.subr.mxu0 0.0
      %927 = vmatpush1.msra.mxu0 0.0
      %928 = vmatprep.subr.mxu0 0.0
      %929 = vmatpush1.msra.mxu0 0.0
      %930 = vmatprep.subr.mxu0 0.0
      %931 = vmatpush1.msra.mxu0 0.0
      %932 = vmatprep.subr.mxu0 0.0
      %933 = vmatpush1.msra.mxu0 0.0
      %934 = vmatprep.mubr.f32.mxu0 0.0
      %935 = vmatmul.mubr.f32.gmra.mrb[0].mxu0 %v865
      %v936 = vpop.f32.mrb[0].mxu0
      %v937 = vadd.f32 0.0, %v936
      %v938 = vpop.f32.mrb[0].mxu0
      %939 = vmatprep.mubr.f32.mxu0 0.0
      %940 = vmatmul.mubr.f32.gmra.mrb[0].mxu0 %v868
      %v941 = vpop.f32.mrb[0].mxu0
      %v942 = vadd.f32 0.0, %v941
      %v943 = vpop.f32.mrb[0].mxu0
      %944 = vdwg.mxu0
      %945 = vrot.lane.b32.xlu0 %v376, 64
      %v946 = vpop.permute.xlu0 %945
      %947 = vrot.lane.b32.xlu0 %v381, 64
      %v948 = vpop.permute.xlu0 %947
      %v952 = vsel %vm769, %v852, 0
      %v955 = vsel %vm769, %v853, 0
      %957 = vmatprep.subr.mxu0 0.0
      %958 = vmatpush1.msra.mxu0 %v946
      %959 = vmatprep.subr.mxu0 0.0
      %960 = vmatpush1.msra.mxu0 %v948
      %961 = vmatprep.subr.mxu0 0.0
      %962 = vmatpush1.msra.mxu0 0.0
      %963 = vmatprep.subr.mxu0 0.0
      %964 = vmatpush1.msra.mxu0 0.0
      %965 = vmatprep.subr.mxu0 0.0
      %966 = vmatpush1.msra.mxu0 0.0
      %967 = vmatprep.subr.mxu0 0.0
      %968 = vmatpush1.msra.mxu0 0.0
      %969 = vmatprep.subr.mxu0 0.0
      %970 = vmatpush1.msra.mxu0 0.0
      %971 = vmatprep.subr.mxu0 0.0
      %972 = vmatpush1.msra.mxu0 0.0
      %973 = vmatprep.subr.mxu0 0.0
      %974 = vmatpush1.msra.mxu0 0.0
      %975 = vmatprep.subr.mxu0 0.0
      %976 = vmatpush1.msra.mxu0 0.0
      %977 = vmatprep.subr.mxu0 0.0
      %978 = vmatpush1.msra.mxu0 0.0
      %979 = vmatprep.subr.mxu0 0.0
      %980 = vmatpush1.msra.mxu0 0.0
      %981 = vmatprep.subr.mxu0 0.0
      %982 = vmatpush1.msra.mxu0 0.0
      %983 = vmatprep.subr.mxu0 0.0
      %984 = vmatpush1.msra.mxu0 0.0
      %985 = vmatprep.subr.mxu0 0.0
      %986 = vmatpush1.msra.mxu0 0.0
      %987 = vmatprep.subr.mxu0 0.0
      %988 = vmatpush1.msra.mxu0 0.0
      %989 = vmatprep.subr.mxu0 0.0
      %990 = vmatpush1.msra.mxu0 0.0
      %991 = vmatprep.subr.mxu0 0.0
      %992 = vmatpush1.msra.mxu0 0.0
      %993 = vmatprep.subr.mxu0 0.0
      %994 = vmatpush1.msra.mxu0 0.0
      %995 = vmatprep.subr.mxu0 0.0
      %996 = vmatpush1.msra.mxu0 0.0
      %997 = vmatprep.subr.mxu0 0.0
      %998 = vmatpush1.msra.mxu0 0.0
      %999 = vmatprep.subr.mxu0 0.0
      %1000 = vmatpush1.msra.mxu0 0.0
      %1001 = vmatprep.subr.mxu0 0.0
      %1002 = vmatpush1.msra.mxu0 0.0
      %1003 = vmatprep.subr.mxu0 0.0
      %1004 = vmatpush1.msra.mxu0 0.0
      %1005 = vmatprep.subr.mxu0 0.0
      %1006 = vmatpush1.msra.mxu0 0.0
      %1007 = vmatprep.subr.mxu0 0.0
      %1008 = vmatpush1.msra.mxu0 0.0
      %1009 = vmatprep.subr.mxu0 0.0
      %1010 = vmatpush1.msra.mxu0 0.0
      %1011 = vmatprep.subr.mxu0 0.0
      %1012 = vmatpush1.msra.mxu0 0.0
      %1013 = vmatprep.subr.mxu0 0.0
      %1014 = vmatpush1.msra.mxu0 0.0
      %1015 = vmatprep.subr.mxu0 0.0
      %1016 = vmatpush1.msra.mxu0 0.0
      %1017 = vmatprep.subr.mxu0 0.0
      %1018 = vmatpush1.msra.mxu0 0.0
      %1019 = vmatprep.subr.mxu0 0.0
      %1020 = vmatpush1.msra.mxu0 0.0
      %1021 = vmatprep.mubr.f32.mxu0 0.0
      %1022 = vmatmul.mubr.f32.gmra.mrb[0].mxu0 %v952
      %v1023 = vpop.f32.mrb[0].mxu0
      %v1024 = vadd.f32 0.0, %v1023
      %v1025 = vpop.f32.mrb[0].mxu0
      %1026 = vmatprep.mubr.f32.mxu0 0.0
      %1027 = vmatmul.mubr.f32.gmra.mrb[0].mxu0 %v955
      %v1028 = vpop.f32.mrb[0].mxu0
      %v1029 = vadd.f32 0.0, %v1028
      %v1030 = vpop.f32.mrb[0].mxu0
      %1031 = vdwg.mxu0
      %1032 = vrot.lane.b32.xlu0 %v386, 64
      %v1033 = vpop.permute.xlu0 %1032
      %1034 = vrot.lane.b32.xlu0 %v391, 64
      %v1035 = vpop.permute.xlu0 %1034
      %v1039 = vsel %vm769, %v854, 0
      %v1042 = vsel %vm769, %v855, 0
      %1044 = vmatprep.subr.mxu0 0.0
      %1045 = vmatpush1.msra.mxu0 %v1033
      %1046 = vmatprep.subr.mxu0 0.0
      %1047 = vmatpush1.msra.mxu0 %v1035
      %1048 = vmatprep.subr.mxu0 0.0
      %1049 = vmatpush1.msra.mxu0 0.0
      %1050 = vmatprep.subr.mxu0 0.0
      %1051 = vmatpush1.msra.mxu0 0.0
      %1052 = vmatprep.subr.mxu0 0.0
      %1053 = vmatpush1.msra.mxu0 0.0
      %1054 = vmatprep.subr.mxu0 0.0
      %1055 = vmatpush1.msra.mxu0 0.0
      %1056 = vmatprep.subr.mxu0 0.0
      %1057 = vmatpush1.msra.mxu0 0.0
      %1058 = vmatprep.subr.mxu0 0.0
      %1059 = vmatpush1.msra.mxu0 0.0
      %1060 = vmatprep.subr.mxu0 0.0
      %1061 = vmatpush1.msra.mxu0 0.0
      %1062 = vmatprep.subr.mxu0 0.0
      %1063 = vmatpush1.msra.mxu0 0.0
      %1064 = vmatprep.subr.mxu0 0.0
      %1065 = vmatpush1.msra.mxu0 0.0
      %1066 = vmatprep.subr.mxu0 0.0
      %1067 = vmatpush1.msra.mxu0 0.0
      %1068 = vmatprep.subr.mxu0 0.0
      %1069 = vmatpush1.msra.mxu0 0.0
      %1070 = vmatprep.subr.mxu0 0.0
      %1071 = vmatpush1.msra.mxu0 0.0
      %1072 = vmatprep.subr.mxu0 0.0
      %1073 = vmatpush1.msra.mxu0 0.0
      %1074 = vmatprep.subr.mxu0 0.0
      %1075 = vmatpush1.msra.mxu0 0.0
      %1076 = vmatprep.subr.mxu0 0.0
      %1077 = vmatpush1.msra.mxu0 0.0
      %1078 = vmatprep.subr.mxu0 0.0
      %1079 = vmatpush1.msra.mxu0 0.0
      %1080 = vmatprep.subr.mxu0 0.0
      %1081 = vmatpush1.msra.mxu0 0.0
      %1082 = vmatprep.subr.mxu0 0.0
      %1083 = vmatpush1.msra.mxu0 0.0
      %1084 = vmatprep.subr.mxu0 0.0
      %1085 = vmatpush1.msra.mxu0 0.0
      %1086 = vmatprep.subr.mxu0 0.0
      %1087 = vmatpush1.msra.mxu0 0.0
      %1088 = vmatprep.subr.mxu0 0.0
      %1089 = vmatpush1.msra.mxu0 0.0
      %1090 = vmatprep.subr.mxu0 0.0
      %1091 = vmatpush1.msra.mxu0 0.0
      %1092 = vmatprep.subr.mxu0 0.0
      %1093 = vmatpush1.msra.mxu0 0.0
      %1094 = vmatprep.subr.mxu0 0.0
      %1095 = vmatpush1.msra.mxu0 0.0
      %1096 = vmatprep.subr.mxu0 0.0
      %1097 = vmatpush1.msra.mxu0 0.0
      %1098 = vmatprep.subr.mxu0 0.0
      %1099 = vmatpush1.msra.mxu0 0.0
      %1100 = vmatprep.subr.mxu0 0.0
      %1101 = vmatpush1.msra.mxu0 0.0
      %1102 = vmatprep.subr.mxu0 0.0
      %1103 = vmatpush1.msra.mxu0 0.0
      %1104 = vmatprep.subr.mxu0 0.0
      %1105 = vmatpush1.msra.mxu0 0.0
      %1106 = vmatprep.subr.mxu0 0.0
      %1107 = vmatpush1.msra.mxu0 0.0
      %1108 = vmatprep.mubr.f32.mxu0 0.0
      %1109 = vmatmul.mubr.f32.gmra.mrb[0].mxu0 %v1039
      %v1110 = vpop.f32.mrb[0].mxu0
      %v1111 = vadd.f32 0.0, %v1110
      %v1112 = vpop.f32.mrb[0].mxu0
      %1113 = vmatprep.mubr.f32.mxu0 0.0
      %1114 = vmatmul.mubr.f32.gmra.mrb[0].mxu0 %v1042
      %v1115 = vpop.f32.mrb[0].mxu0
      %v1116 = vadd.f32 0.0, %v1115
      %v1117 = vpop.f32.mrb[0].mxu0
      %1118 = vdwg.mxu0
      %1119 = vrot.lane.b32.xlu0 %v396, 64
      %v1120 = vpop.permute.xlu0 %1119
      %1121 = vrot.lane.b32.xlu0 %v401, 64
      %v1122 = vpop.permute.xlu0 %1121
      %v1126 = vsel %vm769, %v856, 0
      %v1129 = vsel %vm769, %v857, 0
      %1131 = vmatprep.subr.mxu0 0.0
      %1132 = vmatpush1.msra.mxu0 %v1120
      %1133 = vmatprep.subr.mxu0 0.0
      %1134 = vmatpush1.msra.mxu0 %v1122
      %1135 = vmatprep.subr.mxu0 0.0
      %1136 = vmatpush1.msra.mxu0 0.0
      %1137 = vmatprep.subr.mxu0 0.0
      %1138 = vmatpush1.msra.mxu0 0.0
      %1139 = vmatprep.subr.mxu0 0.0
      %1140 = vmatpush1.msra.mxu0 0.0
      %1141 = vmatprep.subr.mxu0 0.0
      %1142 = vmatpush1.msra.mxu0 0.0
      %1143 = vmatprep.subr.mxu0 0.0
      %1144 = vmatpush1.msra.mxu0 0.0
      %1145 = vmatprep.subr.mxu0 0.0
      %1146 = vmatpush1.msra.mxu0 0.0
      %1147 = vmatprep.subr.mxu0 0.0
      %1148 = vmatpush1.msra.mxu0 0.0
      %1149 = vmatprep.subr.mxu0 0.0
      %1150 = vmatpush1.msra.mxu0 0.0
      %1151 = vmatprep.subr.mxu0 0.0
      %1152 = vmatpush1.msra.mxu0 0.0
      %1153 = vmatprep.subr.mxu0 0.0
      %1154 = vmatpush1.msra.mxu0 0.0
      %1155 = vmatprep.subr.mxu0 0.0
      %1156 = vmatpush1.msra.mxu0 0.0
      %1157 = vmatprep.subr.mxu0 0.0
      %1158 = vmatpush1.msra.mxu0 0.0
      %1159 = vmatprep.subr.mxu0 0.0
      %1160 = vmatpush1.msra.mxu0 0.0
      %1161 = vmatprep.subr.mxu0 0.0
      %1162 = vmatpush1.msra.mxu0 0.0
      %1163 = vmatprep.subr.mxu0 0.0
      %1164 = vmatpush1.msra.mxu0 0.0
      %1165 = vmatprep.subr.mxu0 0.0
      %1166 = vmatpush1.msra.mxu0 0.0
      %1167 = vmatprep.subr.mxu0 0.0
      %1168 = vmatpush1.msra.mxu0 0.0
      %1169 = vmatprep.subr.mxu0 0.0
      %1170 = vmatpush1.msra.mxu0 0.0
      %1171 = vmatprep.subr.mxu0 0.0
      %1172 = vmatpush1.msra.mxu0 0.0
      %1173 = vmatprep.subr.mxu0 0.0
      %1174 = vmatpush1.msra.mxu0 0.0
      %1175 = vmatprep.subr.mxu0 0.0
      %1176 = vmatpush1.msra.mxu0 0.0
      %1177 = vmatprep.subr.mxu0 0.0
      %1178 = vmatpush1.msra.mxu0 0.0
      %1179 = vmatprep.subr.mxu0 0.0
      %1180 = vmatpush1.msra.mxu0 0.0
      %1181 = vmatprep.subr.mxu0 0.0
      %1182 = vmatpush1.msra.mxu0 0.0
      %1183 = vmatprep.subr.mxu0 0.0
      %1184 = vmatpush1.msra.mxu0 0.0
      %1185 = vmatprep.subr.mxu0 0.0
      %1186 = vmatpush1.msra.mxu0 0.0
      %1187 = vmatprep.subr.mxu0 0.0
      %1188 = vmatpush1.msra.mxu0 0.0
      %1189 = vmatprep.subr.mxu0 0.0
      %1190 = vmatpush1.msra.mxu0 0.0
      %1191 = vmatprep.subr.mxu0 0.0
      %1192 = vmatpush1.msra.mxu0 0.0
      %1193 = vmatprep.subr.mxu0 0.0
      %1194 = vmatpush1.msra.mxu0 0.0
      %1195 = vmatprep.mubr.f32.mxu0 0.0
      %1196 = vmatmul.mubr.f32.gmra.mrb[0].mxu0 %v1126
      %v1197 = vpop.f32.mrb[0].mxu0
      %v1198 = vadd.f32 0.0, %v1197
      %v1199 = vpop.f32.mrb[0].mxu0
      %1200 = vmatprep.mubr.f32.mxu0 0.0
      %1201 = vmatmul.mubr.f32.gmra.mrb[0].mxu0 %v1129
      %v1202 = vpop.f32.mrb[0].mxu0
      %v1203 = vadd.f32 0.0, %v1202
      %v1204 = vpop.f32.mrb[0].mxu0
      %1205 = vdwg.mxu0
      %1206 = vst.msk [vmem:[#allocation2] sm:$0xff] %vm418, %v937
      %1207 = vst.msk [vmem:[#allocation2 + $0x8] sm:$0xff] %vm418, %v942
      %1208 = vst.msk [vmem:[#allocation2 + $0x10] sm:$0xff] %vm418, %v1024
      %1209 = vst.msk [vmem:[#allocation2 + $0x18] sm:$0xff] %vm418, %v1029
      %1210 = vst.msk [vmem:[#allocation2 + $0x20] sm:$0xff] %vm418, %v1111
      %1211 = vst.msk [vmem:[#allocation2 + $0x28] sm:$0xff] %vm418, %v1116
      %1212 = vst.msk [vmem:[#allocation2 + $0x30] sm:$0xff] %vm418, %v1198
      %1213 = vst.msk [vmem:[#allocation2 + $0x38] sm:$0xff] %vm418, %v1203
      %1214 = vrot.lane.b32.xlu0 %v366, 120
      %v1215 = vpop.permute.xlu0 %1214
      %1216 = vrot.lane.b32.xlu0 %v371, 120
      %v1217 = vpop.permute.xlu0 %1216
      %1218 = vrot.lane.b32.xlu0 %v366, 88
      %v1219 = vpop.permute.xlu0 %1218
      %1220 = vrot.lane.b32.xlu0 %v371, 88
      %v1221 = vpop.permute.xlu0 %1220
      %v1222 = vsel %vm418, %v1215, 0
      %v1224 = vsel %vm418, %v1217, 0
      %v1226 = vsel %vm418, %v1219, 0
      %v1228 = vsel %vm418, %v1221, 0
      %1230 = vmatprep.subr.mxu0 0.0
      %1231 = vmatpush1.xpose.msra.mxu0 %v1226
      %1232 = vmatprep.subr.mxu0 0.0
      %1233 = vmatpush1.xpose.msra.mxu0 %v1228
      %1234 = vmatprep.subr.mxu0 0.0
      %1235 = vmatpush1.xpose.msra.mxu0 0.0
      %1236 = vmatprep.subr.mxu0 0.0
      %1237 = vmatpush1.xpose.msra.mxu0 0.0
      %1238 = vmatprep.subr.mxu0 0.0
      %1239 = vmatpush1.xpose.msra.mxu0 0.0
      %1240 = vmatprep.subr.mxu0 0.0
      %1241 = vmatpush1.xpose.msra.mxu0 0.0
      %1242 = vmatprep.subr.mxu0 0.0
      %1243 = vmatpush1.xpose.msra.mxu0 0.0
      %1244 = vmatprep.subr.mxu0 0.0
      %1245 = vmatpush1.xpose.msra.mxu0 0.0
      %1246 = vmatprep.subr.mxu0 0.0
      %1247 = vmatpush1.xpose.msra.mxu0 0.0
      %1248 = vmatprep.subr.mxu0 0.0
      %1249 = vmatpush1.xpose.msra.mxu0 0.0
      %1250 = vmatprep.subr.mxu0 0.0
      %1251 = vmatpush1.xpose.msra.mxu0 0.0
      %1252 = vmatprep.subr.mxu0 0.0
      %1253 = vmatpush1.xpose.msra.mxu0 0.0
      %1254 = vmatprep.subr.mxu0 0.0
      %1255 = vmatpush1.xpose.msra.mxu0 0.0
      %1256 = vmatprep.subr.mxu0 0.0
      %1257 = vmatpush1.xpose.msra.mxu0 0.0
      %1258 = vmatprep.subr.mxu0 0.0
      %1259 = vmatpush1.xpose.msra.mxu0 0.0
      %1260 = vmatprep.subr.mxu0 0.0
      %1261 = vmatpush1.xpose.msra.mxu0 0.0
      %1262 = vmatprep.subr.mxu0 0.0
      %1263 = vmatpush1.xpose.msra.mxu0 0.0
      %1264 = vmatprep.subr.mxu0 0.0
      %1265 = vmatpush1.xpose.msra.mxu0 0.0
      %1266 = vmatprep.subr.mxu0 0.0
      %1267 = vmatpush1.xpose.msra.mxu0 0.0
      %1268 = vmatprep.subr.mxu0 0.0
      %1269 = vmatpush1.xpose.msra.mxu0 0.0
      %1270 = vmatprep.subr.mxu0 0.0
      %1271 = vmatpush1.xpose.msra.mxu0 0.0
      %1272 = vmatprep.subr.mxu0 0.0
      %1273 = vmatpush1.xpose.msra.mxu0 0.0
      %1274 = vmatprep.subr.mxu0 0.0
      %1275 = vmatpush1.xpose.msra.mxu0 0.0
      %1276 = vmatprep.subr.mxu0 0.0
      %1277 = vmatpush1.xpose.msra.mxu0 0.0
      %1278 = vmatprep.subr.mxu0 0.0
      %1279 = vmatpush1.xpose.msra.mxu0 0.0
      %1280 = vmatprep.subr.mxu0 0.0
      %1281 = vmatpush1.xpose.msra.mxu0 0.0
      %1282 = vmatprep.subr.mxu0 0.0
      %1283 = vmatpush1.xpose.msra.mxu0 0.0
      %1284 = vmatprep.subr.mxu0 0.0
      %1285 = vmatpush1.xpose.msra.mxu0 0.0
      %1286 = vmatprep.subr.mxu0 0.0
      %1287 = vmatpush1.xpose.msra.mxu0 0.0
      %1288 = vmatprep.subr.mxu0 0.0
      %1289 = vmatpush1.xpose.msra.mxu0 0.0
      %1290 = vmatprep.subr.mxu0 0.0
      %1291 = vmatpush1.xpose.msra.mxu0 0.0
      %1292 = vmatprep.subr.mxu0 0.0
      %1293 = vmatpush1.xpose.msra.mxu0 0.0
      %1294 = vmatprep.mubr.f32.mxu0 0.0
      %1295 = vmatmul.mubr.f32.gmra.mrb[0].mxu0 %v1222
      %v1296 = vpop.f32.mrb[0].mxu0
      %v1297 = vadd.f32 %v406, %v1296
      %v1298 = vpop.f32.mrb[0].mxu0
      %1299 = vmatprep.mubr.f32.mxu0 0.0
      %1300 = vmatmul.mubr.f32.gmra.mrb[0].mxu0 %v1224
      %v1301 = vpop.f32.mrb[0].mxu0
      %v1302 = vadd.f32 %v407, %v1301
      %v1303 = vpop.f32.mrb[0].mxu0
      %1304 = vdwg.mxu0
      %1305 = vrot.lane.b32.xlu0 %v376, 120
      %v1306 = vpop.permute.xlu0 %1305
      %1307 = vrot.lane.b32.xlu0 %v381, 120
      %v1308 = vpop.permute.xlu0 %1307
      %1309 = vrot.lane.b32.xlu0 %v376, 88
      %v1310 = vpop.permute.xlu0 %1309
      %1311 = vrot.lane.b32.xlu0 %v381, 88
      %v1312 = vpop.permute.xlu0 %1311
      %v1313 = vsel %vm418, %v1306, 0
      %v1315 = vsel %vm418, %v1308, 0
      %v1317 = vsel %vm418, %v1310, 0
      %v1319 = vsel %vm418, %v1312, 0
      %1321 = vmatprep.subr.mxu0 0.0
      %1322 = vmatpush1.xpose.msra.mxu0 %v1317
      %1323 = vmatprep.subr.mxu0 0.0
      %1324 = vmatpush1.xpose.msra.mxu0 %v1319
      %1325 = vmatprep.subr.mxu0 0.0
      %1326 = vmatpush1.xpose.msra.mxu0 0.0
      %1327 = vmatprep.subr.mxu0 0.0
      %1328 = vmatpush1.xpose.msra.mxu0 0.0
      %1329 = vmatprep.subr.mxu0 0.0
      %1330 = vmatpush1.xpose.msra.mxu0 0.0
      %1331 = vmatprep.subr.mxu0 0.0
      %1332 = vmatpush1.xpose.msra.mxu0 0.0
      %1333 = vmatprep.subr.mxu0 0.0
      %1334 = vmatpush1.xpose.msra.mxu0 0.0
      %1335 = vmatprep.subr.mxu0 0.0
      %1336 = vmatpush1.xpose.msra.mxu0 0.0
      %1337 = vmatprep.subr.mxu0 0.0
      %1338 = vmatpush1.xpose.msra.mxu0 0.0
      %1339 = vmatprep.subr.mxu0 0.0
      %1340 = vmatpush1.xpose.msra.mxu0 0.0
      %1341 = vmatprep.subr.mxu0 0.0
      %1342 = vmatpush1.xpose.msra.mxu0 0.0
      %1343 = vmatprep.subr.mxu0 0.0
      %1344 = vmatpush1.xpose.msra.mxu0 0.0
      %1345 = vmatprep.subr.mxu0 0.0
      %1346 = vmatpush1.xpose.msra.mxu0 0.0
      %1347 = vmatprep.subr.mxu0 0.0
      %1348 = vmatpush1.xpose.msra.mxu0 0.0
      %1349 = vmatprep.subr.mxu0 0.0
      %1350 = vmatpush1.xpose.msra.mxu0 0.0
      %1351 = vmatprep.subr.mxu0 0.0
      %1352 = vmatpush1.xpose.msra.mxu0 0.0
      %1353 = vmatprep.subr.mxu0 0.0
      %1354 = vmatpush1.xpose.msra.mxu0 0.0
      %1355 = vmatprep.subr.mxu0 0.0
      %1356 = vmatpush1.xpose.msra.mxu0 0.0
      %1357 = vmatprep.subr.mxu0 0.0
      %1358 = vmatpush1.xpose.msra.mxu0 0.0
      %1359 = vmatprep.subr.mxu0 0.0
      %1360 = vmatpush1.xpose.msra.mxu0 0.0
      %1361 = vmatprep.subr.mxu0 0.0
      %1362 = vmatpush1.xpose.msra.mxu0 0.0
      %1363 = vmatprep.subr.mxu0 0.0
      %1364 = vmatpush1.xpose.msra.mxu0 0.0
      %1365 = vmatprep.subr.mxu0 0.0
      %1366 = vmatpush1.xpose.msra.mxu0 0.0
      %1367 = vmatprep.subr.mxu0 0.0
      %1368 = vmatpush1.xpose.msra.mxu0 0.0
      %1369 = vmatprep.subr.mxu0 0.0
      %1370 = vmatpush1.xpose.msra.mxu0 0.0
      %1371 = vmatprep.subr.mxu0 0.0
      %1372 = vmatpush1.xpose.msra.mxu0 0.0
      %1373 = vmatprep.subr.mxu0 0.0
      %1374 = vmatpush1.xpose.msra.mxu0 0.0
      %1375 = vmatprep.subr.mxu0 0.0
      %1376 = vmatpush1.xpose.msra.mxu0 0.0
      %1377 = vmatprep.subr.mxu0 0.0
      %1378 = vmatpush1.xpose.msra.mxu0 0.0
      %1379 = vmatprep.subr.mxu0 0.0
      %1380 = vmatpush1.xpose.msra.mxu0 0.0
      %1381 = vmatprep.subr.mxu0 0.0
      %1382 = vmatpush1.xpose.msra.mxu0 0.0
      %1383 = vmatprep.subr.mxu0 0.0
      %1384 = vmatpush1.xpose.msra.mxu0 0.0
      %1385 = vmatprep.mubr.f32.mxu0 0.0
      %1386 = vmatmul.mubr.f32.gmra.mrb[0].mxu0 %v1313
      %v1387 = vpop.f32.mrb[0].mxu0
      %v1388 = vadd.f32 %v406, %v1387
      %v1389 = vpop.f32.mrb[0].mxu0
      %1390 = vmatprep.mubr.f32.mxu0 0.0
      %1391 = vmatmul.mubr.f32.gmra.mrb[0].mxu0 %v1315
      %v1392 = vpop.f32.mrb[0].mxu0
      %v1393 = vadd.f32 %v407, %v1392
      %v1394 = vpop.f32.mrb[0].mxu0
      %1395 = vdwg.mxu0
      %1396 = vrot.lane.b32.xlu0 %v386, 120
      %v1397 = vpop.permute.xlu0 %1396
      %1398 = vrot.lane.b32.xlu0 %v391, 120
      %v1399 = vpop.permute.xlu0 %1398
      %1400 = vrot.lane.b32.xlu0 %v386, 88
      %v1401 = vpop.permute.xlu0 %1400
      %1402 = vrot.lane.b32.xlu0 %v391, 88
      %v1403 = vpop.permute.xlu0 %1402
      %v1404 = vsel %vm418, %v1397, 0
      %v1406 = vsel %vm418, %v1399, 0
      %v1408 = vsel %vm418, %v1401, 0
      %v1410 = vsel %vm418, %v1403, 0
      %1412 = vmatprep.subr.mxu0 0.0
      %1413 = vmatpush1.xpose.msra.mxu0 %v1408
      %1414 = vmatprep.subr.mxu0 0.0
      %1415 = vmatpush1.xpose.msra.mxu0 %v1410
      %1416 = vmatprep.subr.mxu0 0.0
      %1417 = vmatpush1.xpose.msra.mxu0 0.0
      %1418 = vmatprep.subr.mxu0 0.0
      %1419 = vmatpush1.xpose.msra.mxu0 0.0
      %1420 = vmatprep.subr.mxu0 0.0
      %1421 = vmatpush1.xpose.msra.mxu0 0.0
      %1422 = vmatprep.subr.mxu0 0.0
      %1423 = vmatpush1.xpose.msra.mxu0 0.0
      %1424 = vmatprep.subr.mxu0 0.0
      %1425 = vmatpush1.xpose.msra.mxu0 0.0
      %1426 = vmatprep.subr.mxu0 0.0
      %1427 = vmatpush1.xpose.msra.mxu0 0.0
      %1428 = vmatprep.subr.mxu0 0.0
      %1429 = vmatpush1.xpose.msra.mxu0 0.0
      %1430 = vmatprep.subr.mxu0 0.0
      %1431 = vmatpush1.xpose.msra.mxu0 0.0
      %1432 = vmatprep.subr.mxu0 0.0
      %1433 = vmatpush1.xpose.msra.mxu0 0.0
      %1434 = vmatprep.subr.mxu0 0.0
      %1435 = vmatpush1.xpose.msra.mxu0 0.0
      %1436 = vmatprep.subr.mxu0 0.0
      %1437 = vmatpush1.xpose.msra.mxu0 0.0
      %1438 = vmatprep.subr.mxu0 0.0
      %1439 = vmatpush1.xpose.msra.mxu0 0.0
      %1440 = vmatprep.subr.mxu0 0.0
      %1441 = vmatpush1.xpose.msra.mxu0 0.0
      %1442 = vmatprep.subr.mxu0 0.0
      %1443 = vmatpush1.xpose.msra.mxu0 0.0
      %1444 = vmatprep.subr.mxu0 0.0
      %1445 = vmatpush1.xpose.msra.mxu0 0.0
      %1446 = vmatprep.subr.mxu0 0.0
      %1447 = vmatpush1.xpose.msra.mxu0 0.0
      %1448 = vmatprep.subr.mxu0 0.0
      %1449 = vmatpush1.xpose.msra.mxu0 0.0
      %1450 = vmatprep.subr.mxu0 0.0
      %1451 = vmatpush1.xpose.msra.mxu0 0.0
      %1452 = vmatprep.subr.mxu0 0.0
      %1453 = vmatpush1.xpose.msra.mxu0 0.0
      %1454 = vmatprep.subr.mxu0 0.0
      %1455 = vmatpush1.xpose.msra.mxu0 0.0
      %1456 = vmatprep.subr.mxu0 0.0
      %1457 = vmatpush1.xpose.msra.mxu0 0.0
      %1458 = vmatprep.subr.mxu0 0.0
      %1459 = vmatpush1.xpose.msra.mxu0 0.0
      %1460 = vmatprep.subr.mxu0 0.0
      %1461 = vmatpush1.xpose.msra.mxu0 0.0
      %1462 = vmatprep.subr.mxu0 0.0
      %1463 = vmatpush1.xpose.msra.mxu0 0.0
      %1464 = vmatprep.subr.mxu0 0.0
      %1465 = vmatpush1.xpose.msra.mxu0 0.0
      %1466 = vmatprep.subr.mxu0 0.0
      %1467 = vmatpush1.xpose.msra.mxu0 0.0
      %1468 = vmatprep.subr.mxu0 0.0
      %1469 = vmatpush1.xpose.msra.mxu0 0.0
      %1470 = vmatprep.subr.mxu0 0.0
      %1471 = vmatpush1.xpose.msra.mxu0 0.0
      %1472 = vmatprep.subr.mxu0 0.0
      %1473 = vmatpush1.xpose.msra.mxu0 0.0
      %1474 = vmatprep.subr.mxu0 0.0
      %1475 = vmatpush1.xpose.msra.mxu0 0.0
      %1476 = vmatprep.mubr.f32.mxu0 0.0
      %1477 = vmatmul.mubr.f32.gmra.mrb[0].mxu0 %v1404
      %v1478 = vpop.f32.mrb[0].mxu0
      %v1479 = vadd.f32 %v406, %v1478
      %v1480 = vpop.f32.mrb[0].mxu0
      %1481 = vmatprep.mubr.f32.mxu0 0.0
      %1482 = vmatmul.mubr.f32.gmra.mrb[0].mxu0 %v1406
      %v1483 = vpop.f32.mrb[0].mxu0
      %v1484 = vadd.f32 %v407, %v1483
      %v1485 = vpop.f32.mrb[0].mxu0
      %1486 = vdwg.mxu0
      %1487 = vrot.lane.b32.xlu0 %v396, 120
      %v1488 = vpop.permute.xlu0 %1487
      %1489 = vrot.lane.b32.xlu0 %v401, 120
      %v1490 = vpop.permute.xlu0 %1489
      %1491 = vrot.lane.b32.xlu0 %v396, 88
      %v1492 = vpop.permute.xlu0 %1491
      %1493 = vrot.lane.b32.xlu0 %v401, 88
      %v1494 = vpop.permute.xlu0 %1493
      %v1495 = vsel %vm418, %v1488, 0
      %v1497 = vsel %vm418, %v1490, 0
      %v1499 = vsel %vm418, %v1492, 0
      %v1501 = vsel %vm418, %v1494, 0
      %1503 = vmatprep.subr.mxu0 0.0
      %1504 = vmatpush1.xpose.msra.mxu0 %v1499
      %1505 = vmatprep.subr.mxu0 0.0
      %1506 = vmatpush1.xpose.msra.mxu0 %v1501
      %1507 = vmatprep.subr.mxu0 0.0
      %1508 = vmatpush1.xpose.msra.mxu0 0.0
      %1509 = vmatprep.subr.mxu0 0.0
      %1510 = vmatpush1.xpose.msra.mxu0 0.0
      %1511 = vmatprep.subr.mxu0 0.0
      %1512 = vmatpush1.xpose.msra.mxu0 0.0
      %1513 = vmatprep.subr.mxu0 0.0
      %1514 = vmatpush1.xpose.msra.mxu0 0.0
      %1515 = vmatprep.subr.mxu0 0.0
      %1516 = vmatpush1.xpose.msra.mxu0 0.0
      %1517 = vmatprep.subr.mxu0 0.0
      %1518 = vmatpush1.xpose.msra.mxu0 0.0
      %1519 = vmatprep.subr.mxu0 0.0
      %1520 = vmatpush1.xpose.msra.mxu0 0.0
      %1521 = vmatprep.subr.mxu0 0.0
      %1522 = vmatpush1.xpose.msra.mxu0 0.0
      %1523 = vmatprep.subr.mxu0 0.0
      %1524 = vmatpush1.xpose.msra.mxu0 0.0
      %1525 = vmatprep.subr.mxu0 0.0
      %1526 = vmatpush1.xpose.msra.mxu0 0.0
      %1527 = vmatprep.subr.mxu0 0.0
      %1528 = vmatpush1.xpose.msra.mxu0 0.0
      %1529 = vmatprep.subr.mxu0 0.0
      %1530 = vmatpush1.xpose.msra.mxu0 0.0
      %1531 = vmatprep.subr.mxu0 0.0
      %1532 = vmatpush1.xpose.msra.mxu0 0.0
      %1533 = vmatprep.subr.mxu0 0.0
      %1534 = vmatpush1.xpose.msra.mxu0 0.0
      %1535 = vmatprep.subr.mxu0 0.0
      %1536 = vmatpush1.xpose.msra.mxu0 0.0
      %1537 = vmatprep.subr.mxu0 0.0
      %1538 = vmatpush1.xpose.msra.mxu0 0.0
      %1539 = vmatprep.subr.mxu0 0.0
      %1540 = vmatpush1.xpose.msra.mxu0 0.0
      %1541 = vmatprep.subr.mxu0 0.0
      %1542 = vmatpush1.xpose.msra.mxu0 0.0
      %1543 = vmatprep.subr.mxu0 0.0
      %1544 = vmatpush1.xpose.msra.mxu0 0.0
      %1545 = vmatprep.subr.mxu0 0.0
      %1546 = vmatpush1.xpose.msra.mxu0 0.0
      %1547 = vmatprep.subr.mxu0 0.0
      %1548 = vmatpush1.xpose.msra.mxu0 0.0
      %1549 = vmatprep.subr.mxu0 0.0
      %1550 = vmatpush1.xpose.msra.mxu0 0.0
      %1551 = vmatprep.subr.mxu0 0.0
      %1552 = vmatpush1.xpose.msra.mxu0 0.0
      %1553 = vmatprep.subr.mxu0 0.0
      %1554 = vmatpush1.xpose.msra.mxu0 0.0
      %1555 = vmatprep.subr.mxu0 0.0
      %1556 = vmatpush1.xpose.msra.mxu0 0.0
      %1557 = vmatprep.subr.mxu0 0.0
      %1558 = vmatpush1.xpose.msra.mxu0 0.0
      %1559 = vmatprep.subr.mxu0 0.0
      %1560 = vmatpush1.xpose.msra.mxu0 0.0
      %1561 = vmatprep.subr.mxu0 0.0
      %1562 = vmatpush1.xpose.msra.mxu0 0.0
      %1563 = vmatprep.subr.mxu0 0.0
      %1564 = vmatpush1.xpose.msra.mxu0 0.0
      %1565 = vmatprep.subr.mxu0 0.0
      %1566 = vmatpush1.xpose.msra.mxu0 0.0
      %1567 = vmatprep.mubr.f32.mxu0 0.0
      %1568 = vmatmul.mubr.f32.gmra.mrb[0].mxu0 %v1495
      %v1569 = vpop.f32.mrb[0].mxu0
      %v1570 = vadd.f32 %v406, %v1569
      %v1571 = vpop.f32.mrb[0].mxu0
      %1572 = vmatprep.mubr.f32.mxu0 0.0
      %1573 = vmatmul.mubr.f32.gmra.mrb[0].mxu0 %v1497
      %v1574 = vpop.f32.mrb[0].mxu0
      %v1575 = vadd.f32 %v407, %v1574
      %v1576 = vpop.f32.mrb[0].mxu0
      %1577 = vdwg.mxu0
      %v1578 = vsel %vm769, %v1297, -inf
      %1579 = vmax.xlane.f32.xlu0 %v1578
      %v1580 = vpop.xlane.xlu0 %1579
      %v1581 = vsel %vm769, %v1302, -inf
      %1582 = vmax.xlane.f32.xlu0 %v1581
      %v1583 = vpop.xlane.xlu0 %1582
      %v1584 = vsel %vm769, %v1388, -inf
      %1585 = vmax.xlane.f32.xlu0 %v1584
      %v1586 = vpop.xlane.xlu0 %1585
      %v1587 = vsel %vm769, %v1393, -inf
      %1588 = vmax.xlane.f32.xlu0 %v1587
      %v1589 = vpop.xlane.xlu0 %1588
      %v1590 = vsel %vm769, %v1479, -inf
      %1591 = vmax.xlane.f32.xlu0 %v1590
      %v1592 = vpop.xlane.xlu0 %1591
      %v1593 = vsel %vm769, %v1484, -inf
      %1594 = vmax.xlane.f32.xlu0 %v1593
      %v1595 = vpop.xlane.xlu0 %1594
      %v1596 = vsel %vm769, %v1570, -inf
      %1597 = vmax.xlane.f32.xlu0 %v1596
      %v1598 = vpop.xlane.xlu0 %1597
      %v1599 = vsel %vm769, %v1575, -inf
      %1600 = vmax.xlane.f32.xlu0 %v1599
      %v1601 = vpop.xlane.xlu0 %1600
      %v1602 = vsub.f32 %v1297, %v1580
      %v1603 = vsub.f32 %v1302, %v1583
      %v1604 = vsub.f32 %v1388, %v1586
      %v1605 = vsub.f32 %v1393, %v1589
      %v1606 = vsub.f32 %v1479, %v1592
      %v1607 = vsub.f32 %v1484, %v1595
      %v1608 = vsub.f32 %v1570, %v1598
      %v1609 = vsub.f32 %v1575, %v1601
      %v1610 = vmul.f32 %v1602, 1.442695
      %v1611 = vpow.pop %v1610
      %v1612 = vmul.f32 %v1603, 1.442695
      %v1613 = vpow.pop %v1612
      %v1614 = vmul.f32 %v1604, 1.442695
      %v1615 = vpow.pop %v1614
      %v1616 = vmul.f32 %v1605, 1.442695
      %v1617 = vpow.pop %v1616
      %v1618 = vmul.f32 %v1606, 1.442695
      %v1619 = vpow.pop %v1618
      %v1620 = vmul.f32 %v1607, 1.442695
      %v1621 = vpow.pop %v1620
      %v1622 = vmul.f32 %v1608, 1.442695
      %v1623 = vpow.pop %v1622
      %v1624 = vmul.f32 %v1609, 1.442695
      %v1625 = vpow.pop %v1624
      %v1626 = vsel %vm769, %v1611, 0.0
      %1627 = vadd.xlane.f32.xlu0 %v1626
      %v1628 = vpop.xlane.xlu0 %1627
      %v1629 = vsel %vm769, %v1613, 0.0
      %1630 = vadd.xlane.f32.xlu0 %v1629
      %v1631 = vpop.xlane.xlu0 %1630
      %v1632 = vsel %vm769, %v1615, 0.0
      %1633 = vadd.xlane.f32.xlu0 %v1632
      %v1634 = vpop.xlane.xlu0 %1633
      %v1635 = vsel %vm769, %v1617, 0.0
      %1636 = vadd.xlane.f32.xlu0 %v1635
      %v1637 = vpop.xlane.xlu0 %1636
      %v1638 = vsel %vm769, %v1619, 0.0
      %1639 = vadd.xlane.f32.xlu0 %v1638
      %v1640 = vpop.xlane.xlu0 %1639
      %v1641 = vsel %vm769, %v1621, 0.0
      %1642 = vadd.xlane.f32.xlu0 %v1641
      %v1643 = vpop.xlane.xlu0 %1642
      %v1644 = vsel %vm769, %v1623, 0.0
      %1645 = vadd.xlane.f32.xlu0 %v1644
      %v1646 = vpop.xlane.xlu0 %1645
      %v1647 = vsel %vm769, %v1625, 0.0
      %1648 = vadd.xlane.f32.xlu0 %v1647
      %v1649 = vpop.xlane.xlu0 %1648
      %v1650 = vrcp.pop %v1628
      %v1651 = vrcp.pop %v1631
      %v1652 = vrcp.pop %v1634
      %v1653 = vrcp.pop %v1637
      %v1654 = vrcp.pop %v1640
      %v1655 = vrcp.pop %v1643
      %v1656 = vrcp.pop %v1646
      %v1657 = vrcp.pop %v1649
      %v1658 = vmul.f32 %v1611, %v1650
      %v1659 = vmul.f32 %v1613, %v1651
      %v1660 = vmul.f32 %v1615, %v1652
      %v1661 = vmul.f32 %v1617, %v1653
      %v1662 = vmul.f32 %v1619, %v1654
      %v1663 = vmul.f32 %v1621, %v1655
      %v1664 = vmul.f32 %v1623, %v1656
      %v1665 = vmul.f32 %v1625, %v1657
      %1666 = vrot.lane.b32.xlu0 %v366, 56
      %v1667 = vpop.permute.xlu0 %1666
      %1668 = vrot.lane.b32.xlu0 %v371, 56
      %v1669 = vpop.permute.xlu0 %1668
      %v1673 = vsel %vm769, %v1658, 0
      %v1676 = vsel %vm769, %v1659, 0
      %1678 = vmatprep.subr.mxu0 0.0
      %1679 = vmatpush1.msra.mxu0 %v1667
      %1680 = vmatprep.subr.mxu0 0.0
      %1681 = vmatpush1.msra.mxu0 %v1669
      %1682 = vmatprep.subr.mxu0 0.0
      %1683 = vmatpush1.msra.mxu0 0.0
      %1684 = vmatprep.subr.mxu0 0.0
      %1685 = vmatpush1.msra.mxu0 0.0
      %1686 = vmatprep.subr.mxu0 0.0
      %1687 = vmatpush1.msra.mxu0 0.0
      %1688 = vmatprep.subr.mxu0 0.0
      %1689 = vmatpush1.msra.mxu0 0.0
      %1690 = vmatprep.subr.mxu0 0.0
      %1691 = vmatpush1.msra.mxu0 0.0
      %1692 = vmatprep.subr.mxu0 0.0
      %1693 = vmatpush1.msra.mxu0 0.0
      %1694 = vmatprep.subr.mxu0 0.0
      %1695 = vmatpush1.msra.mxu0 0.0
      %1696 = vmatprep.subr.mxu0 0.0
      %1697 = vmatpush1.msra.mxu0 0.0
      %1698 = vmatprep.subr.mxu0 0.0
      %1699 = vmatpush1.msra.mxu0 0.0
      %1700 = vmatprep.subr.mxu0 0.0
      %1701 = vmatpush1.msra.mxu0 0.0
      %1702 = vmatprep.subr.mxu0 0.0
      %1703 = vmatpush1.msra.mxu0 0.0
      %1704 = vmatprep.subr.mxu0 0.0
      %1705 = vmatpush1.msra.mxu0 0.0
      %1706 = vmatprep.subr.mxu0 0.0
      %1707 = vmatpush1.msra.mxu0 0.0
      %1708 = vmatprep.subr.mxu0 0.0
      %1709 = vmatpush1.msra.mxu0 0.0
      %1710 = vmatprep.subr.mxu0 0.0
      %1711 = vmatpush1.msra.mxu0 0.0
      %1712 = vmatprep.subr.mxu0 0.0
      %1713 = vmatpush1.msra.mxu0 0.0
      %1714 = vmatprep.subr.mxu0 0.0
      %1715 = vmatpush1.msra.mxu0 0.0
      %1716 = vmatprep.subr.mxu0 0.0
      %1717 = vmatpush1.msra.mxu0 0.0
      %1718 = vmatprep.subr.mxu0 0.0
      %1719 = vmatpush1.msra.mxu0 0.0
      %1720 = vmatprep.subr.mxu0 0.0
      %1721 = vmatpush1.msra.mxu0 0.0
      %1722 = vmatprep.subr.mxu0 0.0
      %1723 = vmatpush1.msra.mxu0 0.0
      %1724 = vmatprep.subr.mxu0 0.0
      %1725 = vmatpush1.msra.mxu0 0.0
      %1726 = vmatprep.subr.mxu0 0.0
      %1727 = vmatpush1.msra.mxu0 0.0
      %1728 = vmatprep.subr.mxu0 0.0
      %1729 = vmatpush1.msra.mxu0 0.0
      %1730 = vmatprep.subr.mxu0 0.0
      %1731 = vmatpush1.msra.mxu0 0.0
      %1732 = vmatprep.subr.mxu0 0.0
      %1733 = vmatpush1.msra.mxu0 0.0
      %1734 = vmatprep.subr.mxu0 0.0
      %1735 = vmatpush1.msra.mxu0 0.0
      %1736 = vmatprep.subr.mxu0 0.0
      %1737 = vmatpush1.msra.mxu0 0.0
      %1738 = vmatprep.subr.mxu0 0.0
      %1739 = vmatpush1.msra.mxu0 0.0
      %1740 = vmatprep.subr.mxu0 0.0
      %1741 = vmatpush1.msra.mxu0 0.0
      %1742 = vmatprep.mubr.f32.mxu0 0.0
      %1743 = vmatmul.mubr.f32.gmra.mrb[0].mxu0 %v1673
      %v1744 = vpop.f32.mrb[0].mxu0
      %v1745 = vadd.f32 0.0, %v1744
      %v1746 = vpop.f32.mrb[0].mxu0
      %1747 = vmatprep.mubr.f32.mxu0 0.0
      %1748 = vmatmul.mubr.f32.gmra.mrb[0].mxu0 %v1676
      %v1749 = vpop.f32.mrb[0].mxu0
      %v1750 = vadd.f32 0.0, %v1749
      %v1751 = vpop.f32.mrb[0].mxu0
      %1752 = vdwg.mxu0
      %1753 = vrot.lane.b32.xlu0 %v376, 56
      %v1754 = vpop.permute.xlu0 %1753
      %1755 = vrot.lane.b32.xlu0 %v381, 56
      %v1756 = vpop.permute.xlu0 %1755
      %v1760 = vsel %vm769, %v1660, 0
      %v1763 = vsel %vm769, %v1661, 0
      %1765 = vmatprep.subr.mxu0 0.0
      %1766 = vmatpush1.msra.mxu0 %v1754
      %1767 = vmatprep.subr.mxu0 0.0
      %1768 = vmatpush1.msra.mxu0 %v1756
      %1769 = vmatprep.subr.mxu0 0.0
      %1770 = vmatpush1.msra.mxu0 0.0
      %1771 = vmatprep.subr.mxu0 0.0
      %1772 = vmatpush1.msra.mxu0 0.0
      %1773 = vmatprep.subr.mxu0 0.0
      %1774 = vmatpush1.msra.mxu0 0.0
      %1775 = vmatprep.subr.mxu0 0.0
      %1776 = vmatpush1.msra.mxu0 0.0
      %1777 = vmatprep.subr.mxu0 0.0
      %1778 = vmatpush1.msra.mxu0 0.0
      %1779 = vmatprep.subr.mxu0 0.0
      %1780 = vmatpush1.msra.mxu0 0.0
      %1781 = vmatprep.subr.mxu0 0.0
      %1782 = vmatpush1.msra.mxu0 0.0
      %1783 = vmatprep.subr.mxu0 0.0
      %1784 = vmatpush1.msra.mxu0 0.0
      %1785 = vmatprep.subr.mxu0 0.0
      %1786 = vmatpush1.msra.mxu0 0.0
      %1787 = vmatprep.subr.mxu0 0.0
      %1788 = vmatpush1.msra.mxu0 0.0
      %1789 = vmatprep.subr.mxu0 0.0
      %1790 = vmatpush1.msra.mxu0 0.0
      %1791 = vmatprep.subr.mxu0 0.0
      %1792 = vmatpush1.msra.mxu0 0.0
      %1793 = vmatprep.subr.mxu0 0.0
      %1794 = vmatpush1.msra.mxu0 0.0
      %1795 = vmatprep.subr.mxu0 0.0
      %1796 = vmatpush1.msra.mxu0 0.0
      %1797 = vmatprep.subr.mxu0 0.0
      %1798 = vmatpush1.msra.mxu0 0.0
      %1799 = vmatprep.subr.mxu0 0.0
      %1800 = vmatpush1.msra.mxu0 0.0
      %1801 = vmatprep.subr.mxu0 0.0
      %1802 = vmatpush1.msra.mxu0 0.0
      %1803 = vmatprep.subr.mxu0 0.0
      %1804 = vmatpush1.msra.mxu0 0.0
      %1805 = vmatprep.subr.mxu0 0.0
      %1806 = vmatpush1.msra.mxu0 0.0
      %1807 = vmatprep.subr.mxu0 0.0
      %1808 = vmatpush1.msra.mxu0 0.0
      %1809 = vmatprep.subr.mxu0 0.0
      %1810 = vmatpush1.msra.mxu0 0.0
      %1811 = vmatprep.subr.mxu0 0.0
      %1812 = vmatpush1.msra.mxu0 0.0
      %1813 = vmatprep.subr.mxu0 0.0
      %1814 = vmatpush1.msra.mxu0 0.0
      %1815 = vmatprep.subr.mxu0 0.0
      %1816 = vmatpush1.msra.mxu0 0.0
      %1817 = vmatprep.subr.mxu0 0.0
      %1818 = vmatpush1.msra.mxu0 0.0
      %1819 = vmatprep.subr.mxu0 0.0
      %1820 = vmatpush1.msra.mxu0 0.0
      %1821 = vmatprep.subr.mxu0 0.0
      %1822 = vmatpush1.msra.mxu0 0.0
      %1823 = vmatprep.subr.mxu0 0.0
      %1824 = vmatpush1.msra.mxu0 0.0
      %1825 = vmatprep.subr.mxu0 0.0
      %1826 = vmatpush1.msra.mxu0 0.0
      %1827 = vmatprep.subr.mxu0 0.0
      %1828 = vmatpush1.msra.mxu0 0.0
      %1829 = vmatprep.mubr.f32.mxu0 0.0
      %1830 = vmatmul.mubr.f32.gmra.mrb[0].mxu0 %v1760
      %v1831 = vpop.f32.mrb[0].mxu0
      %v1832 = vadd.f32 0.0, %v1831
      %v1833 = vpop.f32.mrb[0].mxu0
      %1834 = vmatprep.mubr.f32.mxu0 0.0
      %1835 = vmatmul.mubr.f32.gmra.mrb[0].mxu0 %v1763
      %v1836 = vpop.f32.mrb[0].mxu0
      %v1837 = vadd.f32 0.0, %v1836
      %v1838 = vpop.f32.mrb[0].mxu0
      %1839 = vdwg.mxu0
      %1840 = vrot.lane.b32.xlu0 %v386, 56
      %v1841 = vpop.permute.xlu0 %1840
      %1842 = vrot.lane.b32.xlu0 %v391, 56
      %v1843 = vpop.permute.xlu0 %1842
      %v1847 = vsel %vm769, %v1662, 0
      %v1850 = vsel %vm769, %v1663, 0
      %1852 = vmatprep.subr.mxu0 0.0
      %1853 = vmatpush1.msra.mxu0 %v1841
      %1854 = vmatprep.subr.mxu0 0.0
      %1855 = vmatpush1.msra.mxu0 %v1843
      %1856 = vmatprep.subr.mxu0 0.0
      %1857 = vmatpush1.msra.mxu0 0.0
      %1858 = vmatprep.subr.mxu0 0.0
      %1859 = vmatpush1.msra.mxu0 0.0
      %1860 = vmatprep.subr.mxu0 0.0
      %1861 = vmatpush1.msra.mxu0 0.0
      %1862 = vmatprep.subr.mxu0 0.0
      %1863 = vmatpush1.msra.mxu0 0.0
      %1864 = vmatprep.subr.mxu0 0.0
      %1865 = vmatpush1.msra.mxu0 0.0
      %1866 = vmatprep.subr.mxu0 0.0
      %1867 = vmatpush1.msra.mxu0 0.0
      %1868 = vmatprep.subr.mxu0 0.0
      %1869 = vmatpush1.msra.mxu0 0.0
      %1870 = vmatprep.subr.mxu0 0.0
      %1871 = vmatpush1.msra.mxu0 0.0
      %1872 = vmatprep.subr.mxu0 0.0
      %1873 = vmatpush1.msra.mxu0 0.0
      %1874 = vmatprep.subr.mxu0 0.0
      %1875 = vmatpush1.msra.mxu0 0.0
      %1876 = vmatprep.subr.mxu0 0.0
      %1877 = vmatpush1.msra.mxu0 0.0
      %1878 = vmatprep.subr.mxu0 0.0
      %1879 = vmatpush1.msra.mxu0 0.0
      %1880 = vmatprep.subr.mxu0 0.0
      %1881 = vmatpush1.msra.mxu0 0.0
      %1882 = vmatprep.subr.mxu0 0.0
      %1883 = vmatpush1.msra.mxu0 0.0
      %1884 = vmatprep.subr.mxu0 0.0
      %1885 = vmatpush1.msra.mxu0 0.0
      %1886 = vmatprep.subr.mxu0 0.0
      %1887 = vmatpush1.msra.mxu0 0.0
      %1888 = vmatprep.subr.mxu0 0.0
      %1889 = vmatpush1.msra.mxu0 0.0
      %1890 = vmatprep.subr.mxu0 0.0
      %1891 = vmatpush1.msra.mxu0 0.0
      %1892 = vmatprep.subr.mxu0 0.0
      %1893 = vmatpush1.msra.mxu0 0.0
      %1894 = vmatprep.subr.mxu0 0.0
      %1895 = vmatpush1.msra.mxu0 0.0
      %1896 = vmatprep.subr.mxu0 0.0
      %1897 = vmatpush1.msra.mxu0 0.0
      %1898 = vmatprep.subr.mxu0 0.0
      %1899 = vmatpush1.msra.mxu0 0.0
      %1900 = vmatprep.subr.mxu0 0.0
      %1901 = vmatpush1.msra.mxu0 0.0
      %1902 = vmatprep.subr.mxu0 0.0
      %1903 = vmatpush1.msra.mxu0 0.0
      %1904 = vmatprep.subr.mxu0 0.0
      %1905 = vmatpush1.msra.mxu0 0.0
      %1906 = vmatprep.subr.mxu0 0.0
      %1907 = vmatpush1.msra.mxu0 0.0
      %1908 = vmatprep.subr.mxu0 0.0
      %1909 = vmatpush1.msra.mxu0 0.0
      %1910 = vmatprep.subr.mxu0 0.0
      %1911 = vmatpush1.msra.mxu0 0.0
      %1912 = vmatprep.subr.mxu0 0.0
      %1913 = vmatpush1.msra.mxu0 0.0
      %1914 = vmatprep.subr.mxu0 0.0
      %1915 = vmatpush1.msra.mxu0 0.0
      %1916 = vmatprep.mubr.f32.mxu0 0.0
      %1917 = vmatmul.mubr.f32.gmra.mrb[0].mxu0 %v1847
      %v1918 = vpop.f32.mrb[0].mxu0
      %v1919 = vadd.f32 0.0, %v1918
      %v1920 = vpop.f32.mrb[0].mxu0
      %1921 = vmatprep.mubr.f32.mxu0 0.0
      %1922 = vmatmul.mubr.f32.gmra.mrb[0].mxu0 %v1850
      %v1923 = vpop.f32.mrb[0].mxu0
      %v1924 = vadd.f32 0.0, %v1923
      %v1925 = vpop.f32.mrb[0].mxu0
      %1926 = vdwg.mxu0
      %1927 = vrot.lane.b32.xlu0 %v396, 56
      %v1928 = vpop.permute.xlu0 %1927
      %1929 = vrot.lane.b32.xlu0 %v401, 56
      %v1930 = vpop.permute.xlu0 %1929
      %v1934 = vsel %vm769, %v1664, 0
      %v1937 = vsel %vm769, %v1665, 0
      %1939 = vmatprep.subr.mxu0 0.0
      %1940 = vmatpush1.msra.mxu0 %v1928
      %1941 = vmatprep.subr.mxu0 0.0
      %1942 = vmatpush1.msra.mxu0 %v1930
      %1943 = vmatprep.subr.mxu0 0.0
      %1944 = vmatpush1.msra.mxu0 0.0
      %1945 = vmatprep.subr.mxu0 0.0
      %1946 = vmatpush1.msra.mxu0 0.0
      %1947 = vmatprep.subr.mxu0 0.0
      %1948 = vmatpush1.msra.mxu0 0.0
      %1949 = vmatprep.subr.mxu0 0.0
      %1950 = vmatpush1.msra.mxu0 0.0
      %1951 = vmatprep.subr.mxu0 0.0
      %1952 = vmatpush1.msra.mxu0 0.0
      %1953 = vmatprep.subr.mxu0 0.0
      %1954 = vmatpush1.msra.mxu0 0.0
      %1955 = vmatprep.subr.mxu0 0.0
      %1956 = vmatpush1.msra.mxu0 0.0
      %1957 = vmatprep.subr.mxu0 0.0
      %1958 = vmatpush1.msra.mxu0 0.0
      %1959 = vmatprep.subr.mxu0 0.0
      %1960 = vmatpush1.msra.mxu0 0.0
      %1961 = vmatprep.subr.mxu0 0.0
      %1962 = vmatpush1.msra.mxu0 0.0
      %1963 = vmatprep.subr.mxu0 0.0
      %1964 = vmatpush1.msra.mxu0 0.0
      %1965 = vmatprep.subr.mxu0 0.0
      %1966 = vmatpush1.msra.mxu0 0.0
      %1967 = vmatprep.subr.mxu0 0.0
      %1968 = vmatpush1.msra.mxu0 0.0
      %1969 = vmatprep.subr.mxu0 0.0
      %1970 = vmatpush1.msra.mxu0 0.0
      %1971 = vmatprep.subr.mxu0 0.0
      %1972 = vmatpush1.msra.mxu0 0.0
      %1973 = vmatprep.subr.mxu0 0.0
      %1974 = vmatpush1.msra.mxu0 0.0
      %1975 = vmatprep.subr.mxu0 0.0
      %1976 = vmatpush1.msra.mxu0 0.0
      %1977 = vmatprep.subr.mxu0 0.0
      %1978 = vmatpush1.msra.mxu0 0.0
      %1979 = vmatprep.subr.mxu0 0.0
      %1980 = vmatpush1.msra.mxu0 0.0
      %1981 = vmatprep.subr.mxu0 0.0
      %1982 = vmatpush1.msra.mxu0 0.0
      %1983 = vmatprep.subr.mxu0 0.0
      %1984 = vmatpush1.msra.mxu0 0.0
      %1985 = vmatprep.subr.mxu0 0.0
      %1986 = vmatpush1.msra.mxu0 0.0
      %1987 = vmatprep.subr.mxu0 0.0
      %1988 = vmatpush1.msra.mxu0 0.0
      %1989 = vmatprep.subr.mxu0 0.0
      %1990 = vmatpush1.msra.mxu0 0.0
      %1991 = vmatprep.subr.mxu0 0.0
      %1992 = vmatpush1.msra.mxu0 0.0
      %1993 = vmatprep.subr.mxu0 0.0
      %1994 = vmatpush1.msra.mxu0 0.0
      %1995 = vmatprep.subr.mxu0 0.0
      %1996 = vmatpush1.msra.mxu0 0.0
      %1997 = vmatprep.subr.mxu0 0.0
      %1998 = vmatpush1.msra.mxu0 0.0
      %1999 = vmatprep.subr.mxu0 0.0
      %2000 = vmatpush1.msra.mxu0 0.0
      %2001 = vmatprep.subr.mxu0 0.0
      %2002 = vmatpush1.msra.mxu0 0.0
      %2003 = vmatprep.mubr.f32.mxu0 0.0
      %2004 = vmatmul.mubr.f32.gmra.mrb[0].mxu0 %v1934
      %v2005 = vpop.f32.mrb[0].mxu0
      %v2006 = vadd.f32 0.0, %v2005
      %v2007 = vpop.f32.mrb[0].mxu0
      %2008 = vmatprep.mubr.f32.mxu0 0.0
      %2009 = vmatmul.mubr.f32.gmra.mrb[0].mxu0 %v1937
      %v2010 = vpop.f32.mrb[0].mxu0
      %v2011 = vadd.f32 0.0, %v2010
      %v2012 = vpop.f32.mrb[0].mxu0
      %2013 = vdwg.mxu0
      %2022 = vrot.lane.b32.xlu0 %v1745, 8
      %v2023 = vpop.permute.xlu0 %2022
      %2024 = vrot.lane.b32.xlu0 %v1750, 8
      %v2025 = vpop.permute.xlu0 %2024
      %2026 = vrot.lane.b32.xlu0 %v1832, 8
      %v2027 = vpop.permute.xlu0 %2026
      %2028 = vrot.lane.b32.xlu0 %v1837, 8
      %v2029 = vpop.permute.xlu0 %2028
      %2030 = vrot.lane.b32.xlu0 %v1919, 8
      %v2031 = vpop.permute.xlu0 %2030
      %2032 = vrot.lane.b32.xlu0 %v1924, 8
      %v2033 = vpop.permute.xlu0 %2032
      %2034 = vrot.lane.b32.xlu0 %v2006, 8
      %v2035 = vpop.permute.xlu0 %2034
      %2036 = vrot.lane.b32.xlu0 %v2011, 8
      %v2037 = vpop.permute.xlu0 %2036
      %vm2046 = vcmask 130112
      %2047 = vst.msk [vmem:[#allocation2] sm:$0xff] %vm2046, %v2023
      %2048 = vst.msk [vmem:[#allocation2 + $0x8] sm:$0xff] %vm2046, %v2025
      %2049 = vst.msk [vmem:[#allocation2 + $0x10] sm:$0xff] %vm2046, %v2027
      %2050 = vst.msk [vmem:[#allocation2 + $0x18] sm:$0xff] %vm2046, %v2029
      %2051 = vst.msk [vmem:[#allocation2 + $0x20] sm:$0xff] %vm2046, %v2031
      %2052 = vst.msk [vmem:[#allocation2 + $0x28] sm:$0xff] %vm2046, %v2033
      %2053 = vst.msk [vmem:[#allocation2 + $0x30] sm:$0xff] %vm2046, %v2035
      %2054 = vst.msk [vmem:[#allocation2 + $0x38] sm:$0xff] %vm2046, %v2037
      %2055 = vrot.lane.b32.xlu0 %v366, 112
      %v2056 = vpop.permute.xlu0 %2055
      %2057 = vrot.lane.b32.xlu0 %v371, 112
      %v2058 = vpop.permute.xlu0 %2057
      %2059 = vrot.lane.b32.xlu0 %v366, 80
      %v2060 = vpop.permute.xlu0 %2059
      %2061 = vrot.lane.b32.xlu0 %v371, 80
      %v2062 = vpop.permute.xlu0 %2061
      %v2063 = vsel %vm418, %v2056, 0
      %v2065 = vsel %vm418, %v2058, 0
      %v2067 = vsel %vm418, %v2060, 0
      %v2069 = vsel %vm418, %v2062, 0
      %2071 = vmatprep.subr.mxu0 0.0
      %2072 = vmatpush1.xpose.msra.mxu0 %v2067
      %2073 = vmatprep.subr.mxu0 0.0
      %2074 = vmatpush1.xpose.msra.mxu0 %v2069
      %2075 = vmatprep.subr.mxu0 0.0
      %2076 = vmatpush1.xpose.msra.mxu0 0.0
      %2077 = vmatprep.subr.mxu0 0.0
      %2078 = vmatpush1.xpose.msra.mxu0 0.0
      %2079 = vmatprep.subr.mxu0 0.0
      %2080 = vmatpush1.xpose.msra.mxu0 0.0
      %2081 = vmatprep.subr.mxu0 0.0
      %2082 = vmatpush1.xpose.msra.mxu0 0.0
      %2083 = vmatprep.subr.mxu0 0.0
      %2084 = vmatpush1.xpose.msra.mxu0 0.0
      %2085 = vmatprep.subr.mxu0 0.0
      %2086 = vmatpush1.xpose.msra.mxu0 0.0
      %2087 = vmatprep.subr.mxu0 0.0
      %2088 = vmatpush1.xpose.msra.mxu0 0.0
      %2089 = vmatprep.subr.mxu0 0.0
      %2090 = vmatpush1.xpose.msra.mxu0 0.0
      %2091 = vmatprep.subr.mxu0 0.0
      %2092 = vmatpush1.xpose.msra.mxu0 0.0
      %2093 = vmatprep.subr.mxu0 0.0
      %2094 = vmatpush1.xpose.msra.mxu0 0.0
      %2095 = vmatprep.subr.mxu0 0.0
      %2096 = vmatpush1.xpose.msra.mxu0 0.0
      %2097 = vmatprep.subr.mxu0 0.0
      %2098 = vmatpush1.xpose.msra.mxu0 0.0
      %2099 = vmatprep.subr.mxu0 0.0
      %2100 = vmatpush1.xpose.msra.mxu0 0.0
      %2101 = vmatprep.subr.mxu0 0.0
      %2102 = vmatpush1.xpose.msra.mxu0 0.0
      %2103 = vmatprep.subr.mxu0 0.0
      %2104 = vmatpush1.xpose.msra.mxu0 0.0
      %2105 = vmatprep.subr.mxu0 0.0
      %2106 = vmatpush1.xpose.msra.mxu0 0.0
      %2107 = vmatprep.subr.mxu0 0.0
      %2108 = vmatpush1.xpose.msra.mxu0 0.0
      %2109 = vmatprep.subr.mxu0 0.0
      %2110 = vmatpush1.xpose.msra.mxu0 0.0
      %2111 = vmatprep.subr.mxu0 0.0
      %2112 = vmatpush1.xpose.msra.mxu0 0.0
      %2113 = vmatprep.subr.mxu0 0.0
      %2114 = vmatpush1.xpose.msra.mxu0 0.0
      %2115 = vmatprep.subr.mxu0 0.0
      %2116 = vmatpush1.xpose.msra.mxu0 0.0
      %2117 = vmatprep.subr.mxu0 0.0
      %2118 = vmatpush1.xpose.msra.mxu0 0.0
      %2119 = vmatprep.subr.mxu0 0.0
      %2120 = vmatpush1.xpose.msra.mxu0 0.0
      %2121 = vmatprep.subr.mxu0 0.0
      %2122 = vmatpush1.xpose.msra.mxu0 0.0
      %2123 = vmatprep.subr.mxu0 0.0
      %2124 = vmatpush1.xpose.msra.mxu0 0.0
      %2125 = vmatprep.subr.mxu0 0.0
      %2126 = vmatpush1.xpose.msra.mxu0 0.0
      %2127 = vmatprep.subr.mxu0 0.0
      %2128 = vmatpush1.xpose.msra.mxu0 0.0
      %2129 = vmatprep.subr.mxu0 0.0
      %2130 = vmatpush1.xpose.msra.mxu0 0.0
      %2131 = vmatprep.subr.mxu0 0.0
      %2132 = vmatpush1.xpose.msra.mxu0 0.0
      %2133 = vmatprep.subr.mxu0 0.0
      %2134 = vmatpush1.xpose.msra.mxu0 0.0
      %2135 = vmatprep.mubr.f32.mxu0 0.0
      %2136 = vmatmul.mubr.f32.gmra.mrb[0].mxu0 %v2063
      %v2137 = vpop.f32.mrb[0].mxu0
      %v2138 = vadd.f32 %v408, %v2137
      %v2139 = vpop.f32.mrb[0].mxu0
      %2140 = vmatprep.mubr.f32.mxu0 0.0
      %2141 = vmatmul.mubr.f32.gmra.mrb[0].mxu0 %v2065
      %v2142 = vpop.f32.mrb[0].mxu0
      %v2143 = vadd.f32 %v409, %v2142
      %v2144 = vpop.f32.mrb[0].mxu0
      %2145 = vdwg.mxu0
      %2146 = vrot.lane.b32.xlu0 %v376, 112
      %v2147 = vpop.permute.xlu0 %2146
      %2148 = vrot.lane.b32.xlu0 %v381, 112
      %v2149 = vpop.permute.xlu0 %2148
      %2150 = vrot.lane.b32.xlu0 %v376, 80
      %v2151 = vpop.permute.xlu0 %2150
      %2152 = vrot.lane.b32.xlu0 %v381, 80
      %v2153 = vpop.permute.xlu0 %2152
      %v2154 = vsel %vm418, %v2147, 0
      %v2156 = vsel %vm418, %v2149, 0
      %v2158 = vsel %vm418, %v2151, 0
      %v2160 = vsel %vm418, %v2153, 0
      %2162 = vmatprep.subr.mxu0 0.0
      %2163 = vmatpush1.xpose.msra.mxu0 %v2158
      %2164 = vmatprep.subr.mxu0 0.0
      %2165 = vmatpush1.xpose.msra.mxu0 %v2160
      %2166 = vmatprep.subr.mxu0 0.0
      %2167 = vmatpush1.xpose.msra.mxu0 0.0
      %2168 = vmatprep.subr.mxu0 0.0
      %2169 = vmatpush1.xpose.msra.mxu0 0.0
      %2170 = vmatprep.subr.mxu0 0.0
      %2171 = vmatpush1.xpose.msra.mxu0 0.0
      %2172 = vmatprep.subr.mxu0 0.0
      %2173 = vmatpush1.xpose.msra.mxu0 0.0
      %2174 = vmatprep.subr.mxu0 0.0
      %2175 = vmatpush1.xpose.msra.mxu0 0.0
      %2176 = vmatprep.subr.mxu0 0.0
      %2177 = vmatpush1.xpose.msra.mxu0 0.0
      %2178 = vmatprep.subr.mxu0 0.0
      %2179 = vmatpush1.xpose.msra.mxu0 0.0
      %2180 = vmatprep.subr.mxu0 0.0
      %2181 = vmatpush1.xpose.msra.mxu0 0.0
      %2182 = vmatprep.subr.mxu0 0.0
      %2183 = vmatpush1.xpose.msra.mxu0 0.0
      %2184 = vmatprep.subr.mxu0 0.0
      %2185 = vmatpush1.xpose.msra.mxu0 0.0
      %2186 = vmatprep.subr.mxu0 0.0
      %2187 = vmatpush1.xpose.msra.mxu0 0.0
      %2188 = vmatprep.subr.mxu0 0.0
      %2189 = vmatpush1.xpose.msra.mxu0 0.0
      %2190 = vmatprep.subr.mxu0 0.0
      %2191 = vmatpush1.xpose.msra.mxu0 0.0
      %2192 = vmatprep.subr.mxu0 0.0
      %2193 = vmatpush1.xpose.msra.mxu0 0.0
      %2194 = vmatprep.subr.mxu0 0.0
      %2195 = vmatpush1.xpose.msra.mxu0 0.0
      %2196 = vmatprep.subr.mxu0 0.0
      %2197 = vmatpush1.xpose.msra.mxu0 0.0
      %2198 = vmatprep.subr.mxu0 0.0
      %2199 = vmatpush1.xpose.msra.mxu0 0.0
      %2200 = vmatprep.subr.mxu0 0.0
      %2201 = vmatpush1.xpose.msra.mxu0 0.0
      %2202 = vmatprep.subr.mxu0 0.0
      %2203 = vmatpush1.xpose.msra.mxu0 0.0
      %2204 = vmatprep.subr.mxu0 0.0
      %2205 = vmatpush1.xpose.msra.mxu0 0.0
      %2206 = vmatprep.subr.mxu0 0.0
      %2207 = vmatpush1.xpose.msra.mxu0 0.0
      %2208 = vmatprep.subr.mxu0 0.0
      %2209 = vmatpush1.xpose.msra.mxu0 0.0
      %2210 = vmatprep.subr.mxu0 0.0
      %2211 = vmatpush1.xpose.msra.mxu0 0.0
      %2212 = vmatprep.subr.mxu0 0.0
      %2213 = vmatpush1.xpose.msra.mxu0 0.0
      %2214 = vmatprep.subr.mxu0 0.0
      %2215 = vmatpush1.xpose.msra.mxu0 0.0
      %2216 = vmatprep.subr.mxu0 0.0
      %2217 = vmatpush1.xpose.msra.mxu0 0.0
      %2218 = vmatprep.subr.mxu0 0.0
      %2219 = vmatpush1.xpose.msra.mxu0 0.0
      %2220 = vmatprep.subr.mxu0 0.0
      %2221 = vmatpush1.xpose.msra.mxu0 0.0
      %2222 = vmatprep.subr.mxu0 0.0
      %2223 = vmatpush1.xpose.msra.mxu0 0.0
      %2224 = vmatprep.subr.mxu0 0.0
      %2225 = vmatpush1.xpose.msra.mxu0 0.0
      %2226 = vmatprep.mubr.f32.mxu0 0.0
      %2227 = vmatmul.mubr.f32.gmra.mrb[0].mxu0 %v2154
      %v2228 = vpop.f32.mrb[0].mxu0
      %v2229 = vadd.f32 %v408, %v2228
      %v2230 = vpop.f32.mrb[0].mxu0
      %2231 = vmatprep.mubr.f32.mxu0 0.0
      %2232 = vmatmul.mubr.f32.gmra.mrb[0].mxu0 %v2156
      %v2233 = vpop.f32.mrb[0].mxu0
      %v2234 = vadd.f32 %v409, %v2233
      %v2235 = vpop.f32.mrb[0].mxu0
      %2236 = vdwg.mxu0
      %2237 = vrot.lane.b32.xlu0 %v386, 112
      %v2238 = vpop.permute.xlu0 %2237
      %2239 = vrot.lane.b32.xlu0 %v391, 112
      %v2240 = vpop.permute.xlu0 %2239
      %2241 = vrot.lane.b32.xlu0 %v386, 80
      %v2242 = vpop.permute.xlu0 %2241
      %2243 = vrot.lane.b32.xlu0 %v391, 80
      %v2244 = vpop.permute.xlu0 %2243
      %v2245 = vsel %vm418, %v2238, 0
      %v2247 = vsel %vm418, %v2240, 0
      %v2249 = vsel %vm418, %v2242, 0
      %v2251 = vsel %vm418, %v2244, 0
      %2253 = vmatprep.subr.mxu0 0.0
      %2254 = vmatpush1.xpose.msra.mxu0 %v2249
      %2255 = vmatprep.subr.mxu0 0.0
      %2256 = vmatpush1.xpose.msra.mxu0 %v2251
      %2257 = vmatprep.subr.mxu0 0.0
      %2258 = vmatpush1.xpose.msra.mxu0 0.0
      %2259 = vmatprep.subr.mxu0 0.0
      %2260 = vmatpush1.xpose.msra.mxu0 0.0
      %2261 = vmatprep.subr.mxu0 0.0
      %2262 = vmatpush1.xpose.msra.mxu0 0.0
      %2263 = vmatprep.subr.mxu0 0.0
      %2264 = vmatpush1.xpose.msra.mxu0 0.0
      %2265 = vmatprep.subr.mxu0 0.0
      %2266 = vmatpush1.xpose.msra.mxu0 0.0
      %2267 = vmatprep.subr.mxu0 0.0
      %2268 = vmatpush1.xpose.msra.mxu0 0.0
      %2269 = vmatprep.subr.mxu0 0.0
      %2270 = vmatpush1.xpose.msra.mxu0 0.0
      %2271 = vmatprep.subr.mxu0 0.0
      %2272 = vmatpush1.xpose.msra.mxu0 0.0
      %2273 = vmatprep.subr.mxu0 0.0
      %2274 = vmatpush1.xpose.msra.mxu0 0.0
      %2275 = vmatprep.subr.mxu0 0.0
      %2276 = vmatpush1.xpose.msra.mxu0 0.0
      %2277 = vmatprep.subr.mxu0 0.0
      %2278 = vmatpush1.xpose.msra.mxu0 0.0
      %2279 = vmatprep.subr.mxu0 0.0
      %2280 = vmatpush1.xpose.msra.mxu0 0.0
      %2281 = vmatprep.subr.mxu0 0.0
      %2282 = vmatpush1.xpose.msra.mxu0 0.0
      %2283 = vmatprep.subr.mxu0 0.0
      %2284 = vmatpush1.xpose.msra.mxu0 0.0
      %2285 = vmatprep.subr.mxu0 0.0
      %2286 = vmatpush1.xpose.msra.mxu0 0.0
      %2287 = vmatprep.subr.mxu0 0.0
      %2288 = vmatpush1.xpose.msra.mxu0 0.0
      %2289 = vmatprep.subr.mxu0 0.0
      %2290 = vmatpush1.xpose.msra.mxu0 0.0
      %2291 = vmatprep.subr.mxu0 0.0
      %2292 = vmatpush1.xpose.msra.mxu0 0.0
      %2293 = vmatprep.subr.mxu0 0.0
      %2294 = vmatpush1.xpose.msra.mxu0 0.0
      %2295 = vmatprep.subr.mxu0 0.0
      %2296 = vmatpush1.xpose.msra.mxu0 0.0
      %2297 = vmatprep.subr.mxu0 0.0
      %2298 = vmatpush1.xpose.msra.mxu0 0.0
      %2299 = vmatprep.subr.mxu0 0.0
      %2300 = vmatpush1.xpose.msra.mxu0 0.0
      %2301 = vmatprep.subr.mxu0 0.0
      %2302 = vmatpush1.xpose.msra.mxu0 0.0
      %2303 = vmatprep.subr.mxu0 0.0
      %2304 = vmatpush1.xpose.msra.mxu0 0.0
      %2305 = vmatprep.subr.mxu0 0.0
      %2306 = vmatpush1.xpose.msra.mxu0 0.0
      %2307 = vmatprep.subr.mxu0 0.0
      %2308 = vmatpush1.xpose.msra.mxu0 0.0
      %2309 = vmatprep.subr.mxu0 0.0
      %2310 = vmatpush1.xpose.msra.mxu0 0.0
      %2311 = vmatprep.subr.mxu0 0.0
      %2312 = vmatpush1.xpose.msra.mxu0 0.0
      %2313 = vmatprep.subr.mxu0 0.0
      %2314 = vmatpush1.xpose.msra.mxu0 0.0
      %2315 = vmatprep.subr.mxu0 0.0
      %2316 = vmatpush1.xpose.msra.mxu0 0.0
      %2317 = vmatprep.mubr.f32.mxu0 0.0
      %2318 = vmatmul.mubr.f32.gmra.mrb[0].mxu0 %v2245
      %v2319 = vpop.f32.mrb[0].mxu0
      %v2320 = vadd.f32 %v408, %v2319
      %v2321 = vpop.f32.mrb[0].mxu0
      %2322 = vmatprep.mubr.f32.mxu0 0.0
      %2323 = vmatmul.mubr.f32.gmra.mrb[0].mxu0 %v2247
      %v2324 = vpop.f32.mrb[0].mxu0
      %v2325 = vadd.f32 %v409, %v2324
      %v2326 = vpop.f32.mrb[0].mxu0
      %2327 = vdwg.mxu0
      %2328 = vrot.lane.b32.xlu0 %v396, 112
      %v2329 = vpop.permute.xlu0 %2328
      %2330 = vrot.lane.b32.xlu0 %v401, 112
      %v2331 = vpop.permute.xlu0 %2330
      %2332 = vrot.lane.b32.xlu0 %v396, 80
      %v2333 = vpop.permute.xlu0 %2332
      %2334 = vrot.lane.b32.xlu0 %v401, 80
      %v2335 = vpop.permute.xlu0 %2334
      %v2336 = vsel %vm418, %v2329, 0
      %v2338 = vsel %vm418, %v2331, 0
      %v2340 = vsel %vm418, %v2333, 0
      %v2342 = vsel %vm418, %v2335, 0
      %2344 = vmatprep.subr.mxu0 0.0
      %2345 = vmatpush1.xpose.msra.mxu0 %v2340
      %2346 = vmatprep.subr.mxu0 0.0
      %2347 = vmatpush1.xpose.msra.mxu0 %v2342
      %2348 = vmatprep.subr.mxu0 0.0
      %2349 = vmatpush1.xpose.msra.mxu0 0.0
      %2350 = vmatprep.subr.mxu0 0.0
      %2351 = vmatpush1.xpose.msra.mxu0 0.0
      %2352 = vmatprep.subr.mxu0 0.0
      %2353 = vmatpush1.xpose.msra.mxu0 0.0
      %2354 = vmatprep.subr.mxu0 0.0
      %2355 = vmatpush1.xpose.msra.mxu0 0.0
      %2356 = vmatprep.subr.mxu0 0.0
      %2357 = vmatpush1.xpose.msra.mxu0 0.0
      %2358 = vmatprep.subr.mxu0 0.0
      %2359 = vmatpush1.xpose.msra.mxu0 0.0
      %2360 = vmatprep.subr.mxu0 0.0
      %2361 = vmatpush1.xpose.msra.mxu0 0.0
      %2362 = vmatprep.subr.mxu0 0.0
      %2363 = vmatpush1.xpose.msra.mxu0 0.0
      %2364 = vmatprep.subr.mxu0 0.0
      %2365 = vmatpush1.xpose.msra.mxu0 0.0
      %2366 = vmatprep.subr.mxu0 0.0
      %2367 = vmatpush1.xpose.msra.mxu0 0.0
      %2368 = vmatprep.subr.mxu0 0.0
      %2369 = vmatpush1.xpose.msra.mxu0 0.0
      %2370 = vmatprep.subr.mxu0 0.0
      %2371 = vmatpush1.xpose.msra.mxu0 0.0
      %2372 = vmatprep.subr.mxu0 0.0
      %2373 = vmatpush1.xpose.msra.mxu0 0.0
      %2374 = vmatprep.subr.mxu0 0.0
      %2375 = vmatpush1.xpose.msra.mxu0 0.0
      %2376 = vmatprep.subr.mxu0 0.0
      %2377 = vmatpush1.xpose.msra.mxu0 0.0
      %2378 = vmatprep.subr.mxu0 0.0
      %2379 = vmatpush1.xpose.msra.mxu0 0.0
      %2380 = vmatprep.subr.mxu0 0.0
      %2381 = vmatpush1.xpose.msra.mxu0 0.0
      %2382 = vmatprep.subr.mxu0 0.0
      %2383 = vmatpush1.xpose.msra.mxu0 0.0
      %2384 = vmatprep.subr.mxu0 0.0
      %2385 = vmatpush1.xpose.msra.mxu0 0.0
      %2386 = vmatprep.subr.mxu0 0.0
      %2387 = vmatpush1.xpose.msra.mxu0 0.0
      %2388 = vmatprep.subr.mxu0 0.0
      %2389 = vmatpush1.xpose.msra.mxu0 0.0
      %2390 = vmatprep.subr.mxu0 0.0
      %2391 = vmatpush1.xpose.msra.mxu0 0.0
      %2392 = vmatprep.subr.mxu0 0.0
      %2393 = vmatpush1.xpose.msra.mxu0 0.0
      %2394 = vmatprep.subr.mxu0 0.0
      %2395 = vmatpush1.xpose.msra.mxu0 0.0
      %2396 = vmatprep.subr.mxu0 0.0
      %2397 = vmatpush1.xpose.msra.mxu0 0.0
      %2398 = vmatprep.subr.mxu0 0.0
      %2399 = vmatpush1.xpose.msra.mxu0 0.0
      %2400 = vmatprep.subr.mxu0 0.0
      %2401 = vmatpush1.xpose.msra.mxu0 0.0
      %2402 = vmatprep.subr.mxu0 0.0
      %2403 = vmatpush1.xpose.msra.mxu0 0.0
      %2404 = vmatprep.subr.mxu0 0.0
      %2405 = vmatpush1.xpose.msra.mxu0 0.0
      %2406 = vmatprep.subr.mxu0 0.0
      %2407 = vmatpush1.xpose.msra.mxu0 0.0
      %2408 = vmatprep.mubr.f32.mxu0 0.0
      %2409 = vmatmul.mubr.f32.gmra.mrb[0].mxu0 %v2336
      %v2410 = vpop.f32.mrb[0].mxu0
      %v2411 = vadd.f32 %v408, %v2410
      %v2412 = vpop.f32.mrb[0].mxu0
      %2413 = vmatprep.mubr.f32.mxu0 0.0
      %2414 = vmatmul.mubr.f32.gmra.mrb[0].mxu0 %v2338
      %v2415 = vpop.f32.mrb[0].mxu0
      %v2416 = vadd.f32 %v409, %v2415
      %v2417 = vpop.f32.mrb[0].mxu0
      %2418 = vdwg.mxu0
      %v2419 = vsel %vm769, %v2138, -inf
      %2420 = vmax.xlane.f32.xlu0 %v2419
      %v2421 = vpop.xlane.xlu0 %2420
      %v2422 = vsel %vm769, %v2143, -inf
      %2423 = vmax.xlane.f32.xlu0 %v2422
      %v2424 = vpop.xlane.xlu0 %2423
      %v2425 = vsel %vm769, %v2229, -inf
      %2426 = vmax.xlane.f32.xlu0 %v2425
      %v2427 = vpop.xlane.xlu0 %2426
      %v2428 = vsel %vm769, %v2234, -inf
      %2429 = vmax.xlane.f32.xlu0 %v2428
      %v2430 = vpop.xlane.xlu0 %2429
      %v2431 = vsel %vm769, %v2320, -inf
      %2432 = vmax.xlane.f32.xlu0 %v2431
      %v2433 = vpop.xlane.xlu0 %2432
      %v2434 = vsel %vm769, %v2325, -inf
      %2435 = vmax.xlane.f32.xlu0 %v2434
      %v2436 = vpop.xlane.xlu0 %2435
      %v2437 = vsel %vm769, %v2411, -inf
      %2438 = vmax.xlane.f32.xlu0 %v2437
      %v2439 = vpop.xlane.xlu0 %2438
      %v2440 = vsel %vm769, %v2416, -inf
      %2441 = vmax.xlane.f32.xlu0 %v2440
      %v2442 = vpop.xlane.xlu0 %2441
      %v2443 = vsub.f32 %v2138, %v2421
      %v2444 = vsub.f32 %v2143, %v2424
      %v2445 = vsub.f32 %v2229, %v2427
      %v2446 = vsub.f32 %v2234, %v2430
      %v2447 = vsub.f32 %v2320, %v2433
      %v2448 = vsub.f32 %v2325, %v2436
      %v2449 = vsub.f32 %v2411, %v2439
      %v2450 = vsub.f32 %v2416, %v2442
      %v2451 = vmul.f32 %v2443, 1.442695
      %v2452 = vpow.pop %v2451
      %v2453 = vmul.f32 %v2444, 1.442695
      %v2454 = vpow.pop %v2453
      %v2455 = vmul.f32 %v2445, 1.442695
      %v2456 = vpow.pop %v2455
      %v2457 = vmul.f32 %v2446, 1.442695
      %v2458 = vpow.pop %v2457
      %v2459 = vmul.f32 %v2447, 1.442695
      %v2460 = vpow.pop %v2459
      %v2461 = vmul.f32 %v2448, 1.442695
      %v2462 = vpow.pop %v2461
      %v2463 = vmul.f32 %v2449, 1.442695
      %v2464 = vpow.pop %v2463
      %v2465 = vmul.f32 %v2450, 1.442695
      %v2466 = vpow.pop %v2465
      %v2467 = vsel %vm769, %v2452, 0.0
      %2468 = vadd.xlane.f32.xlu0 %v2467
      %v2469 = vpop.xlane.xlu0 %2468
      %v2470 = vsel %vm769, %v2454, 0.0
      %2471 = vadd.xlane.f32.xlu0 %v2470
      %v2472 = vpop.xlane.xlu0 %2471
      %v2473 = vsel %vm769, %v2456, 0.0
      %2474 = vadd.xlane.f32.xlu0 %v2473
      %v2475 = vpop.xlane.xlu0 %2474
      %v2476 = vsel %vm769, %v2458, 0.0
      %2477 = vadd.xlane.f32.xlu0 %v2476
      %v2478 = vpop.xlane.xlu0 %2477
      %v2479 = vsel %vm769, %v2460, 0.0
      %2480 = vadd.xlane.f32.xlu0 %v2479
      %v2481 = vpop.xlane.xlu0 %2480
      %v2482 = vsel %vm769, %v2462, 0.0
      %2483 = vadd.xlane.f32.xlu0 %v2482
      %v2484 = vpop.xlane.xlu0 %2483
      %v2485 = vsel %vm769, %v2464, 0.0
      %2486 = vadd.xlane.f32.xlu0 %v2485
      %v2487 = vpop.xlane.xlu0 %2486
      %v2488 = vsel %vm769, %v2466, 0.0
      %2489 = vadd.xlane.f32.xlu0 %v2488
      %v2490 = vpop.xlane.xlu0 %2489
      %v2491 = vrcp.pop %v2469
      %v2492 = vrcp.pop %v2472
      %v2493 = vrcp.pop %v2475
      %v2494 = vrcp.pop %v2478
      %v2495 = vrcp.pop %v2481
      %v2496 = vrcp.pop %v2484
      %v2497 = vrcp.pop %v2487
      %v2498 = vrcp.pop %v2490
      %v2499 = vmul.f32 %v2452, %v2491
      %v2500 = vmul.f32 %v2454, %v2492
      %v2501 = vmul.f32 %v2456, %v2493
      %v2502 = vmul.f32 %v2458, %v2494
      %v2503 = vmul.f32 %v2460, %v2495
      %v2504 = vmul.f32 %v2462, %v2496
      %v2505 = vmul.f32 %v2464, %v2497
      %v2506 = vmul.f32 %v2466, %v2498
      %2507 = vrot.lane.b32.xlu0 %v366, 48
      %v2508 = vpop.permute.xlu0 %2507
      %2509 = vrot.lane.b32.xlu0 %v371, 48
      %v2510 = vpop.permute.xlu0 %2509
      %v2514 = vsel %vm769, %v2499, 0
      %v2517 = vsel %vm769, %v2500, 0
      %2519 = vmatprep.subr.mxu0 0.0
      %2520 = vmatpush1.msra.mxu0 %v2508
      %2521 = vmatprep.subr.mxu0 0.0
      %2522 = vmatpush1.msra.mxu0 %v2510
      %2523 = vmatprep.subr.mxu0 0.0
      %2524 = vmatpush1.msra.mxu0 0.0
      %2525 = vmatprep.subr.mxu0 0.0
      %2526 = vmatpush1.msra.mxu0 0.0
      %2527 = vmatprep.subr.mxu0 0.0
      %2528 = vmatpush1.msra.mxu0 0.0
      %2529 = vmatprep.subr.mxu0 0.0
      %2530 = vmatpush1.msra.mxu0 0.0
      %2531 = vmatprep.subr.mxu0 0.0
      %2532 = vmatpush1.msra.mxu0 0.0
      %2533 = vmatprep.subr.mxu0 0.0
      %2534 = vmatpush1.msra.mxu0 0.0
      %2535 = vmatprep.subr.mxu0 0.0
      %2536 = vmatpush1.msra.mxu0 0.0
      %2537 = vmatprep.subr.mxu0 0.0
      %2538 = vmatpush1.msra.mxu0 0.0
      %2539 = vmatprep.subr.mxu0 0.0
      %2540 = vmatpush1.msra.mxu0 0.0
      %2541 = vmatprep.subr.mxu0 0.0
      %2542 = vmatpush1.msra.mxu0 0.0
      %2543 = vmatprep.subr.mxu0 0.0
      %2544 = vmatpush1.msra.mxu0 0.0
      %2545 = vmatprep.subr.mxu0 0.0
      %2546 = vmatpush1.msra.mxu0 0.0
      %2547 = vmatprep.subr.mxu0 0.0
      %2548 = vmatpush1.msra.mxu0 0.0
      %2549 = vmatprep.subr.mxu0 0.0
      %2550 = vmatpush1.msra.mxu0 0.0
      %2551 = vmatprep.subr.mxu0 0.0
      %2552 = vmatpush1.msra.mxu0 0.0
      %2553 = vmatprep.subr.mxu0 0.0
      %2554 = vmatpush1.msra.mxu0 0.0
      %2555 = vmatprep.subr.mxu0 0.0
      %2556 = vmatpush1.msra.mxu0 0.0
      %2557 = vmatprep.subr.mxu0 0.0
      %2558 = vmatpush1.msra.mxu0 0.0
      %2559 = vmatprep.subr.mxu0 0.0
      %2560 = vmatpush1.msra.mxu0 0.0
      %2561 = vmatprep.subr.mxu0 0.0
      %2562 = vmatpush1.msra.mxu0 0.0
      %2563 = vmatprep.subr.mxu0 0.0
      %2564 = vmatpush1.msra.mxu0 0.0
      %2565 = vmatprep.subr.mxu0 0.0
      %2566 = vmatpush1.msra.mxu0 0.0
      %2567 = vmatprep.subr.mxu0 0.0
      %2568 = vmatpush1.msra.mxu0 0.0
      %2569 = vmatprep.subr.mxu0 0.0
      %2570 = vmatpush1.msra.mxu0 0.0
      %2571 = vmatprep.subr.mxu0 0.0
      %2572 = vmatpush1.msra.mxu0 0.0
      %2573 = vmatprep.subr.mxu0 0.0
      %2574 = vmatpush1.msra.mxu0 0.0
      %2575 = vmatprep.subr.mxu0 0.0
      %2576 = vmatpush1.msra.mxu0 0.0
      %2577 = vmatprep.subr.mxu0 0.0
      %2578 = vmatpush1.msra.mxu0 0.0
      %2579 = vmatprep.subr.mxu0 0.0
      %2580 = vmatpush1.msra.mxu0 0.0
      %2581 = vmatprep.subr.mxu0 0.0
      %2582 = vmatpush1.msra.mxu0 0.0
      %2583 = vmatprep.mubr.f32.mxu0 0.0
      %2584 = vmatmul.mubr.f32.gmra.mrb[0].mxu0 %v2514
      %v2585 = vpop.f32.mrb[0].mxu0
      %v2586 = vadd.f32 0.0, %v2585
      %v2587 = vpop.f32.mrb[0].mxu0
      %2588 = vmatprep.mubr.f32.mxu0 0.0
      %2589 = vmatmul.mubr.f32.gmra.mrb[0].mxu0 %v2517
      %v2590 = vpop.f32.mrb[0].mxu0
      %v2591 = vadd.f32 0.0, %v2590
      %v2592 = vpop.f32.mrb[0].mxu0
      %2593 = vdwg.mxu0
      %2594 = vrot.lane.b32.xlu0 %v376, 48
      %v2595 = vpop.permute.xlu0 %2594
      %2596 = vrot.lane.b32.xlu0 %v381, 48
      %v2597 = vpop.permute.xlu0 %2596
      %v2601 = vsel %vm769, %v2501, 0
      %v2604 = vsel %vm769, %v2502, 0
      %2606 = vmatprep.subr.mxu0 0.0
      %2607 = vmatpush1.msra.mxu0 %v2595
      %2608 = vmatprep.subr.mxu0 0.0
      %2609 = vmatpush1.msra.mxu0 %v2597
      %2610 = vmatprep.subr.mxu0 0.0
      %2611 = vmatpush1.msra.mxu0 0.0
      %2612 = vmatprep.subr.mxu0 0.0
      %2613 = vmatpush1.msra.mxu0 0.0
      %2614 = vmatprep.subr.mxu0 0.0
      %2615 = vmatpush1.msra.mxu0 0.0
      %2616 = vmatprep.subr.mxu0 0.0
      %2617 = vmatpush1.msra.mxu0 0.0
      %2618 = vmatprep.subr.mxu0 0.0
      %2619 = vmatpush1.msra.mxu0 0.0
      %2620 = vmatprep.subr.mxu0 0.0
      %2621 = vmatpush1.msra.mxu0 0.0
      %2622 = vmatprep.subr.mxu0 0.0
      %2623 = vmatpush1.msra.mxu0 0.0
      %2624 = vmatprep.subr.mxu0 0.0
      %2625 = vmatpush1.msra.mxu0 0.0
      %2626 = vmatprep.subr.mxu0 0.0
      %2627 = vmatpush1.msra.mxu0 0.0
      %2628 = vmatprep.subr.mxu0 0.0
      %2629 = vmatpush1.msra.mxu0 0.0
      %2630 = vmatprep.subr.mxu0 0.0
      %2631 = vmatpush1.msra.mxu0 0.0
      %2632 = vmatprep.subr.mxu0 0.0
      %2633 = vmatpush1.msra.mxu0 0.0
      %2634 = vmatprep.subr.mxu0 0.0
      %2635 = vmatpush1.msra.mxu0 0.0
      %2636 = vmatprep.subr.mxu0 0.0
      %2637 = vmatpush1.msra.mxu0 0.0
      %2638 = vmatprep.subr.mxu0 0.0
      %2639 = vmatpush1.msra.mxu0 0.0
      %2640 = vmatprep.subr.mxu0 0.0
      %2641 = vmatpush1.msra.mxu0 0.0
      %2642 = vmatprep.subr.mxu0 0.0
      %2643 = vmatpush1.msra.mxu0 0.0
      %2644 = vmatprep.subr.mxu0 0.0
      %2645 = vmatpush1.msra.mxu0 0.0
      %2646 = vmatprep.subr.mxu0 0.0
      %2647 = vmatpush1.msra.mxu0 0.0
      %2648 = vmatprep.subr.mxu0 0.0
      %2649 = vmatpush1.msra.mxu0 0.0
      %2650 = vmatprep.subr.mxu0 0.0
      %2651 = vmatpush1.msra.mxu0 0.0
      %2652 = vmatprep.subr.mxu0 0.0
      %2653 = vmatpush1.msra.mxu0 0.0
      %2654 = vmatprep.subr.mxu0 0.0
      %2655 = vmatpush1.msra.mxu0 0.0
      %2656 = vmatprep.subr.mxu0 0.0
      %2657 = vmatpush1.msra.mxu0 0.0
      %2658 = vmatprep.subr.mxu0 0.0
      %2659 = vmatpush1.msra.mxu0 0.0
      %2660 = vmatprep.subr.mxu0 0.0
      %2661 = vmatpush1.msra.mxu0 0.0
      %2662 = vmatprep.subr.mxu0 0.0
      %2663 = vmatpush1.msra.mxu0 0.0
      %2664 = vmatprep.subr.mxu0 0.0
      %2665 = vmatpush1.msra.mxu0 0.0
      %2666 = vmatprep.subr.mxu0 0.0
      %2667 = vmatpush1.msra.mxu0 0.0
      %2668 = vmatprep.subr.mxu0 0.0
      %2669 = vmatpush1.msra.mxu0 0.0
      %2670 = vmatprep.mubr.f32.mxu0 0.0
      %2671 = vmatmul.mubr.f32.gmra.mrb[0].mxu0 %v2601
      %v2672 = vpop.f32.mrb[0].mxu0
      %v2673 = vadd.f32 0.0, %v2672
      %v2674 = vpop.f32.mrb[0].mxu0
      %2675 = vmatprep.mubr.f32.mxu0 0.0
      %2676 = vmatmul.mubr.f32.gmra.mrb[0].mxu0 %v2604
      %v2677 = vpop.f32.mrb[0].mxu0
      %v2678 = vadd.f32 0.0, %v2677
      %v2679 = vpop.f32.mrb[0].mxu0
      %2680 = vdwg.mxu0
      %2681 = vrot.lane.b32.xlu0 %v386, 48
      %v2682 = vpop.permute.xlu0 %2681
      %2683 = vrot.lane.b32.xlu0 %v391, 48
      %v2684 = vpop.permute.xlu0 %2683
      %v2688 = vsel %vm769, %v2503, 0
      %v2691 = vsel %vm769, %v2504, 0
      %2693 = vmatprep.subr.mxu0 0.0
      %2694 = vmatpush1.msra.mxu0 %v2682
      %2695 = vmatprep.subr.mxu0 0.0
      %2696 = vmatpush1.msra.mxu0 %v2684
      %2697 = vmatprep.subr.mxu0 0.0
      %2698 = vmatpush1.msra.mxu0 0.0
      %2699 = vmatprep.subr.mxu0 0.0
      %2700 = vmatpush1.msra.mxu0 0.0
      %2701 = vmatprep.subr.mxu0 0.0
      %2702 = vmatpush1.msra.mxu0 0.0
      %2703 = vmatprep.subr.mxu0 0.0
      %2704 = vmatpush1.msra.mxu0 0.0
      %2705 = vmatprep.subr.mxu0 0.0
      %2706 = vmatpush1.msra.mxu0 0.0
      %2707 = vmatprep.subr.mxu0 0.0
      %2708 = vmatpush1.msra.mxu0 0.0
      %2709 = vmatprep.subr.mxu0 0.0
      %2710 = vmatpush1.msra.mxu0 0.0
      %2711 = vmatprep.subr.mxu0 0.0
      %2712 = vmatpush1.msra.mxu0 0.0
      %2713 = vmatprep.subr.mxu0 0.0
      %2714 = vmatpush1.msra.mxu0 0.0
      %2715 = vmatprep.subr.mxu0 0.0
      %2716 = vmatpush1.msra.mxu0 0.0
      %2717 = vmatprep.subr.mxu0 0.0
      %2718 = vmatpush1.msra.mxu0 0.0
      %2719 = vmatprep.subr.mxu0 0.0
      %2720 = vmatpush1.msra.mxu0 0.0
      %2721 = vmatprep.subr.mxu0 0.0
      %2722 = vmatpush1.msra.mxu0 0.0
      %2723 = vmatprep.subr.mxu0 0.0
      %2724 = vmatpush1.msra.mxu0 0.0
      %2725 = vmatprep.subr.mxu0 0.0
      %2726 = vmatpush1.msra.mxu0 0.0
      %2727 = vmatprep.subr.mxu0 0.0
      %2728 = vmatpush1.msra.mxu0 0.0
      %2729 = vmatprep.subr.mxu0 0.0
      %2730 = vmatpush1.msra.mxu0 0.0
      %2731 = vmatprep.subr.mxu0 0.0
      %2732 = vmatpush1.msra.mxu0 0.0
      %2733 = vmatprep.subr.mxu0 0.0
      %2734 = vmatpush1.msra.mxu0 0.0
      %2735 = vmatprep.subr.mxu0 0.0
      %2736 = vmatpush1.msra.mxu0 0.0
      %2737 = vmatprep.subr.mxu0 0.0
      %2738 = vmatpush1.msra.mxu0 0.0
      %2739 = vmatprep.subr.mxu0 0.0
      %2740 = vmatpush1.msra.mxu0 0.0
      %2741 = vmatprep.subr.mxu0 0.0
      %2742 = vmatpush1.msra.mxu0 0.0
      %2743 = vmatprep.subr.mxu0 0.0
      %2744 = vmatpush1.msra.mxu0 0.0
      %2745 = vmatprep.subr.mxu0 0.0
      %2746 = vmatpush1.msra.mxu0 0.0
      %2747 = vmatprep.subr.mxu0 0.0
      %2748 = vmatpush1.msra.mxu0 0.0
      %2749 = vmatprep.subr.mxu0 0.0
      %2750 = vmatpush1.msra.mxu0 0.0
      %2751 = vmatprep.subr.mxu0 0.0
      %2752 = vmatpush1.msra.mxu0 0.0
      %2753 = vmatprep.subr.mxu0 0.0
      %2754 = vmatpush1.msra.mxu0 0.0
      %2755 = vmatprep.subr.mxu0 0.0
      %2756 = vmatpush1.msra.mxu0 0.0
      %2757 = vmatprep.mubr.f32.mxu0 0.0
      %2758 = vmatmul.mubr.f32.gmra.mrb[0].mxu0 %v2688
      %v2759 = vpop.f32.mrb[0].mxu0
      %v2760 = vadd.f32 0.0, %v2759
      %v2761 = vpop.f32.mrb[0].mxu0
      %2762 = vmatprep.mubr.f32.mxu0 0.0
      %2763 = vmatmul.mubr.f32.gmra.mrb[0].mxu0 %v2691
      %v2764 = vpop.f32.mrb[0].mxu0
      %v2765 = vadd.f32 0.0, %v2764
      %v2766 = vpop.f32.mrb[0].mxu0
      %2767 = vdwg.mxu0
      %2768 = vrot.lane.b32.xlu0 %v396, 48
      %v2769 = vpop.permute.xlu0 %2768
      %2770 = vrot.lane.b32.xlu0 %v401, 48
      %v2771 = vpop.permute.xlu0 %2770
      %v2775 = vsel %vm769, %v2505, 0
      %v2778 = vsel %vm769, %v2506, 0
      %2780 = vmatprep.subr.mxu0 0.0
      %2781 = vmatpush1.msra.mxu0 %v2769
      %2782 = vmatprep.subr.mxu0 0.0
      %2783 = vmatpush1.msra.mxu0 %v2771
      %2784 = vmatprep.subr.mxu0 0.0
      %2785 = vmatpush1.msra.mxu0 0.0
      %2786 = vmatprep.subr.mxu0 0.0
      %2787 = vmatpush1.msra.mxu0 0.0
      %2788 = vmatprep.subr.mxu0 0.0
      %2789 = vmatpush1.msra.mxu0 0.0
      %2790 = vmatprep.subr.mxu0 0.0
      %2791 = vmatpush1.msra.mxu0 0.0
      %2792 = vmatprep.subr.mxu0 0.0
      %2793 = vmatpush1.msra.mxu0 0.0
      %2794 = vmatprep.subr.mxu0 0.0
      %2795 = vmatpush1.msra.mxu0 0.0
      %2796 = vmatprep.subr.mxu0 0.0
      %2797 = vmatpush1.msra.mxu0 0.0
      %2798 = vmatprep.subr.mxu0 0.0
      %2799 = vmatpush1.msra.mxu0 0.0
      %2800 = vmatprep.subr.mxu0 0.0
      %2801 = vmatpush1.msra.mxu0 0.0
      %2802 = vmatprep.subr.mxu0 0.0
      %2803 = vmatpush1.msra.mxu0 0.0
      %2804 = vmatprep.subr.mxu0 0.0
      %2805 = vmatpush1.msra.mxu0 0.0
      %2806 = vmatprep.subr.mxu0 0.0
      %2807 = vmatpush1.msra.mxu0 0.0
      %2808 = vmatprep.subr.mxu0 0.0
      %2809 = vmatpush1.msra.mxu0 0.0
      %2810 = vmatprep.subr.mxu0 0.0
      %2811 = vmatpush1.msra.mxu0 0.0
      %2812 = vmatprep.subr.mxu0 0.0
      %2813 = vmatpush1.msra.mxu0 0.0
      %2814 = vmatprep.subr.mxu0 0.0
      %2815 = vmatpush1.msra.mxu0 0.0
      %2816 = vmatprep.subr.mxu0 0.0
      %2817 = vmatpush1.msra.mxu0 0.0
      %2818 = vmatprep.subr.mxu0 0.0
      %2819 = vmatpush1.msra.mxu0 0.0
      %2820 = vmatprep.subr.mxu0 0.0
      %2821 = vmatpush1.msra.mxu0 0.0
      %2822 = vmatprep.subr.mxu0 0.0
      %2823 = vmatpush1.msra.mxu0 0.0
      %2824 = vmatprep.subr.mxu0 0.0
      %2825 = vmatpush1.msra.mxu0 0.0
      %2826 = vmatprep.subr.mxu0 0.0
      %2827 = vmatpush1.msra.mxu0 0.0
      %2828 = vmatprep.subr.mxu0 0.0
      %2829 = vmatpush1.msra.mxu0 0.0
      %2830 = vmatprep.subr.mxu0 0.0
      %2831 = vmatpush1.msra.mxu0 0.0
      %2832 = vmatprep.subr.mxu0 0.0
      %2833 = vmatpush1.msra.mxu0 0.0
      %2834 = vmatprep.subr.mxu0 0.0
      %2835 = vmatpush1.msra.mxu0 0.0
      %2836 = vmatprep.subr.mxu0 0.0
      %2837 = vmatpush1.msra.mxu0 0.0
      %2838 = vmatprep.subr.mxu0 0.0
      %2839 = vmatpush1.msra.mxu0 0.0
      %2840 = vmatprep.subr.mxu0 0.0
      %2841 = vmatpush1.msra.mxu0 0.0
      %2842 = vmatprep.subr.mxu0 0.0
      %2843 = vmatpush1.msra.mxu0 0.0
      %2844 = vmatprep.mubr.f32.mxu0 0.0
      %2845 = vmatmul.mubr.f32.gmra.mrb[0].mxu0 %v2775
      %v2846 = vpop.f32.mrb[0].mxu0
      %v2847 = vadd.f32 0.0, %v2846
      %v2848 = vpop.f32.mrb[0].mxu0
      %2849 = vmatprep.mubr.f32.mxu0 0.0
      %2850 = vmatmul.mubr.f32.gmra.mrb[0].mxu0 %v2778
      %v2851 = vpop.f32.mrb[0].mxu0
      %v2852 = vadd.f32 0.0, %v2851
      %v2853 = vpop.f32.mrb[0].mxu0
      %2854 = vdwg.mxu0
      %2863 = vrot.lane.b32.xlu0 %v2586, 16
      %v2864 = vpop.permute.xlu0 %2863
      %2865 = vrot.lane.b32.xlu0 %v2591, 16
      %v2866 = vpop.permute.xlu0 %2865
      %2867 = vrot.lane.b32.xlu0 %v2673, 16
      %v2868 = vpop.permute.xlu0 %2867
      %2869 = vrot.lane.b32.xlu0 %v2678, 16
      %v2870 = vpop.permute.xlu0 %2869
      %2871 = vrot.lane.b32.xlu0 %v2760, 16
      %v2872 = vpop.permute.xlu0 %2871
      %2873 = vrot.lane.b32.xlu0 %v2765, 16
      %v2874 = vpop.permute.xlu0 %2873
      %2875 = vrot.lane.b32.xlu0 %v2847, 16
      %v2876 = vpop.permute.xlu0 %2875
      %2877 = vrot.lane.b32.xlu0 %v2852, 16
      %v2878 = vpop.permute.xlu0 %2877
      %vm2887 = vcmask 195712
      %2888 = vst.msk [vmem:[#allocation2] sm:$0xff] %vm2887, %v2864
      %2889 = vst.msk [vmem:[#allocation2 + $0x8] sm:$0xff] %vm2887, %v2866
      %2890 = vst.msk [vmem:[#allocation2 + $0x10] sm:$0xff] %vm2887, %v2868
      %2891 = vst.msk [vmem:[#allocation2 + $0x18] sm:$0xff] %vm2887, %v2870
      %2892 = vst.msk [vmem:[#allocation2 + $0x20] sm:$0xff] %vm2887, %v2872
      %2893 = vst.msk [vmem:[#allocation2 + $0x28] sm:$0xff] %vm2887, %v2874
      %2894 = vst.msk [vmem:[#allocation2 + $0x30] sm:$0xff] %vm2887, %v2876
      %2895 = vst.msk [vmem:[#allocation2 + $0x38] sm:$0xff] %vm2887, %v2878
      %2896 = vrot.lane.b32.xlu0 %v366, 104
      %v2897 = vpop.permute.xlu0 %2896
      %2898 = vrot.lane.b32.xlu0 %v371, 104
      %v2899 = vpop.permute.xlu0 %2898
      %2900 = vrot.lane.b32.xlu0 %v366, 72
      %v2901 = vpop.permute.xlu0 %2900
      %2902 = vrot.lane.b32.xlu0 %v371, 72
      %v2903 = vpop.permute.xlu0 %2902
      %v2904 = vsel %vm418, %v2897, 0
      %v2906 = vsel %vm418, %v2899, 0
      %v2908 = vsel %vm418, %v2901, 0
      %v2910 = vsel %vm418, %v2903, 0
      %2912 = vmatprep.subr.mxu0 0.0
      %2913 = vmatpush1.xpose.msra.mxu0 %v2908
      %2914 = vmatprep.subr.mxu0 0.0
      %2915 = vmatpush1.xpose.msra.mxu0 %v2910
      %2916 = vmatprep.subr.mxu0 0.0
      %2917 = vmatpush1.xpose.msra.mxu0 0.0
      %2918 = vmatprep.subr.mxu0 0.0
      %2919 = vmatpush1.xpose.msra.mxu0 0.0
      %2920 = vmatprep.subr.mxu0 0.0
      %2921 = vmatpush1.xpose.msra.mxu0 0.0
      %2922 = vmatprep.subr.mxu0 0.0
      %2923 = vmatpush1.xpose.msra.mxu0 0.0
      %2924 = vmatprep.subr.mxu0 0.0
      %2925 = vmatpush1.xpose.msra.mxu0 0.0
      %2926 = vmatprep.subr.mxu0 0.0
      %2927 = vmatpush1.xpose.msra.mxu0 0.0
      %2928 = vmatprep.subr.mxu0 0.0
      %2929 = vmatpush1.xpose.msra.mxu0 0.0
      %2930 = vmatprep.subr.mxu0 0.0
      %2931 = vmatpush1.xpose.msra.mxu0 0.0
      %2932 = vmatprep.subr.mxu0 0.0
      %2933 = vmatpush1.xpose.msra.mxu0 0.0
      %2934 = vmatprep.subr.mxu0 0.0
      %2935 = vmatpush1.xpose.msra.mxu0 0.0
      %2936 = vmatprep.subr.mxu0 0.0
      %2937 = vmatpush1.xpose.msra.mxu0 0.0
      %2938 = vmatprep.subr.mxu0 0.0
      %2939 = vmatpush1.xpose.msra.mxu0 0.0
      %2940 = vmatprep.subr.mxu0 0.0
      %2941 = vmatpush1.xpose.msra.mxu0 0.0
      %2942 = vmatprep.subr.mxu0 0.0
      %2943 = vmatpush1.xpose.msra.mxu0 0.0
      %2944 = vmatprep.subr.mxu0 0.0
      %2945 = vmatpush1.xpose.msra.mxu0 0.0
      %2946 = vmatprep.subr.mxu0 0.0
      %2947 = vmatpush1.xpose.msra.mxu0 0.0
      %2948 = vmatprep.subr.mxu0 0.0
      %2949 = vmatpush1.xpose.msra.mxu0 0.0
      %2950 = vmatprep.subr.mxu0 0.0
      %2951 = vmatpush1.xpose.msra.mxu0 0.0
      %2952 = vmatprep.subr.mxu0 0.0
      %2953 = vmatpush1.xpose.msra.mxu0 0.0
      %2954 = vmatprep.subr.mxu0 0.0
      %2955 = vmatpush1.xpose.msra.mxu0 0.0
      %2956 = vmatprep.subr.mxu0 0.0
      %2957 = vmatpush1.xpose.msra.mxu0 0.0
      %2958 = vmatprep.subr.mxu0 0.0
      %2959 = vmatpush1.xpose.msra.mxu0 0.0
      %2960 = vmatprep.subr.mxu0 0.0
      %2961 = vmatpush1.xpose.msra.mxu0 0.0
      %2962 = vmatprep.subr.mxu0 0.0
      %2963 = vmatpush1.xpose.msra.mxu0 0.0
      %2964 = vmatprep.subr.mxu0 0.0
      %2965 = vmatpush1.xpose.msra.mxu0 0.0
      %2966 = vmatprep.subr.mxu0 0.0
      %2967 = vmatpush1.xpose.msra.mxu0 0.0
      %2968 = vmatprep.subr.mxu0 0.0
      %2969 = vmatpush1.xpose.msra.mxu0 0.0
      %2970 = vmatprep.subr.mxu0 0.0
      %2971 = vmatpush1.xpose.msra.mxu0 0.0
      %2972 = vmatprep.subr.mxu0 0.0
      %2973 = vmatpush1.xpose.msra.mxu0 0.0
      %2974 = vmatprep.subr.mxu0 0.0
      %2975 = vmatpush1.xpose.msra.mxu0 0.0
      %2976 = vmatprep.mubr.f32.mxu0 0.0
      %2977 = vmatmul.mubr.f32.gmra.mrb[0].mxu0 %v2904
      %v2978 = vpop.f32.mrb[0].mxu0
      %v2979 = vadd.f32 %v410, %v2978
      %v2980 = vpop.f32.mrb[0].mxu0
      %2981 = vmatprep.mubr.f32.mxu0 0.0
      %2982 = vmatmul.mubr.f32.gmra.mrb[0].mxu0 %v2906
      %v2983 = vpop.f32.mrb[0].mxu0
      %v2984 = vadd.f32 %v411, %v2983
      %v2985 = vpop.f32.mrb[0].mxu0
      %2986 = vdwg.mxu0
      %2987 = vrot.lane.b32.xlu0 %v376, 104
      %v2988 = vpop.permute.xlu0 %2987
      %2989 = vrot.lane.b32.xlu0 %v381, 104
      %v2990 = vpop.permute.xlu0 %2989
      %2991 = vrot.lane.b32.xlu0 %v376, 72
      %v2992 = vpop.permute.xlu0 %2991
      %2993 = vrot.lane.b32.xlu0 %v381, 72
      %v2994 = vpop.permute.xlu0 %2993
      %v2995 = vsel %vm418, %v2988, 0
      %v2997 = vsel %vm418, %v2990, 0
      %v2999 = vsel %vm418, %v2992, 0
      %v3001 = vsel %vm418, %v2994, 0
      %3003 = vmatprep.subr.mxu0 0.0
      %3004 = vmatpush1.xpose.msra.mxu0 %v2999
      %3005 = vmatprep.subr.mxu0 0.0
      %3006 = vmatpush1.xpose.msra.mxu0 %v3001
      %3007 = vmatprep.subr.mxu0 0.0
      %3008 = vmatpush1.xpose.msra.mxu0 0.0
      %3009 = vmatprep.subr.mxu0 0.0
      %3010 = vmatpush1.xpose.msra.mxu0 0.0
      %3011 = vmatprep.subr.mxu0 0.0
      %3012 = vmatpush1.xpose.msra.mxu0 0.0
      %3013 = vmatprep.subr.mxu0 0.0
      %3014 = vmatpush1.xpose.msra.mxu0 0.0
      %3015 = vmatprep.subr.mxu0 0.0
      %3016 = vmatpush1.xpose.msra.mxu0 0.0
      %3017 = vmatprep.subr.mxu0 0.0
      %3018 = vmatpush1.xpose.msra.mxu0 0.0
      %3019 = vmatprep.subr.mxu0 0.0
      %3020 = vmatpush1.xpose.msra.mxu0 0.0
      %3021 = vmatprep.subr.mxu0 0.0
      %3022 = vmatpush1.xpose.msra.mxu0 0.0
      %3023 = vmatprep.subr.mxu0 0.0
      %3024 = vmatpush1.xpose.msra.mxu0 0.0
      %3025 = vmatprep.subr.mxu0 0.0
      %3026 = vmatpush1.xpose.msra.mxu0 0.0
      %3027 = vmatprep.subr.mxu0 0.0
      %3028 = vmatpush1.xpose.msra.mxu0 0.0
      %3029 = vmatprep.subr.mxu0 0.0
      %3030 = vmatpush1.xpose.msra.mxu0 0.0
      %3031 = vmatprep.subr.mxu0 0.0
      %3032 = vmatpush1.xpose.msra.mxu0 0.0
      %3033 = vmatprep.subr.mxu0 0.0
      %3034 = vmatpush1.xpose.msra.mxu0 0.0
      %3035 = vmatprep.subr.mxu0 0.0
      %3036 = vmatpush1.xpose.msra.mxu0 0.0
      %3037 = vmatprep.subr.mxu0 0.0
      %3038 = vmatpush1.xpose.msra.mxu0 0.0
      %3039 = vmatprep.subr.mxu0 0.0
      %3040 = vmatpush1.xpose.msra.mxu0 0.0
      %3041 = vmatprep.subr.mxu0 0.0
      %3042 = vmatpush1.xpose.msra.mxu0 0.0
      %3043 = vmatprep.subr.mxu0 0.0
      %3044 = vmatpush1.xpose.msra.mxu0 0.0
      %3045 = vmatprep.subr.mxu0 0.0
      %3046 = vmatpush1.xpose.msra.mxu0 0.0
      %3047 = vmatprep.subr.mxu0 0.0
      %3048 = vmatpush1.xpose.msra.mxu0 0.0
      %3049 = vmatprep.subr.mxu0 0.0
      %3050 = vmatpush1.xpose.msra.mxu0 0.0
      %3051 = vmatprep.subr.mxu0 0.0
      %3052 = vmatpush1.xpose.msra.mxu0 0.0
      %3053 = vmatprep.subr.mxu0 0.0
      %3054 = vmatpush1.xpose.msra.mxu0 0.0
      %3055 = vmatprep.subr.mxu0 0.0
      %3056 = vmatpush1.xpose.msra.mxu0 0.0
      %3057 = vmatprep.subr.mxu0 0.0
      %3058 = vmatpush1.xpose.msra.mxu0 0.0
      %3059 = vmatprep.subr.mxu0 0.0
      %3060 = vmatpush1.xpose.msra.mxu0 0.0
      %3061 = vmatprep.subr.mxu0 0.0
      %3062 = vmatpush1.xpose.msra.mxu0 0.0
      %3063 = vmatprep.subr.mxu0 0.0
      %3064 = vmatpush1.xpose.msra.mxu0 0.0
      %3065 = vmatprep.subr.mxu0 0.0
      %3066 = vmatpush1.xpose.msra.mxu0 0.0
      %3067 = vmatprep.mubr.f32.mxu0 0.0
      %3068 = vmatmul.mubr.f32.gmra.mrb[0].mxu0 %v2995
      %v3069 = vpop.f32.mrb[0].mxu0
      %v3070 = vadd.f32 %v410, %v3069
      %v3071 = vpop.f32.mrb[0].mxu0
      %3072 = vmatprep.mubr.f32.mxu0 0.0
      %3073 = vmatmul.mubr.f32.gmra.mrb[0].mxu0 %v2997
      %v3074 = vpop.f32.mrb[0].mxu0
      %v3075 = vadd.f32 %v411, %v3074
      %v3076 = vpop.f32.mrb[0].mxu0
      %3077 = vdwg.mxu0
      %3078 = vrot.lane.b32.xlu0 %v386, 104
      %v3079 = vpop.permute.xlu0 %3078
      %3080 = vrot.lane.b32.xlu0 %v391, 104
      %v3081 = vpop.permute.xlu0 %3080
      %3082 = vrot.lane.b32.xlu0 %v386, 72
      %v3083 = vpop.permute.xlu0 %3082
      %3084 = vrot.lane.b32.xlu0 %v391, 72
      %v3085 = vpop.permute.xlu0 %3084
      %v3086 = vsel %vm418, %v3079, 0
      %v3088 = vsel %vm418, %v3081, 0
      %v3090 = vsel %vm418, %v3083, 0
      %v3092 = vsel %vm418, %v3085, 0
      %3094 = vmatprep.subr.mxu0 0.0
      %3095 = vmatpush1.xpose.msra.mxu0 %v3090
      %3096 = vmatprep.subr.mxu0 0.0
      %3097 = vmatpush1.xpose.msra.mxu0 %v3092
      %3098 = vmatprep.subr.mxu0 0.0
      %3099 = vmatpush1.xpose.msra.mxu0 0.0
      %3100 = vmatprep.subr.mxu0 0.0
      %3101 = vmatpush1.xpose.msra.mxu0 0.0
      %3102 = vmatprep.subr.mxu0 0.0
      %3103 = vmatpush1.xpose.msra.mxu0 0.0
      %3104 = vmatprep.subr.mxu0 0.0
      %3105 = vmatpush1.xpose.msra.mxu0 0.0
      %3106 = vmatprep.subr.mxu0 0.0
      %3107 = vmatpush1.xpose.msra.mxu0 0.0
      %3108 = vmatprep.subr.mxu0 0.0
      %3109 = vmatpush1.xpose.msra.mxu0 0.0
      %3110 = vmatprep.subr.mxu0 0.0
      %3111 = vmatpush1.xpose.msra.mxu0 0.0
      %3112 = vmatprep.subr.mxu0 0.0
      %3113 = vmatpush1.xpose.msra.mxu0 0.0
      %3114 = vmatprep.subr.mxu0 0.0
      %3115 = vmatpush1.xpose.msra.mxu0 0.0
      %3116 = vmatprep.subr.mxu0 0.0
      %3117 = vmatpush1.xpose.msra.mxu0 0.0
      %3118 = vmatprep.subr.mxu0 0.0
      %3119 = vmatpush1.xpose.msra.mxu0 0.0
      %3120 = vmatprep.subr.mxu0 0.0
      %3121 = vmatpush1.xpose.msra.mxu0 0.0
      %3122 = vmatprep.subr.mxu0 0.0
      %3123 = vmatpush1.xpose.msra.mxu0 0.0
      %3124 = vmatprep.subr.mxu0 0.0
      %3125 = vmatpush1.xpose.msra.mxu0 0.0
      %3126 = vmatprep.subr.mxu0 0.0
      %3127 = vmatpush1.xpose.msra.mxu0 0.0
      %3128 = vmatprep.subr.mxu0 0.0
      %3129 = vmatpush1.xpose.msra.mxu0 0.0
      %3130 = vmatprep.subr.mxu0 0.0
      %3131 = vmatpush1.xpose.msra.mxu0 0.0
      %3132 = vmatprep.subr.mxu0 0.0
      %3133 = vmatpush1.xpose.msra.mxu0 0.0
      %3134 = vmatprep.subr.mxu0 0.0
      %3135 = vmatpush1.xpose.msra.mxu0 0.0
      %3136 = vmatprep.subr.mxu0 0.0
      %3137 = vmatpush1.xpose.msra.mxu0 0.0
      %3138 = vmatprep.subr.mxu0 0.0
      %3139 = vmatpush1.xpose.msra.mxu0 0.0
      %3140 = vmatprep.subr.mxu0 0.0
      %3141 = vmatpush1.xpose.msra.mxu0 0.0
      %3142 = vmatprep.subr.mxu0 0.0
      %3143 = vmatpush1.xpose.msra.mxu0 0.0
      %3144 = vmatprep.subr.mxu0 0.0
      %3145 = vmatpush1.xpose.msra.mxu0 0.0
      %3146 = vmatprep.subr.mxu0 0.0
      %3147 = vmatpush1.xpose.msra.mxu0 0.0
      %3148 = vmatprep.subr.mxu0 0.0
      %3149 = vmatpush1.xpose.msra.mxu0 0.0
      %3150 = vmatprep.subr.mxu0 0.0
      %3151 = vmatpush1.xpose.msra.mxu0 0.0
      %3152 = vmatprep.subr.mxu0 0.0
      %3153 = vmatpush1.xpose.msra.mxu0 0.0
      %3154 = vmatprep.subr.mxu0 0.0
      %3155 = vmatpush1.xpose.msra.mxu0 0.0
      %3156 = vmatprep.subr.mxu0 0.0
      %3157 = vmatpush1.xpose.msra.mxu0 0.0
      %3158 = vmatprep.mubr.f32.mxu0 0.0
      %3159 = vmatmul.mubr.f32.gmra.mrb[0].mxu0 %v3086
      %v3160 = vpop.f32.mrb[0].mxu0
      %v3161 = vadd.f32 %v410, %v3160
      %v3162 = vpop.f32.mrb[0].mxu0
      %3163 = vmatprep.mubr.f32.mxu0 0.0
      %3164 = vmatmul.mubr.f32.gmra.mrb[0].mxu0 %v3088
      %v3165 = vpop.f32.mrb[0].mxu0
      %v3166 = vadd.f32 %v411, %v3165
      %v3167 = vpop.f32.mrb[0].mxu0
      %3168 = vdwg.mxu0
      %3169 = vrot.lane.b32.xlu0 %v396, 104
      %v3170 = vpop.permute.xlu0 %3169
      %3171 = vrot.lane.b32.xlu0 %v401, 104
      %v3172 = vpop.permute.xlu0 %3171
      %3173 = vrot.lane.b32.xlu0 %v396, 72
      %v3174 = vpop.permute.xlu0 %3173
      %3175 = vrot.lane.b32.xlu0 %v401, 72
      %v3176 = vpop.permute.xlu0 %3175
      %v3177 = vsel %vm418, %v3170, 0
      %v3179 = vsel %vm418, %v3172, 0
      %v3181 = vsel %vm418, %v3174, 0
      %v3183 = vsel %vm418, %v3176, 0
      %3185 = vmatprep.subr.mxu0 0.0
      %3186 = vmatpush1.xpose.msra.mxu0 %v3181
      %3187 = vmatprep.subr.mxu0 0.0
      %3188 = vmatpush1.xpose.msra.mxu0 %v3183
      %3189 = vmatprep.subr.mxu0 0.0
      %3190 = vmatpush1.xpose.msra.mxu0 0.0
      %3191 = vmatprep.subr.mxu0 0.0
      %3192 = vmatpush1.xpose.msra.mxu0 0.0
      %3193 = vmatprep.subr.mxu0 0.0
      %3194 = vmatpush1.xpose.msra.mxu0 0.0
      %3195 = vmatprep.subr.mxu0 0.0
      %3196 = vmatpush1.xpose.msra.mxu0 0.0
      %3197 = vmatprep.subr.mxu0 0.0
      %3198 = vmatpush1.xpose.msra.mxu0 0.0
      %3199 = vmatprep.subr.mxu0 0.0
      %3200 = vmatpush1.xpose.msra.mxu0 0.0
      %3201 = vmatprep.subr.mxu0 0.0
      %3202 = vmatpush1.xpose.msra.mxu0 0.0
      %3203 = vmatprep.subr.mxu0 0.0
      %3204 = vmatpush1.xpose.msra.mxu0 0.0
      %3205 = vmatprep.subr.mxu0 0.0
      %3206 = vmatpush1.xpose.msra.mxu0 0.0
      %3207 = vmatprep.subr.mxu0 0.0
      %3208 = vmatpush1.xpose.msra.mxu0 0.0
      %3209 = vmatprep.subr.mxu0 0.0
      %3210 = vmatpush1.xpose.msra.mxu0 0.0
      %3211 = vmatprep.subr.mxu0 0.0
      %3212 = vmatpush1.xpose.msra.mxu0 0.0
      %3213 = vmatprep.subr.mxu0 0.0
      %3214 = vmatpush1.xpose.msra.mxu0 0.0
      %3215 = vmatprep.subr.mxu0 0.0
      %3216 = vmatpush1.xpose.msra.mxu0 0.0
      %3217 = vmatprep.subr.mxu0 0.0
      %3218 = vmatpush1.xpose.msra.mxu0 0.0
      %3219 = vmatprep.subr.mxu0 0.0
      %3220 = vmatpush1.xpose.msra.mxu0 0.0
      %3221 = vmatprep.subr.mxu0 0.0
      %3222 = vmatpush1.xpose.msra.mxu0 0.0
      %3223 = vmatprep.subr.mxu0 0.0
      %3224 = vmatpush1.xpose.msra.mxu0 0.0
      %3225 = vmatprep.subr.mxu0 0.0
      %3226 = vmatpush1.xpose.msra.mxu0 0.0
      %3227 = vmatprep.subr.mxu0 0.0
      %3228 = vmatpush1.xpose.msra.mxu0 0.0
      %3229 = vmatprep.subr.mxu0 0.0
      %3230 = vmatpush1.xpose.msra.mxu0 0.0
      %3231 = vmatprep.subr.mxu0 0.0
      %3232 = vmatpush1.xpose.msra.mxu0 0.0
      %3233 = vmatprep.subr.mxu0 0.0
      %3234 = vmatpush1.xpose.msra.mxu0 0.0
      %3235 = vmatprep.subr.mxu0 0.0
      %3236 = vmatpush1.xpose.msra.mxu0 0.0
      %3237 = vmatprep.subr.mxu0 0.0
      %3238 = vmatpush1.xpose.msra.mxu0 0.0
      %3239 = vmatprep.subr.mxu0 0.0
      %3240 = vmatpush1.xpose.msra.mxu0 0.0
      %3241 = vmatprep.subr.mxu0 0.0
      %3242 = vmatpush1.xpose.msra.mxu0 0.0
      %3243 = vmatprep.subr.mxu0 0.0
      %3244 = vmatpush1.xpose.msra.mxu0 0.0
      %3245 = vmatprep.subr.mxu0 0.0
      %3246 = vmatpush1.xpose.msra.mxu0 0.0
      %3247 = vmatprep.subr.mxu0 0.0
      %3248 = vmatpush1.xpose.msra.mxu0 0.0
      %3249 = vmatprep.mubr.f32.mxu0 0.0
      %3250 = vmatmul.mubr.f32.gmra.mrb[0].mxu0 %v3177
      %v3251 = vpop.f32.mrb[0].mxu0
      %v3252 = vadd.f32 %v410, %v3251
      %v3253 = vpop.f32.mrb[0].mxu0
      %3254 = vmatprep.mubr.f32.mxu0 0.0
      %3255 = vmatmul.mubr.f32.gmra.mrb[0].mxu0 %v3179
      %v3256 = vpop.f32.mrb[0].mxu0
      %v3257 = vadd.f32 %v411, %v3256
      %v3258 = vpop.f32.mrb[0].mxu0
      %3259 = vdwg.mxu0
      %v3260 = vsel %vm769, %v2979, -inf
      %3261 = vmax.xlane.f32.xlu0 %v3260
      %v3262 = vpop.xlane.xlu0 %3261
      %v3263 = vsel %vm769, %v2984, -inf
      %3264 = vmax.xlane.f32.xlu0 %v3263
      %v3265 = vpop.xlane.xlu0 %3264
      %v3266 = vsel %vm769, %v3070, -inf
      %3267 = vmax.xlane.f32.xlu0 %v3266
      %v3268 = vpop.xlane.xlu0 %3267
      %v3269 = vsel %vm769, %v3075, -inf
      %3270 = vmax.xlane.f32.xlu0 %v3269
      %v3271 = vpop.xlane.xlu0 %3270
      %v3272 = vsel %vm769, %v3161, -inf
      %3273 = vmax.xlane.f32.xlu0 %v3272
      %v3274 = vpop.xlane.xlu0 %3273
      %v3275 = vsel %vm769, %v3166, -inf
      %3276 = vmax.xlane.f32.xlu0 %v3275
      %v3277 = vpop.xlane.xlu0 %3276
      %v3278 = vsel %vm769, %v3252, -inf
      %3279 = vmax.xlane.f32.xlu0 %v3278
      %v3280 = vpop.xlane.xlu0 %3279
      %v3281 = vsel %vm769, %v3257, -inf
      %3282 = vmax.xlane.f32.xlu0 %v3281
      %v3283 = vpop.xlane.xlu0 %3282
      %v3284 = vsub.f32 %v2979, %v3262
      %v3285 = vsub.f32 %v2984, %v3265
      %v3286 = vsub.f32 %v3070, %v3268
      %v3287 = vsub.f32 %v3075, %v3271
      %v3288 = vsub.f32 %v3161, %v3274
      %v3289 = vsub.f32 %v3166, %v3277
      %v3290 = vsub.f32 %v3252, %v3280
      %v3291 = vsub.f32 %v3257, %v3283
      %v3292 = vmul.f32 %v3284, 1.442695
      %v3293 = vpow.pop %v3292
      %v3294 = vmul.f32 %v3285, 1.442695
      %v3295 = vpow.pop %v3294
      %v3296 = vmul.f32 %v3286, 1.442695
      %v3297 = vpow.pop %v3296
      %v3298 = vmul.f32 %v3287, 1.442695
      %v3299 = vpow.pop %v3298
      %v3300 = vmul.f32 %v3288, 1.442695
      %v3301 = vpow.pop %v3300
      %v3302 = vmul.f32 %v3289, 1.442695
      %v3303 = vpow.pop %v3302
      %v3304 = vmul.f32 %v3290, 1.442695
      %v3305 = vpow.pop %v3304
      %v3306 = vmul.f32 %v3291, 1.442695
      %v3307 = vpow.pop %v3306
      %v3308 = vsel %vm769, %v3293, 0.0
      %3309 = vadd.xlane.f32.xlu0 %v3308
      %v3310 = vpop.xlane.xlu0 %3309
      %v3311 = vsel %vm769, %v3295, 0.0
      %3312 = vadd.xlane.f32.xlu0 %v3311
      %v3313 = vpop.xlane.xlu0 %3312
      %v3314 = vsel %vm769, %v3297, 0.0
      %3315 = vadd.xlane.f32.xlu0 %v3314
      %v3316 = vpop.xlane.xlu0 %3315
      %v3317 = vsel %vm769, %v3299, 0.0
      %3318 = vadd.xlane.f32.xlu0 %v3317
      %v3319 = vpop.xlane.xlu0 %3318
      %v3320 = vsel %vm769, %v3301, 0.0
      %3321 = vadd.xlane.f32.xlu0 %v3320
      %v3322 = vpop.xlane.xlu0 %3321
      %v3323 = vsel %vm769, %v3303, 0.0
      %3324 = vadd.xlane.f32.xlu0 %v3323
      %v3325 = vpop.xlane.xlu0 %3324
      %v3326 = vsel %vm769, %v3305, 0.0
      %3327 = vadd.xlane.f32.xlu0 %v3326
      %v3328 = vpop.xlane.xlu0 %3327
      %v3329 = vsel %vm769, %v3307, 0.0
      %3330 = vadd.xlane.f32.xlu0 %v3329
      %v3331 = vpop.xlane.xlu0 %3330
      %v3332 = vrcp.pop %v3310
      %v3333 = vrcp.pop %v3313
      %v3334 = vrcp.pop %v3316
      %v3335 = vrcp.pop %v3319
      %v3336 = vrcp.pop %v3322
      %v3337 = vrcp.pop %v3325
      %v3338 = vrcp.pop %v3328
      %v3339 = vrcp.pop %v3331
      %v3340 = vmul.f32 %v3293, %v3332
      %v3341 = vmul.f32 %v3295, %v3333
      %v3342 = vmul.f32 %v3297, %v3334
      %v3343 = vmul.f32 %v3299, %v3335
      %v3344 = vmul.f32 %v3301, %v3336
      %v3345 = vmul.f32 %v3303, %v3337
      %v3346 = vmul.f32 %v3305, %v3338
      %v3347 = vmul.f32 %v3307, %v3339
      %3348 = vrot.lane.b32.xlu0 %v366, 40
      %v3349 = vpop.permute.xlu0 %3348
      %3350 = vrot.lane.b32.xlu0 %v371, 40
      %v3351 = vpop.permute.xlu0 %3350
      %v3355 = vsel %vm769, %v3340, 0
      %v3358 = vsel %vm769, %v3341, 0
      %3360 = vmatprep.subr.mxu0 0.0
      %3361 = vmatpush1.msra.mxu0 %v3349
      %3362 = vmatprep.subr.mxu0 0.0
      %3363 = vmatpush1.msra.mxu0 %v3351
      %3364 = vmatprep.subr.mxu0 0.0
      %3365 = vmatpush1.msra.mxu0 0.0
      %3366 = vmatprep.subr.mxu0 0.0
      %3367 = vmatpush1.msra.mxu0 0.0
      %3368 = vmatprep.subr.mxu0 0.0
      %3369 = vmatpush1.msra.mxu0 0.0
      %3370 = vmatprep.subr.mxu0 0.0
      %3371 = vmatpush1.msra.mxu0 0.0
      %3372 = vmatprep.subr.mxu0 0.0
      %3373 = vmatpush1.msra.mxu0 0.0
      %3374 = vmatprep.subr.mxu0 0.0
      %3375 = vmatpush1.msra.mxu0 0.0
      %3376 = vmatprep.subr.mxu0 0.0
      %3377 = vmatpush1.msra.mxu0 0.0
      %3378 = vmatprep.subr.mxu0 0.0
      %3379 = vmatpush1.msra.mxu0 0.0
      %3380 = vmatprep.subr.mxu0 0.0
      %3381 = vmatpush1.msra.mxu0 0.0
      %3382 = vmatprep.subr.mxu0 0.0
      %3383 = vmatpush1.msra.mxu0 0.0
      %3384 = vmatprep.subr.mxu0 0.0
      %3385 = vmatpush1.msra.mxu0 0.0
      %3386 = vmatprep.subr.mxu0 0.0
      %3387 = vmatpush1.msra.mxu0 0.0
      %3388 = vmatprep.subr.mxu0 0.0
      %3389 = vmatpush1.msra.mxu0 0.0
      %3390 = vmatprep.subr.mxu0 0.0
      %3391 = vmatpush1.msra.mxu0 0.0
      %3392 = vmatprep.subr.mxu0 0.0
      %3393 = vmatpush1.msra.mxu0 0.0
      %3394 = vmatprep.subr.mxu0 0.0
      %3395 = vmatpush1.msra.mxu0 0.0
      %3396 = vmatprep.subr.mxu0 0.0
      %3397 = vmatpush1.msra.mxu0 0.0
      %3398 = vmatprep.subr.mxu0 0.0
      %3399 = vmatpush1.msra.mxu0 0.0
      %3400 = vmatprep.subr.mxu0 0.0
      %3401 = vmatpush1.msra.mxu0 0.0
      %3402 = vmatprep.subr.mxu0 0.0
      %3403 = vmatpush1.msra.mxu0 0.0
      %3404 = vmatprep.subr.mxu0 0.0
      %3405 = vmatpush1.msra.mxu0 0.0
      %3406 = vmatprep.subr.mxu0 0.0
      %3407 = vmatpush1.msra.mxu0 0.0
      %3408 = vmatprep.subr.mxu0 0.0
      %3409 = vmatpush1.msra.mxu0 0.0
      %3410 = vmatprep.subr.mxu0 0.0
      %3411 = vmatpush1.msra.mxu0 0.0
      %3412 = vmatprep.subr.mxu0 0.0
      %3413 = vmatpush1.msra.mxu0 0.0
      %3414 = vmatprep.subr.mxu0 0.0
      %3415 = vmatpush1.msra.mxu0 0.0
      %3416 = vmatprep.subr.mxu0 0.0
      %3417 = vmatpush1.msra.mxu0 0.0
      %3418 = vmatprep.subr.mxu0 0.0
      %3419 = vmatpush1.msra.mxu0 0.0
      %3420 = vmatprep.subr.mxu0 0.0
      %3421 = vmatpush1.msra.mxu0 0.0
      %3422 = vmatprep.subr.mxu0 0.0
      %3423 = vmatpush1.msra.mxu0 0.0
      %3424 = vmatprep.mubr.f32.mxu0 0.0
      %3425 = vmatmul.mubr.f32.gmra.mrb[0].mxu0 %v3355
      %v3426 = vpop.f32.mrb[0].mxu0
      %v3427 = vadd.f32 0.0, %v3426
      %v3428 = vpop.f32.mrb[0].mxu0
      %3429 = vmatprep.mubr.f32.mxu0 0.0
      %3430 = vmatmul.mubr.f32.gmra.mrb[0].mxu0 %v3358
      %v3431 = vpop.f32.mrb[0].mxu0
      %v3432 = vadd.f32 0.0, %v3431
      %v3433 = vpop.f32.mrb[0].mxu0
      %3434 = vdwg.mxu0
      %3435 = vrot.lane.b32.xlu0 %v376, 40
      %v3436 = vpop.permute.xlu0 %3435
      %3437 = vrot.lane.b32.xlu0 %v381, 40
      %v3438 = vpop.permute.xlu0 %3437
      %v3442 = vsel %vm769, %v3342, 0
      %v3445 = vsel %vm769, %v3343, 0
      %3447 = vmatprep.subr.mxu0 0.0
      %3448 = vmatpush1.msra.mxu0 %v3436
      %3449 = vmatprep.subr.mxu0 0.0
      %3450 = vmatpush1.msra.mxu0 %v3438
      %3451 = vmatprep.subr.mxu0 0.0
      %3452 = vmatpush1.msra.mxu0 0.0
      %3453 = vmatprep.subr.mxu0 0.0
      %3454 = vmatpush1.msra.mxu0 0.0
      %3455 = vmatprep.subr.mxu0 0.0
      %3456 = vmatpush1.msra.mxu0 0.0
      %3457 = vmatprep.subr.mxu0 0.0
      %3458 = vmatpush1.msra.mxu0 0.0
      %3459 = vmatprep.subr.mxu0 0.0
      %3460 = vmatpush1.msra.mxu0 0.0
      %3461 = vmatprep.subr.mxu0 0.0
      %3462 = vmatpush1.msra.mxu0 0.0
      %3463 = vmatprep.subr.mxu0 0.0
      %3464 = vmatpush1.msra.mxu0 0.0
      %3465 = vmatprep.subr.mxu0 0.0
      %3466 = vmatpush1.msra.mxu0 0.0
      %3467 = vmatprep.subr.mxu0 0.0
      %3468 = vmatpush1.msra.mxu0 0.0
      %3469 = vmatprep.subr.mxu0 0.0
      %3470 = vmatpush1.msra.mxu0 0.0
      %3471 = vmatprep.subr.mxu0 0.0
      %3472 = vmatpush1.msra.mxu0 0.0
      %3473 = vmatprep.subr.mxu0 0.0
      %3474 = vmatpush1.msra.mxu0 0.0
      %3475 = vmatprep.subr.mxu0 0.0
      %3476 = vmatpush1.msra.mxu0 0.0
      %3477 = vmatprep.subr.mxu0 0.0
      %3478 = vmatpush1.msra.mxu0 0.0
      %3479 = vmatprep.subr.mxu0 0.0
      %3480 = vmatpush1.msra.mxu0 0.0
      %3481 = vmatprep.subr.mxu0 0.0
      %3482 = vmatpush1.msra.mxu0 0.0
      %3483 = vmatprep.subr.mxu0 0.0
      %3484 = vmatpush1.msra.mxu0 0.0
      %3485 = vmatprep.subr.mxu0 0.0
      %3486 = vmatpush1.msra.mxu0 0.0
      %3487 = vmatprep.subr.mxu0 0.0
      %3488 = vmatpush1.msra.mxu0 0.0
      %3489 = vmatprep.subr.mxu0 0.0
      %3490 = vmatpush1.msra.mxu0 0.0
      %3491 = vmatprep.subr.mxu0 0.0
      %3492 = vmatpush1.msra.mxu0 0.0
      %3493 = vmatprep.subr.mxu0 0.0
      %3494 = vmatpush1.msra.mxu0 0.0
      %3495 = vmatprep.subr.mxu0 0.0
      %3496 = vmatpush1.msra.mxu0 0.0
      %3497 = vmatprep.subr.mxu0 0.0
      %3498 = vmatpush1.msra.mxu0 0.0
      %3499 = vmatprep.subr.mxu0 0.0
      %3500 = vmatpush1.msra.mxu0 0.0
      %3501 = vmatprep.subr.mxu0 0.0
      %3502 = vmatpush1.msra.mxu0 0.0
      %3503 = vmatprep.subr.mxu0 0.0
      %3504 = vmatpush1.msra.mxu0 0.0
      %3505 = vmatprep.subr.mxu0 0.0
      %3506 = vmatpush1.msra.mxu0 0.0
      %3507 = vmatprep.subr.mxu0 0.0
      %3508 = vmatpush1.msra.mxu0 0.0
      %3509 = vmatprep.subr.mxu0 0.0
      %3510 = vmatpush1.msra.mxu0 0.0
      %3511 = vmatprep.mubr.f32.mxu0 0.0
      %3512 = vmatmul.mubr.f32.gmra.mrb[0].mxu0 %v3442
      %v3513 = vpop.f32.mrb[0].mxu0
      %v3514 = vadd.f32 0.0, %v3513
      %v3515 = vpop.f32.mrb[0].mxu0
      %3516 = vmatprep.mubr.f32.mxu0 0.0
      %3517 = vmatmul.mubr.f32.gmra.mrb[0].mxu0 %v3445
      %v3518 = vpop.f32.mrb[0].mxu0
      %v3519 = vadd.f32 0.0, %v3518
      %v3520 = vpop.f32.mrb[0].mxu0
      %3521 = vdwg.mxu0
      %3522 = vrot.lane.b32.xlu0 %v386, 40
      %v3523 = vpop.permute.xlu0 %3522
      %3524 = vrot.lane.b32.xlu0 %v391, 40
      %v3525 = vpop.permute.xlu0 %3524
      %v3529 = vsel %vm769, %v3344, 0
      %v3532 = vsel %vm769, %v3345, 0
      %3534 = vmatprep.subr.mxu0 0.0
      %3535 = vmatpush1.msra.mxu0 %v3523
      %3536 = vmatprep.subr.mxu0 0.0
      %3537 = vmatpush1.msra.mxu0 %v3525
      %3538 = vmatprep.subr.mxu0 0.0
      %3539 = vmatpush1.msra.mxu0 0.0
      %3540 = vmatprep.subr.mxu0 0.0
      %3541 = vmatpush1.msra.mxu0 0.0
      %3542 = vmatprep.subr.mxu0 0.0
      %3543 = vmatpush1.msra.mxu0 0.0
      %3544 = vmatprep.subr.mxu0 0.0
      %3545 = vmatpush1.msra.mxu0 0.0
      %3546 = vmatprep.subr.mxu0 0.0
      %3547 = vmatpush1.msra.mxu0 0.0
      %3548 = vmatprep.subr.mxu0 0.0
      %3549 = vmatpush1.msra.mxu0 0.0
      %3550 = vmatprep.subr.mxu0 0.0
      %3551 = vmatpush1.msra.mxu0 0.0
      %3552 = vmatprep.subr.mxu0 0.0
      %3553 = vmatpush1.msra.mxu0 0.0
      %3554 = vmatprep.subr.mxu0 0.0
      %3555 = vmatpush1.msra.mxu0 0.0
      %3556 = vmatprep.subr.mxu0 0.0
      %3557 = vmatpush1.msra.mxu0 0.0
      %3558 = vmatprep.subr.mxu0 0.0
      %3559 = vmatpush1.msra.mxu0 0.0
      %3560 = vmatprep.subr.mxu0 0.0
      %3561 = vmatpush1.msra.mxu0 0.0
      %3562 = vmatprep.subr.mxu0 0.0
      %3563 = vmatpush1.msra.mxu0 0.0
      %3564 = vmatprep.subr.mxu0 0.0
      %3565 = vmatpush1.msra.mxu0 0.0
      %3566 = vmatprep.subr.mxu0 0.0
      %3567 = vmatpush1.msra.mxu0 0.0
      %3568 = vmatprep.subr.mxu0 0.0
      %3569 = vmatpush1.msra.mxu0 0.0
      %3570 = vmatprep.subr.mxu0 0.0
      %3571 = vmatpush1.msra.mxu0 0.0
      %3572 = vmatprep.subr.mxu0 0.0
      %3573 = vmatpush1.msra.mxu0 0.0
      %3574 = vmatprep.subr.mxu0 0.0
      %3575 = vmatpush1.msra.mxu0 0.0
      %3576 = vmatprep.subr.mxu0 0.0
      %3577 = vmatpush1.msra.mxu0 0.0
      %3578 = vmatprep.subr.mxu0 0.0
      %3579 = vmatpush1.msra.mxu0 0.0
      %3580 = vmatprep.subr.mxu0 0.0
      %3581 = vmatpush1.msra.mxu0 0.0
      %3582 = vmatprep.subr.mxu0 0.0
      %3583 = vmatpush1.msra.mxu0 0.0
      %3584 = vmatprep.subr.mxu0 0.0
      %3585 = vmatpush1.msra.mxu0 0.0
      %3586 = vmatprep.subr.mxu0 0.0
      %3587 = vmatpush1.msra.mxu0 0.0
      %3588 = vmatprep.subr.mxu0 0.0
      %3589 = vmatpush1.msra.mxu0 0.0
      %3590 = vmatprep.subr.mxu0 0.0
      %3591 = vmatpush1.msra.mxu0 0.0
      %3592 = vmatprep.subr.mxu0 0.0
      %3593 = vmatpush1.msra.mxu0 0.0
      %3594 = vmatprep.subr.mxu0 0.0
      %3595 = vmatpush1.msra.mxu0 0.0
      %3596 = vmatprep.subr.mxu0 0.0
      %3597 = vmatpush1.msra.mxu0 0.0
      %3598 = vmatprep.mubr.f32.mxu0 0.0
      %3599 = vmatmul.mubr.f32.gmra.mrb[0].mxu0 %v3529
      %v3600 = vpop.f32.mrb[0].mxu0
      %v3601 = vadd.f32 0.0, %v3600
      %v3602 = vpop.f32.mrb[0].mxu0
      %3603 = vmatprep.mubr.f32.mxu0 0.0
      %3604 = vmatmul.mubr.f32.gmra.mrb[0].mxu0 %v3532
      %v3605 = vpop.f32.mrb[0].mxu0
      %v3606 = vadd.f32 0.0, %v3605
      %v3607 = vpop.f32.mrb[0].mxu0
      %3608 = vdwg.mxu0
      %3609 = vrot.lane.b32.xlu0 %v396, 40
      %v3610 = vpop.permute.xlu0 %3609
      %3611 = vrot.lane.b32.xlu0 %v401, 40
      %v3612 = vpop.permute.xlu0 %3611
      %v3616 = vsel %vm769, %v3346, 0
      %v3619 = vsel %vm769, %v3347, 0
      %3621 = vmatprep.subr.mxu0 0.0
      %3622 = vmatpush1.msra.mxu0 %v3610
      %3623 = vmatprep.subr.mxu0 0.0
      %3624 = vmatpush1.msra.mxu0 %v3612
      %3625 = vmatprep.subr.mxu0 0.0
      %3626 = vmatpush1.msra.mxu0 0.0
      %3627 = vmatprep.subr.mxu0 0.0
      %3628 = vmatpush1.msra.mxu0 0.0
      %3629 = vmatprep.subr.mxu0 0.0
      %3630 = vmatpush1.msra.mxu0 0.0
      %3631 = vmatprep.subr.mxu0 0.0
      %3632 = vmatpush1.msra.mxu0 0.0
      %3633 = vmatprep.subr.mxu0 0.0
      %3634 = vmatpush1.msra.mxu0 0.0
      %3635 = vmatprep.subr.mxu0 0.0
      %3636 = vmatpush1.msra.mxu0 0.0
      %3637 = vmatprep.subr.mxu0 0.0
      %3638 = vmatpush1.msra.mxu0 0.0
      %3639 = vmatprep.subr.mxu0 0.0
      %3640 = vmatpush1.msra.mxu0 0.0
      %3641 = vmatprep.subr.mxu0 0.0
      %3642 = vmatpush1.msra.mxu0 0.0
      %3643 = vmatprep.subr.mxu0 0.0
      %3644 = vmatpush1.msra.mxu0 0.0
      %3645 = vmatprep.subr.mxu0 0.0
      %3646 = vmatpush1.msra.mxu0 0.0
      %3647 = vmatprep.subr.mxu0 0.0
      %3648 = vmatpush1.msra.mxu0 0.0
      %3649 = vmatprep.subr.mxu0 0.0
      %3650 = vmatpush1.msra.mxu0 0.0
      %3651 = vmatprep.subr.mxu0 0.0
      %3652 = vmatpush1.msra.mxu0 0.0
      %3653 = vmatprep.subr.mxu0 0.0
      %3654 = vmatpush1.msra.mxu0 0.0
      %3655 = vmatprep.subr.mxu0 0.0
      %3656 = vmatpush1.msra.mxu0 0.0
      %3657 = vmatprep.subr.mxu0 0.0
      %3658 = vmatpush1.msra.mxu0 0.0
      %3659 = vmatprep.subr.mxu0 0.0
      %3660 = vmatpush1.msra.mxu0 0.0
      %3661 = vmatprep.subr.mxu0 0.0
      %3662 = vmatpush1.msra.mxu0 0.0
      %3663 = vmatprep.subr.mxu0 0.0
      %3664 = vmatpush1.msra.mxu0 0.0
      %3665 = vmatprep.subr.mxu0 0.0
      %3666 = vmatpush1.msra.mxu0 0.0
      %3667 = vmatprep.subr.mxu0 0.0
      %3668 = vmatpush1.msra.mxu0 0.0
      %3669 = vmatprep.subr.mxu0 0.0
      %3670 = vmatpush1.msra.mxu0 0.0
      %3671 = vmatprep.subr.mxu0 0.0
      %3672 = vmatpush1.msra.mxu0 0.0
      %3673 = vmatprep.subr.mxu0 0.0
      %3674 = vmatpush1.msra.mxu0 0.0
      %3675 = vmatprep.subr.mxu0 0.0
      %3676 = vmatpush1.msra.mxu0 0.0
      %3677 = vmatprep.subr.mxu0 0.0
      %3678 = vmatpush1.msra.mxu0 0.0
      %3679 = vmatprep.subr.mxu0 0.0
      %3680 = vmatpush1.msra.mxu0 0.0
      %3681 = vmatprep.subr.mxu0 0.0
      %3682 = vmatpush1.msra.mxu0 0.0
      %3683 = vmatprep.subr.mxu0 0.0
      %3684 = vmatpush1.msra.mxu0 0.0
      %3685 = vmatprep.mubr.f32.mxu0 0.0
      %3686 = vmatmul.mubr.f32.gmra.mrb[0].mxu0 %v3616
      %v3687 = vpop.f32.mrb[0].mxu0
      %v3688 = vadd.f32 0.0, %v3687
      %v3689 = vpop.f32.mrb[0].mxu0
      %3690 = vmatprep.mubr.f32.mxu0 0.0
      %3691 = vmatmul.mubr.f32.gmra.mrb[0].mxu0 %v3619
      %v3692 = vpop.f32.mrb[0].mxu0
      %v3693 = vadd.f32 0.0, %v3692
      %v3694 = vpop.f32.mrb[0].mxu0
      %3695 = vdwg.mxu0
      %3704 = vrot.lane.b32.xlu0 %v3427, 24
      %v3705 = vpop.permute.xlu0 %3704
      %3706 = vrot.lane.b32.xlu0 %v3432, 24
      %v3707 = vpop.permute.xlu0 %3706
      %3708 = vrot.lane.b32.xlu0 %v3514, 24
      %v3709 = vpop.permute.xlu0 %3708
      %3710 = vrot.lane.b32.xlu0 %v3519, 24
      %v3711 = vpop.permute.xlu0 %3710
      %3712 = vrot.lane.b32.xlu0 %v3601, 24
      %v3713 = vpop.permute.xlu0 %3712
      %3714 = vrot.lane.b32.xlu0 %v3606, 24
      %v3715 = vpop.permute.xlu0 %3714
      %3716 = vrot.lane.b32.xlu0 %v3688, 24
      %v3717 = vpop.permute.xlu0 %3716
      %3718 = vrot.lane.b32.xlu0 %v3693, 24
      %v3719 = vpop.permute.xlu0 %3718
      %vm3728 = vcmask 261312
      %3729 = vst.msk [vmem:[#allocation2] sm:$0xff] %vm3728, %v3705
      %3730 = vst.msk [vmem:[#allocation2 + $0x8] sm:$0xff] %vm3728, %v3707
      %3731 = vst.msk [vmem:[#allocation2 + $0x10] sm:$0xff] %vm3728, %v3709
      %3732 = vst.msk [vmem:[#allocation2 + $0x18] sm:$0xff] %vm3728, %v3711
      %3733 = vst.msk [vmem:[#allocation2 + $0x20] sm:$0xff] %vm3728, %v3713
      %3734 = vst.msk [vmem:[#allocation2 + $0x28] sm:$0xff] %vm3728, %v3715
      %3735 = vst.msk [vmem:[#allocation2 + $0x30] sm:$0xff] %vm3728, %v3717
      %3736 = vst.msk [vmem:[#allocation2 + $0x38] sm:$0xff] %vm3728, %v3719
      %v3737 = vld [vmem:[#allocation2] sm:$0xff]
      %v3738 = vld [vmem:[#allocation2 + $0x8] sm:$0xff]
      %v3739 = vld [vmem:[#allocation2 + $0x10] sm:$0xff]
      %v3740 = vld [vmem:[#allocation2 + $0x18] sm:$0xff]
      %v3741 = vld [vmem:[#allocation2 + $0x20] sm:$0xff]
      %v3742 = vld [vmem:[#allocation2 + $0x28] sm:$0xff]
      %v3743 = vld [vmem:[#allocation2 + $0x30] sm:$0xff]
      %v3744 = vld [vmem:[#allocation2 + $0x38] sm:$0xff]
      %v3745 = vld [vmem:[%s4] sm:$0xff]
      %v3746 = vld [vmem:[%s4 + $0x8] sm:$0xff]
      %v3747 = vld [vmem:[%s4 + $0x10] sm:$0xff]
      %v3748 = vld [vmem:[%s4 + $0x18] sm:$0xff]
      %v3749 = vld [vmem:[%s5] sm:$0x1]
      %v3751 = vlaneseq
      %v3752 = vshrl.u32 %v3751, 7
      %v3753 = vsub.s32 0, %v3752
      %v3754 = vrot.slane %v3749, %v3753
      %v3757 = vsel %vm274, %v3737, 0
      %v3760 = vsel %vm274, %v3738, 0
      %v3763 = vsel %vm274, %v3739, 0
      %v3766 = vsel %vm274, %v3740, 0
      %v3769 = vsel %vm274, %v3741, 0
      %v3772 = vsel %vm274, %v3742, 0
      %v3775 = vsel %vm274, %v3743, 0
      %v3778 = vsel %vm274, %v3744, 0
      %3780 = vmatprep.subr.mxu0 0.0
      %3781 = vmatpush1.msra.mxu0 %v3745
      %3782 = vmatprep.subr.mxu0 0.0
      %3783 = vmatpush1.msra.mxu0 %v3746
      %3784 = vmatprep.subr.mxu0 0.0
      %3785 = vmatpush1.msra.mxu0 %v3747
      %3786 = vmatprep.subr.mxu0 0.0
      %3787 = vmatpush1.msra.mxu0 %v3748
      %3788 = vmatprep.subr.mxu0 0.0
      %3789 = vmatpush1.msra.mxu0 0.0
      %3790 = vmatprep.subr.mxu0 0.0
      %3791 = vmatpush1.msra.mxu0 0.0
      %3792 = vmatprep.subr.mxu0 0.0
      %3793 = vmatpush1.msra.mxu0 0.0
      %3794 = vmatprep.subr.mxu0 0.0
      %3795 = vmatpush1.msra.mxu0 0.0
      %3796 = vmatprep.subr.mxu0 0.0
      %3797 = vmatpush1.msra.mxu0 0.0
      %3798 = vmatprep.subr.mxu0 0.0
      %3799 = vmatpush1.msra.mxu0 0.0
      %3800 = vmatprep.subr.mxu0 0.0
      %3801 = vmatpush1.msra.mxu0 0.0
      %3802 = vmatprep.subr.mxu0 0.0
      %3803 = vmatpush1.msra.mxu0 0.0
      %3804 = vmatprep.subr.mxu0 0.0
      %3805 = vmatpush1.msra.mxu0 0.0
      %3806 = vmatprep.subr.mxu0 0.0
      %3807 = vmatpush1.msra.mxu0 0.0
      %3808 = vmatprep.subr.mxu0 0.0
      %3809 = vmatpush1.msra.mxu0 0.0
      %3810 = vmatprep.subr.mxu0 0.0
      %3811 = vmatpush1.msra.mxu0 0.0
      %3812 = vmatprep.subr.mxu0 0.0
      %3813 = vmatpush1.msra.mxu0 0.0
      %3814 = vmatprep.subr.mxu0 0.0
      %3815 = vmatpush1.msra.mxu0 0.0
      %3816 = vmatprep.subr.mxu0 0.0
      %3817 = vmatpush1.msra.mxu0 0.0
      %3818 = vmatprep.subr.mxu0 0.0
      %3819 = vmatpush1.msra.mxu0 0.0
      %3820 = vmatprep.subr.mxu0 0.0
      %3821 = vmatpush1.msra.mxu0 0.0
      %3822 = vmatprep.subr.mxu0 0.0
      %3823 = vmatpush1.msra.mxu0 0.0
      %3824 = vmatprep.subr.mxu0 0.0
      %3825 = vmatpush1.msra.mxu0 0.0
      %3826 = vmatprep.subr.mxu0 0.0
      %3827 = vmatpush1.msra.mxu0 0.0
      %3828 = vmatprep.subr.mxu0 0.0
      %3829 = vmatpush1.msra.mxu0 0.0
      %3830 = vmatprep.subr.mxu0 0.0
      %3831 = vmatpush1.msra.mxu0 0.0
      %3832 = vmatprep.subr.mxu0 0.0
      %3833 = vmatpush1.msra.mxu0 0.0
      %3834 = vmatprep.subr.mxu0 0.0
      %3835 = vmatpush1.msra.mxu0 0.0
      %3836 = vmatprep.subr.mxu0 0.0
      %3837 = vmatpush1.msra.mxu0 0.0
      %3838 = vmatprep.subr.mxu0 0.0
      %3839 = vmatpush1.msra.mxu0 0.0
      %3840 = vmatprep.subr.mxu0 0.0
      %3841 = vmatpush1.msra.mxu0 0.0
      %3842 = vmatprep.subr.mxu0 0.0
      %3843 = vmatpush1.msra.mxu0 0.0
      %3844 = vmatprep.mubr.f32.mxu0 0.0
      %3845 = vmatmul.mubr.f32.gmra.mrb[0].mxu0 %v3757
      %v3846 = vpop.f32.mrb[0].mxu0
      %v3847 = vadd.f32 %v3754, %v3846
      %v3848 = vpop.f32.mrb[0].mxu0
      %3849 = vmatprep.mubr.f32.mxu0 0.0
      %3850 = vmatmul.mubr.f32.gmra.mrb[0].mxu0 %v3760
      %v3851 = vpop.f32.mrb[0].mxu0
      %v3852 = vadd.f32 %v3754, %v3851
      %v3853 = vpop.f32.mrb[0].mxu0
      %3854 = vmatprep.mubr.f32.mxu0 0.0
      %3855 = vmatmul.mubr.f32.gmra.mrb[0].mxu0 %v3763
      %v3856 = vpop.f32.mrb[0].mxu0
      %v3857 = vadd.f32 %v3754, %v3856
      %v3858 = vpop.f32.mrb[0].mxu0
      %3859 = vmatprep.mubr.f32.mxu0 0.0
      %3860 = vmatmul.mubr.f32.gmra.mrb[0].mxu0 %v3766
      %v3861 = vpop.f32.mrb[0].mxu0
      %v3862 = vadd.f32 %v3754, %v3861
      %v3863 = vpop.f32.mrb[0].mxu0
      %3864 = vmatprep.mubr.f32.mxu0 0.0
      %3865 = vmatmul.mubr.f32.gmra.mrb[0].mxu0 %v3769
      %v3866 = vpop.f32.mrb[0].mxu0
      %v3867 = vadd.f32 %v3754, %v3866
      %v3868 = vpop.f32.mrb[0].mxu0
      %3869 = vmatprep.mubr.f32.mxu0 0.0
      %3870 = vmatmul.mubr.f32.gmra.mrb[0].mxu0 %v3772
      %v3871 = vpop.f32.mrb[0].mxu0
      %v3872 = vadd.f32 %v3754, %v3871
      %v3873 = vpop.f32.mrb[0].mxu0
      %3874 = vmatprep.mubr.f32.mxu0 0.0
      %3875 = vmatmul.mubr.f32.gmra.mrb[0].mxu0 %v3775
      %v3876 = vpop.f32.mrb[0].mxu0
      %v3877 = vadd.f32 %v3754, %v3876
      %v3878 = vpop.f32.mrb[0].mxu0
      %3879 = vmatprep.mubr.f32.mxu0 0.0
      %3880 = vmatmul.mubr.f32.gmra.mrb[0].mxu0 %v3778
      %v3881 = vpop.f32.mrb[0].mxu0
      %v3882 = vadd.f32 %v3754, %v3881
      %v3883 = vpop.f32.mrb[0].mxu0
      %3884 = vdwg.mxu0
      %3885 = vst.msk [vmem:[%s253] sm:$0xff] %vm274, %v3847
      %3886 = vst.msk [vmem:[%s253 + $0x8] sm:$0xff] %vm274, %v3852
      %3887 = vst.msk [vmem:[%s253 + $0x10] sm:$0xff] %vm274, %v3857
      %3888 = vst.msk [vmem:[%s253 + $0x18] sm:$0xff] %vm274, %v3862
      %3889 = vst.msk [vmem:[%s253 + $0x20] sm:$0xff] %vm274, %v3867
      %3890 = vst.msk [vmem:[%s253 + $0x28] sm:$0xff] %vm274, %v3872
      %3891 = vst.msk [vmem:[%s253 + $0x30] sm:$0xff] %vm274, %v3877
      %3892 = vst.msk [vmem:[%s253 + $0x38] sm:$0xff] %vm274, %v3882
      %s3893 = smul.u32 8, %s17
      %p3894 = scmp.lt.s32.totalorder %s3893, 15
      %s3895 = scalar_select %p3894, %s3893, 15
      %s3896 = smul.addr %s3895, 8
      %s3897 = scalar_lea.vmem %s6, %s3896
      // Predicated region
      $region45: #{tpu_custom_call.1} parent=43 // pred_check
        %p3898 = pneg %p166
      $region46: #{tpu_custom_call.1} parent=43 // pred_check_branch
        %3900 = sbr.rel (%p3898) target = $region48
      $region47: #{tpu_custom_call.1} parent=43 // pred_region
        %s3901 = smul.u32 8, %s17
      $region48: #{tpu_custom_call.1} parent=43 // pred_fallthru
        _
    $region44: #{tpu_custom_call.1} parent=5 // pred_fallthru
      _
    %p3902 = scmp.le.s32.totalorder 2, %s12
    // Predicated region
    $region49: #{tpu_custom_call.1} parent=5 // pred_check
      %p3903 = pneg %p3902
    $region50: #{tpu_custom_call.1} parent=5 // pred_check_branch
      %3905 = sbr.rel (%p3903) target = $region52
    $region51: #{tpu_custom_call.1} parent=5 // pred_region
      %s3906 = ssub.s32 %s12, 2
      // Predicated region
      $region53: #{tpu_custom_call.1} parent=51 // pred_check
        %p3907 = pneg %p172
      $region54: #{tpu_custom_call.1} parent=51 // pred_check_branch
        %3909 = sbr.rel (%p3907) target = $region56
      $region55: #{tpu_custom_call.1} parent=51 // pred_region
        %s3910 = smul.u32 8, %s18
        %p3911 = scmp.lt.s32.totalorder %s3910, 15
        %s3912 = scalar_select %p3911, %s3910, 15
        %s3913 = smul.addr %s3912, 8
        %s3914 = scalar_lea.vmem %s6, %s3913
      $region56: #{tpu_custom_call.1} parent=51 // pred_fallthru
        _
    $region52: #{tpu_custom_call.1} parent=5 // pred_fallthru
      _
  $region6: #{tpu_custom_call.1} parent=0 // loop_footer
    %s16 = sadd.s32 1, %s12
  $region7: #{tpu_custom_call.1} parent=0 // loop_footer_branch
    %11 = sbr.rel target = $region3
  $region8: #{tpu_custom_call.1} parent=0 // loop_exit
    _

</llo_original>
